<compile_context>
chip_gen: v7x
topology: tpu7x:2x2x1
jax: 0.10.0
libtpu: 0.0.40
codegen_flags: <defaults>
</compile_context>

<pallas_src>
import math
import functools

import jax
import jax.numpy as jnp
from jax import lax
from jax.experimental import pallas as pl
from jax.experimental.pallas import tpu as pltpu

LN_EPS = 1e-5          # nn.LayerNorm default
MASK_NEG = -1e9        # finite large-negative causal bias (pad-safe, no exp(-inf - -inf))

_LAYER_PARAM_ORDER = ("ln1_g", "ln1_b", "wqkv", "bqkv", "wo", "bo",
                      "ln2_g", "ln2_b", "w1", "b1", "w2", "b2")


# ----------------------------- kernel helpers ------------------------------

def _layernorm(x, gamma, beta):
    # x: (S, D) f32, gamma/beta: (1, D) f32
    mu = jnp.mean(x, axis=-1, keepdims=True)
    var = jnp.mean((x - mu) ** 2, axis=-1, keepdims=True)
    return (x - mu) * lax.rsqrt(var + LN_EPS) * gamma + beta


def clip_stack_kernel(n_head, n_layers,
                      x_ref, mask_ref,
                      ln1_g, ln1_b, wqkv, bqkv, wo, bo,
                      ln2_g, ln2_b, w1, b1, w2, b2,
                      lnf_g, lnf_b,
                      out_ref,
                      x_sc, o_sc):
    layer = pl.program_id(1)
    bf16 = jnp.bfloat16

    # Layer 0: load the activation for this batch element into the VMEM carry.
    @pl.when(layer == 0)
    def _():
        x_sc[...] = x_ref[0]

    x = x_sc[...]                               # (S, D) f32
    S, D = x.shape
    H = n_head
    dh = D // H
    scale = 1.0 / math.sqrt(dh)

    # -------------------- self-attention block --------------------
    residue = x
    h = _layernorm(x, ln1_g[0], ln1_b[0])
    qkv = jnp.dot(h.astype(bf16), wqkv[0],
                  preferred_element_type=jnp.float32) + bqkv[0]      # (S, 3D) f32

    # Split fused QKV into per-head batched tensors (H, S, dh).
    q = jnp.stack([qkv[:, 0 * D + i * dh: 0 * D + (i + 1) * dh] for i in range(H)], axis=0)
    k = jnp.stack([qkv[:, 1 * D + i * dh: 1 * D + (i + 1) * dh] for i in range(H)], axis=0)
    v = jnp.stack([qkv[:, 2 * D + i * dh: 2 * D + (i + 1) * dh] for i in range(H)], axis=0)

    # Batched scores over all heads, additive causal bias, softmax in f32.
    s = jnp.einsum("hqd,hkd->hqk", q.astype(bf16), k.astype(bf16),
                   preferred_element_type=jnp.float32) * scale        # (H, S, S)
    s = s + mask_ref[...]
    m = jnp.max(s, axis=-1, keepdims=True)
    p = jnp.exp(s - m)
    denom = jnp.sum(p, axis=-1, keepdims=True)
    p = p * pl.reciprocal(denom, approx=True)

    o = jnp.einsum("hqk,hkd->hqd", p.astype(bf16), v.astype(bf16),
                   preferred_element_type=jnp.float32)                # (H, S, dh)

    # Concatenate heads into a (S, D) scratch, then ONE full-width out-projection.
    for i in range(H):
        o_sc[:, i * dh:(i + 1) * dh] = o[i]
    attn = jnp.dot(o_sc[...].astype(bf16), wo[0],
                   preferred_element_type=jnp.float32) + bo[0]
    x = attn + residue

    # -------------------- feed-forward block (QuickGELU) --------------------
    residue = x
    h = _layernorm(x, ln2_g[0], ln2_b[0])
    h = jnp.dot(h.astype(bf16), w1[0], preferred_element_type=jnp.float32) + b1[0]
    h = h * jax.nn.sigmoid(1.702 * h)
    h = jnp.dot(h.astype(bf16), w2[0], preferred_element_type=jnp.float32) + b2[0]
    x = h + residue

    x_sc[...] = x                               # carry to next layer

    # Final layer: apply final LayerNorm (fused) and emit the output.
    @pl.when(layer == n_layers - 1)
    def _():
        out_ref[0] = _layernorm(x, lnf_g[...], lnf_b[...])


# ----------------------------- pallas wrapper ------------------------------

def run_clip_stack(x, mask_bias, stacked, lnf_g, lnf_b, n_head):
    B, S_pad, D = x.shape
    L = stacked["wqkv"].shape[0]
    layer_params = [stacked[k] for k in _LAYER_PARAM_ORDER]

    def layer_spec(p):
        return pl.BlockSpec((1,) + tuple(p.shape[1:]), lambda b, l: (l, 0, 0))

    in_specs = ([pl.BlockSpec((1, S_pad, D), lambda b, l: (b, 0, 0)),
                 pl.BlockSpec(mask_bias.shape, lambda b, l: (0, 0))]
                + [layer_spec(p) for p in layer_params]
                + [pl.BlockSpec(lnf_g.shape, lambda b, l: (0, 0)),
                   pl.BlockSpec(lnf_b.shape, lambda b, l: (0, 0))])

    return pl.pallas_call(
        functools.partial(clip_stack_kernel, n_head, L),
        out_shape=jax.ShapeDtypeStruct((B, S_pad, D), jnp.float32),
        grid=(B, L),                                    # layer axis innermost
        in_specs=in_specs,
        out_specs=pl.BlockSpec((1, S_pad, D), lambda b, l: (b, 0, 0)),
        scratch_shapes=[pltpu.VMEM((S_pad, D), jnp.float32),   # activation carry
                        pltpu.VMEM((S_pad, D), jnp.float32)],  # concat'd head outputs
        compiler_params=pltpu.CompilerParams(
            dimension_semantics=("parallel", "arbitrary"),
            vmem_limit_bytes=48 * 1024 * 1024),
    )(x, mask_bias, *layer_params, lnf_g, lnf_b)


# ----------------------------- model: params + forward ----------------------

def init_clip_params(key, n_vocab, n_embed, n_token, n_layers, n_head):
    """Deterministic synthetic parameters (PyTorch __init__ defines the shapes;
    full-size CLIP is n_vocab=49408, n_embed=768, n_token=77, 12 layers/heads).
    Weight matrices are stored in bfloat16 (matmul operands); everything else f32."""
    assert n_embed % n_head == 0
    ks = jax.random.split(key, 2 + n_layers)
    D = n_embed
    params = {
        "tok_emb": jax.random.normal(ks[0], (n_vocab, D), jnp.float32) * 0.02,
        # PyTorch inits position_embedding to zeros; use small randoms so the
        # positional add is actually exercised.
        "pos_emb": jax.random.normal(ks[1], (n_token, D), jnp.float32) * 0.01,
        "ln_f_g": jnp.ones((1, D), jnp.float32),
        "ln_f_b": jnp.zeros((1, D), jnp.float32),
        "layers": [],
    }

    def lin_w(k, din, dout):
        w = jax.random.normal(k, (din, dout), jnp.float32) / math.sqrt(din)
        return w.astype(jnp.bfloat16)

    for i in range(n_layers):
        lk = jax.random.split(ks[2 + i], 8)
        params["layers"].append({
            "ln1_g": jnp.ones((1, D), jnp.float32),
            "ln1_b": jnp.zeros((1, D), jnp.float32),
            "wqkv": lin_w(lk[0], D, 3 * D),
            "bqkv": jax.random.normal(lk[1], (1, 3 * D), jnp.float32) * 0.01,
            "wo": lin_w(lk[2], D, D),
            "bo": jax.random.normal(lk[3], (1, D), jnp.float32) * 0.01,
            "ln2_g": jnp.ones((1, D), jnp.float32),
            "ln2_b": jnp.zeros((1, D), jnp.float32),
            "w1": lin_w(lk[4], D, 4 * D),
            "b1": jax.random.normal(lk[5], (1, 4 * D), jnp.float32) * 0.01,
            "w2": lin_w(lk[6], 4 * D, D),
            "b2": jax.random.normal(lk[7], (1, D), jnp.float32) * 0.01,
        })
    return params


def clip_forward(tokens, params, n_head):
    tokens = tokens.astype(jnp.int32)
    # glue: embedding gather + positional add in plain JAX (not the hot path)
    x = jnp.take(params["tok_emb"], tokens, axis=0) + params["pos_emb"][None]
    B, S, D = x.shape

    # Pad the sequence to a sublane multiple; pad rows are masked-off garbage
    # that never contaminates real rows (causal attention + row-wise LN/MLP).
    S_pad = ((S + 7) // 8) * 8
    if S_pad != S:
        x = jnp.pad(x, ((0, 0), (0, S_pad - S), (0, 0)))

    # Additive causal mask bias (finite large-negative; safe for padded rows).
    row = jnp.arange(S_pad)[:, None]
    col = jnp.arange(S_pad)[None, :]
    mask_bias = jnp.where(col <= row, 0.0, MASK_NEG).astype(jnp.float32)

    # Stack per-layer params along a leading layer axis for the fused kernel.
    stacked = {k: jnp.stack([lp[k] for lp in params["layers"]], axis=0)
               for k in _LAYER_PARAM_ORDER}

    out = run_clip_stack(x, mask_bias, stacked,
                         params["ln_f_g"], params["ln_f_b"], n_head)
    return out[:, :S, :]


# ----------------------------- pure-JAX reference ---------------------------

def clip_forward_ref(tokens, params, n_head):
    """Reference that mirrors the kernel's numerics (bf16 matmul operands,
    f32 accumulation, f32 LayerNorm/softmax/residuals)."""
    f32, bf16 = jnp.float32, jnp.bfloat16
    qd = lambda a: a.astype(bf16).astype(f32)      # quantize like kernel matmul operand

    def ln(x, g, b):
        mu = x.mean(-1, keepdims=True)
        var = ((x - mu) ** 2).mean(-1, keepdims=True)
        return (x - mu) * lax.rsqrt(var + LN_EPS) * g + b

    tokens = tokens.astype(jnp.int32)
    x = jnp.take(params["tok_emb"], tokens, axis=0) + params["pos_emb"][None]
    B, S, D = x.shape
    dh = D // n_head
    row = jnp.arange(S)[:, None]
    col = jnp.arange(S)[None, :]
    bias = jnp.where(col <= row, 0.0, MASK_NEG).astype(f32)

    for lp in params["layers"]:
        r = x
        h = ln(x, lp["ln1_g"], lp["ln1_b"])
        qkv = qd(h) @ lp["wqkv"].astype(f32) + lp["bqkv"]
        q, k, v = jnp.split(qkv, 3, axis=-1)
        q = qd(q).reshape(B, S, n_head, dh).transpose(0, 2, 1, 3)
        k = qd(k).reshape(B, S, n_head, dh).transpose(0, 2, 1, 3)
        v = qd(v).reshape(B, S, n_head, dh).transpose(0, 2, 1, 3)
        s = jnp.einsum("bhqd,bhkd->bhqk", q, k) * (1.0 / math.sqrt(dh)) + bias
        p = jax.nn.softmax(s, axis=-1)
        o = jnp.einsum("bhqk,bhkd->bhqd", qd(p), v)
        o = o.transpose(0, 2, 1, 3).reshape(B, S, D)
        x = qd(o) @ lp["wo"].astype(f32) + lp["bo"] + r
        r = x
        h = ln(x, lp["ln2_g"], lp["ln2_b"])
        h = qd(h) @ lp["w1"].astype(f32) + lp["b1"]
        h = h * jax.nn.sigmoid(1.702 * h)
        x = qd(h) @ lp["w2"].astype(f32) + lp["b2"] + r
    return ln(x, params["ln_f_g"], params["ln_f_b"])


# ----------------------------------- main ------------------------------------

if __name__ == "__main__":
    # Small configuration consistent with the CLIP structure
    # (real model: n_vocab=49408, n_embed=768, n_token=77, n_layers=12, n_head=12).
    # n_token=77 exercises the seq padding path (77 -> 80).
    N_VOCAB, N_EMBED, N_TOKEN, N_LAYERS, N_HEAD = 512, 128, 77, 2, 4
    BATCH = 2

    root = jax.random.PRNGKey(0)
    k_param, k_tok = jax.random.split(root)
    params = init_clip_params(k_param, N_VOCAB, N_EMBED, N_TOKEN, N_LAYERS, N_HEAD)
    tokens = jax.random.randint(k_tok, (BATCH, N_TOKEN), 0, N_VOCAB, dtype=jnp.int32)

    out = clip_forward(tokens, params, N_HEAD)
    out = jax.block_until_ready(out)

    ref = jax.block_until_ready(clip_forward_ref(tokens, params, N_HEAD))
    assert out.shape == (BATCH, N_TOKEN, N_EMBED)
    assert bool(jnp.all(jnp.isfinite(out)))
    assert jnp.allclose(out, ref, rtol=2e-2, atol=2e-2), "mismatch vs pure-JAX reference"

    print("KERNEL_OK")
</pallas_src>

<mosaic_0001>
module attributes {stable_mosaic.version = 11 : i64} {
  func.func @clip_stack_kernel(%arg0: i32, %arg1: i32, %arg2: memref<1x80x128xf32, #tpu.memory_space<vmem>>, %arg3: memref<80x80xf32, #tpu.memory_space<vmem>>, %arg4: memref<1x1x128xf32, #tpu.memory_space<vmem>>, %arg5: memref<1x1x128xf32, #tpu.memory_space<vmem>>, %arg6: memref<1x128x384xbf16, #tpu.memory_space<vmem>>, %arg7: memref<1x1x384xf32, #tpu.memory_space<vmem>>, %arg8: memref<1x128x128xbf16, #tpu.memory_space<vmem>>, %arg9: memref<1x1x128xf32, #tpu.memory_space<vmem>>, %arg10: memref<1x1x128xf32, #tpu.memory_space<vmem>>, %arg11: memref<1x1x128xf32, #tpu.memory_space<vmem>>, %arg12: memref<1x128x512xbf16, #tpu.memory_space<vmem>>, %arg13: memref<1x1x512xf32, #tpu.memory_space<vmem>>, %arg14: memref<1x512x128xbf16, #tpu.memory_space<vmem>>, %arg15: memref<1x1x128xf32, #tpu.memory_space<vmem>>, %arg16: memref<1x128xf32, #tpu.memory_space<vmem>>, %arg17: memref<1x128xf32, #tpu.memory_space<vmem>>, %arg18: memref<1x80x128xf32, #tpu.memory_space<vmem>>, %arg19: memref<80x128xf32, #tpu.memory_space<vmem>>, %arg20: memref<80x128xf32, #tpu.memory_space<vmem>>) attributes {dimension_semantics = [#tpu.dimension_semantics<parallel>, #tpu.dimension_semantics<arbitrary>], iteration_bounds = array<i64: 2, 2>, scalar_prefetch = 0 : i64, scratch_operands = 2 : i64, tpu.core_type = #tpu.core_type<tc>, window_params = [{transform_indices = @transform_0, window_bounds = array<i64: 1, 80, 128>}, {pipeline_mode = #tpu.pipeline_mode<synchronous>, transform_indices = @transform_1, window_bounds = array<i64: 80, 80>}, {transform_indices = @transform_2, window_bounds = array<i64: 1, 1, 128>}, {transform_indices = @transform_3, window_bounds = array<i64: 1, 1, 128>}, {transform_indices = @transform_4, window_bounds = array<i64: 1, 128, 384>}, {transform_indices = @transform_5, window_bounds = array<i64: 1, 1, 384>}, {transform_indices = @transform_6, window_bounds = array<i64: 1, 128, 128>}, {transform_indices = @transform_7, window_bounds = array<i64: 1, 1, 128>}, {transform_indices = @transform_8, window_bounds = array<i64: 1, 1, 128>}, {transform_indices = @transform_9, window_bounds = array<i64: 1, 1, 128>}, {transform_indices = @transform_10, window_bounds = array<i64: 1, 128, 512>}, {transform_indices = @transform_11, window_bounds = array<i64: 1, 1, 512>}, {transform_indices = @transform_12, window_bounds = array<i64: 1, 512, 128>}, {transform_indices = @transform_13, window_bounds = array<i64: 1, 1, 128>}, {pipeline_mode = #tpu.pipeline_mode<synchronous>, transform_indices = @transform_14, window_bounds = array<i64: 1, 128>}, {pipeline_mode = #tpu.pipeline_mode<synchronous>, transform_indices = @transform_15, window_bounds = array<i64: 1, 128>}, {transform_indices = @transform_16, window_bounds = array<i64: 1, 80, 128>}]} {
    %c0_i32 = arith.constant 0 : i32
    %0 = arith.cmpi eq, %arg1, %c0_i32 : i32
    %1 = arith.extui %0 : i1 to i32
    %c0_i32_0 = arith.constant 0 : i32
    %2 = arith.cmpi ne, %1, %c0_i32_0 : i32
    scf.if %2 {
      %c0_70 = arith.constant 0 : index
      %c0_71 = arith.constant 0 : index
      %c0_72 = arith.constant 0 : index
      %164 = vector.load %arg2[%c0_70, %c0_71, %c0_72] : memref<1x80x128xf32, #tpu.memory_space<vmem>>, vector<1x80x128xf32>
      %165 = vector.shape_cast %164 : vector<1x80x128xf32> to vector<80x128xf32>
      %c0_73 = arith.constant 0 : index
      %c0_74 = arith.constant 0 : index
      %166 = vector.load %arg19[%c0_73, %c0_74] : memref<80x128xf32, #tpu.memory_space<vmem>>, vector<80x128xf32>
      tpu.vector_store %arg19[%c0_73, %c0_74], %165 {strides = array<i32>} : memref<80x128xf32, #tpu.memory_space<vmem>>, vector<80x128xf32>,
    } else {
    }
    %c0 = arith.constant 0 : index
    %c0_1 = arith.constant 0 : index
    %3 = vector.load %arg19[%c0, %c0_1] : memref<80x128xf32, #tpu.memory_space<vmem>>, vector<80x128xf32>
    %c0_2 = arith.constant 0 : index
    %c0_3 = arith.constant 0 : index
    %c0_4 = arith.constant 0 : index
    %4 = vector.load %arg4[%c0_2, %c0_3, %c0_4] : memref<1x1x128xf32, #tpu.memory_space<vmem>>, vector<1x1x128xf32>
    %5 = vector.shape_cast %4 : vector<1x1x128xf32> to vector<1x128xf32>
    %c0_5 = arith.constant 0 : index
    %c0_6 = arith.constant 0 : index
    %c0_7 = arith.constant 0 : index
    %6 = vector.load %arg5[%c0_5, %c0_6, %c0_7] : memref<1x1x128xf32, #tpu.memory_space<vmem>>, vector<1x1x128xf32>
    %7 = vector.shape_cast %6 : vector<1x1x128xf32> to vector<1x128xf32>
    %cst = arith.constant dense<0.000000e+00> : vector<80xf32>
    %8 = vector.multi_reduction <add>, %3, %cst [1] : vector<80x128xf32> to vector<80xf32>
    %9 = vector.shape_cast %8 : vector<80xf32> to vector<80x1xf32>
    %cst_8 = arith.constant 1.280000e+02 : f32
    %10 = vector.broadcast %cst_8 : f32 to vector<80x1xf32>
    %11 = arith.divf %9, %10 : vector<80x1xf32>
    %12 = vector.broadcast %11 : vector<80x1xf32> to vector<80x128xf32>
    %13 = arith.subf %3, %12 : vector<80x128xf32>
    %14 = arith.mulf %13, %13 : vector<80x128xf32>
    %cst_9 = arith.constant dense<0.000000e+00> : vector<80xf32>
    %15 = vector.multi_reduction <add>, %14, %cst_9 [1] : vector<80x128xf32> to vector<80xf32>
    %16 = vector.shape_cast %15 : vector<80xf32> to vector<80x1xf32>
    %cst_10 = arith.constant 1.280000e+02 : f32
    %17 = vector.broadcast %cst_10 : f32 to vector<80x1xf32>
    %18 = arith.divf %16, %17 : vector<80x1xf32>
    %19 = vector.broadcast %11 : vector<80x1xf32> to vector<80x128xf32>
    %20 = arith.subf %3, %19 : vector<80x128xf32>
    %cst_11 = arith.constant 9.99999974E-6 : f32
    %21 = vector.broadcast %cst_11 : f32 to vector<80x1xf32>
    %22 = arith.addf %18, %21 : vector<80x1xf32>
    %23 = math.rsqrt %22 : vector<80x1xf32>
    %24 = vector.broadcast %23 : vector<80x1xf32> to vector<80x128xf32>
    %25 = arith.mulf %20, %24 : vector<80x128xf32>
    %26 = vector.broadcast %5 : vector<1x128xf32> to vector<80x128xf32>
    %27 = arith.mulf %25, %26 : vector<80x128xf32>
    %28 = vector.broadcast %7 : vector<1x128xf32> to vector<80x128xf32>
    %29 = arith.addf %27, %28 : vector<80x128xf32>
    %30 = arith.truncf %29 : vector<80x128xf32> to vector<80x128xbf16>
    %c0_12 = arith.constant 0 : index
    %c0_13 = arith.constant 0 : index
    %c0_14 = arith.constant 0 : index
    %31 = vector.load %arg6[%c0_12, %c0_13, %c0_14] : memref<1x128x384xbf16, #tpu.memory_space<vmem>>, vector<1x128x384xbf16>
    %32 = vector.shape_cast %31 : vector<1x128x384xbf16> to vector<128x384xbf16>
    %cst_15 = arith.constant dense<0.000000e+00> : vector<80x384xf32>
    %33 = tpu.matmul %30, %32, %cst_15 {dimension_numbers = #tpu.dot_dimension_numbers<[1], [0], [0], [1], [0, 0, 1, 1], [], []>} : vector<80x128xbf16>, vector<128x384xbf16>, vector<80x384xf32> -> vector<80x384xf32>
    %c0_16 = arith.constant 0 : index
    %c0_17 = arith.constant 0 : index
    %c0_18 = arith.constant 0 : index
    %34 = vector.load %arg7[%c0_16, %c0_17, %c0_18] : memref<1x1x384xf32, #tpu.memory_space<vmem>>, vector<1x1x384xf32>
    %35 = vector.shape_cast %34 : vector<1x1x384xf32> to vector<1x384xf32>
    %36 = vector.broadcast %35 : vector<1x384xf32> to vector<80x384xf32>
    %37 = arith.addf %33, %36 : vector<80x384xf32>
    %38 = vector.extract_strided_slice %37 {offsets = [0, 0], sizes = [80, 32], strides = [1, 1]} : vector<80x384xf32> to vector<80x32xf32>
    %39 = vector.extract_strided_slice %37 {offsets = [0, 32], sizes = [80, 32], strides = [1, 1]} : vector<80x384xf32> to vector<80x32xf32>
    %40 = vector.extract_strided_slice %37 {offsets = [0, 64], sizes = [80, 32], strides = [1, 1]} : vector<80x384xf32> to vector<80x32xf32>
    %41 = vector.extract_strided_slice %37 {offsets = [0, 96], sizes = [80, 32], strides = [1, 1]} : vector<80x384xf32> to vector<80x32xf32>
    %42 = vector.shape_cast %38 : vector<80x32xf32> to vector<1x80x32xf32>
    %43 = vector.shape_cast %39 : vector<80x32xf32> to vector<1x80x32xf32>
    %44 = vector.shape_cast %40 : vector<80x32xf32> to vector<1x80x32xf32>
    %45 = vector.shape_cast %41 : vector<80x32xf32> to vector<1x80x32xf32>
    %46 = tpu.concatenate %42, %43, %44, %45 in 0 : vector<1x80x32xf32>, vector<1x80x32xf32>, vector<1x80x32xf32>, vector<1x80x32xf32> -> vector<4x80x32xf32>
    %47 = vector.extract_strided_slice %37 {offsets = [0, 128], sizes = [80, 32], strides = [1, 1]} : vector<80x384xf32> to vector<80x32xf32>
    %48 = vector.extract_strided_slice %37 {offsets = [0, 160], sizes = [80, 32], strides = [1, 1]} : vector<80x384xf32> to vector<80x32xf32>
    %49 = vector.extract_strided_slice %37 {offsets = [0, 192], sizes = [80, 32], strides = [1, 1]} : vector<80x384xf32> to vector<80x32xf32>
    %50 = vector.extract_strided_slice %37 {offsets = [0, 224], sizes = [80, 32], strides = [1, 1]} : vector<80x384xf32> to vector<80x32xf32>
    %51 = vector.shape_cast %47 : vector<80x32xf32> to vector<1x80x32xf32>
    %52 = vector.shape_cast %48 : vector<80x32xf32> to vector<1x80x32xf32>
    %53 = vector.shape_cast %49 : vector<80x32xf32> to vector<1x80x32xf32>
    %54 = vector.shape_cast %50 : vector<80x32xf32> to vector<1x80x32xf32>
    %55 = tpu.concatenate %51, %52, %53, %54 in 0 : vector<1x80x32xf32>, vector<1x80x32xf32>, vector<1x80x32xf32>, vector<1x80x32xf32> -> vector<4x80x32xf32>
    %56 = vector.extract_strided_slice %37 {offsets = [0, 256], sizes = [80, 32], strides = [1, 1]} : vector<80x384xf32> to vector<80x32xf32>
    %57 = vector.extract_strided_slice %37 {offsets = [0, 288], sizes = [80, 32], strides = [1, 1]} : vector<80x384xf32> to vector<80x32xf32>
    %58 = vector.extract_strided_slice %37 {offsets = [0, 320], sizes = [80, 32], strides = [1, 1]} : vector<80x384xf32> to vector<80x32xf32>
    %59 = vector.extract_strided_slice %37 {offsets = [0, 352], sizes = [80, 32], strides = [1, 1]} : vector<80x384xf32> to vector<80x32xf32>
    %60 = vector.shape_cast %56 : vector<80x32xf32> to vector<1x80x32xf32>
    %61 = vector.shape_cast %57 : vector<80x32xf32> to vector<1x80x32xf32>
    %62 = vector.shape_cast %58 : vector<80x32xf32> to vector<1x80x32xf32>
    %63 = vector.shape_cast %59 : vector<80x32xf32> to vector<1x80x32xf32>
    %64 = tpu.concatenate %60, %61, %62, %63 in 0 : vector<1x80x32xf32>, vector<1x80x32xf32>, vector<1x80x32xf32>, vector<1x80x32xf32> -> vector<4x80x32xf32>
    %65 = arith.truncf %46 : vector<4x80x32xf32> to vector<4x80x32xbf16>
    %66 = arith.truncf %55 : vector<4x80x32xf32> to vector<4x80x32xbf16>
    "tpu.trace_start"() <{level = 10 : i32, message = "hqd,hkd->hqk"}> : () -> ()
    %cst_19 = arith.constant dense<0.000000e+00> : vector<4x80x80xf32>
    %67 = tpu.matmul %65, %66, %cst_19 {dimension_numbers = #tpu.dot_dimension_numbers<[2], [2], [1], [1], [0, 0, 0, 1, 1, 1], [0], [0]>} : vector<4x80x32xbf16>, vector<4x80x32xbf16>, vector<4x80x80xf32> -> vector<4x80x80xf32>
    "tpu.trace_stop"() : () -> ()
    %cst_20 = arith.constant 0.176776692 : f32
    %68 = vector.broadcast %cst_20 : f32 to vector<4x80x80xf32>
    %69 = arith.mulf %67, %68 : vector<4x80x80xf32>
    %c0_21 = arith.constant 0 : index
    %c0_22 = arith.constant 0 : index
    %70 = vector.load %arg3[%c0_21, %c0_22] : memref<80x80xf32, #tpu.memory_space<vmem>>, vector<80x80xf32>
    %71 = vector.shape_cast %70 : vector<80x80xf32> to vector<1x80x80xf32>
    %72 = vector.broadcast %71 : vector<1x80x80xf32> to vector<4x80x80xf32>
    %73 = arith.addf %69, %72 : vector<4x80x80xf32>
    %cst_23 = arith.constant dense<0xFF800000> : vector<4x80xf32>
    %74 = vector.multi_reduction <maximumf>, %73, %cst_23 [2] : vector<4x80x80xf32> to vector<4x80xf32>
    %75 = vector.shape_cast %74 : vector<4x80xf32> to vector<4x80x1xf32>
    %76 = vector.broadcast %75 : vector<4x80x1xf32> to vector<4x80x80xf32>
    %77 = arith.subf %73, %76 : vector<4x80x80xf32>
    %78 = math.exp %77 : vector<4x80x80xf32>
    %cst_24 = arith.constant dense<0.000000e+00> : vector<4x80xf32>
    %79 = vector.multi_reduction <add>, %78, %cst_24 [2] : vector<4x80x80xf32> to vector<4x80xf32>
    %80 = vector.shape_cast %79 : vector<4x80xf32> to vector<4x80x1xf32>
    %81 = tpu.reciprocal %80 {approx = true} : vector<4x80x1xf32> -> vector<4x80x1xf32>
    %82 = vector.broadcast %81 : vector<4x80x1xf32> to vector<4x80x80xf32>
    %83 = arith.mulf %78, %82 : vector<4x80x80xf32>
    %84 = arith.truncf %83 : vector<4x80x80xf32> to vector<4x80x80xbf16>
    %85 = arith.truncf %64 : vector<4x80x32xf32> to vector<4x80x32xbf16>
    "tpu.trace_start"() <{level = 10 : i32, message = "hqk,hkd->hqd"}> : () -> ()
    %cst_25 = arith.constant dense<0.000000e+00> : vector<4x80x32xf32>
    %86 = tpu.matmul %84, %85, %cst_25 {dimension_numbers = #tpu.dot_dimension_numbers<[2], [1], [1], [2], [0, 0, 0, 1, 1, 2], [0], [0]>} : vector<4x80x80xbf16>, vector<4x80x32xbf16>, vector<4x80x32xf32> -> vector<4x80x32xf32>
    "tpu.trace_stop"() : () -> ()
    %87 = vector.extract_strided_slice %86 {offsets = [0, 0, 0], sizes = [1, 80, 32], strides = [1, 1, 1]} : vector<4x80x32xf32> to vector<1x80x32xf32>
    %88 = vector.shape_cast %87 : vector<1x80x32xf32> to vector<80x32xf32>
    %c0_26 = arith.constant 0 : index
    %c0_27 = arith.constant 0 : index
    %89 = vector.load %arg20[%c0_26, %c0_27] : memref<80x128xf32, #tpu.memory_space<vmem>>, vector<80x32xf32>
    tpu.vector_store %arg20[%c0_26, %c0_27], %88 {strides = array<i32>} : memref<80x128xf32, #tpu.memory_space<vmem>>, vector<80x32xf32>,
    %90 = vector.extract_strided_slice %86 {offsets = [1, 0, 0], sizes = [1, 80, 32], strides = [1, 1, 1]} : vector<4x80x32xf32> to vector<1x80x32xf32>
    %91 = vector.shape_cast %90 : vector<1x80x32xf32> to vector<80x32xf32>
    %c0_28 = arith.constant 0 : index
    %c32 = arith.constant 32 : index
    %92 = vector.load %arg20[%c0_28, %c32] : memref<80x128xf32, #tpu.memory_space<vmem>>, vector<80x32xf32>
    tpu.vector_store %arg20[%c0_28, %c32], %91 {strides = array<i32>} : memref<80x128xf32, #tpu.memory_space<vmem>>, vector<80x32xf32>,
    %93 = vector.extract_strided_slice %86 {offsets = [2, 0, 0], sizes = [1, 80, 32], strides = [1, 1, 1]} : vector<4x80x32xf32> to vector<1x80x32xf32>
    %94 = vector.shape_cast %93 : vector<1x80x32xf32> to vector<80x32xf32>
    %c0_29 = arith.constant 0 : index
    %c64 = arith.constant 64 : index
    %95 = vector.load %arg20[%c0_29, %c64] : memref<80x128xf32, #tpu.memory_space<vmem>>, vector<80x32xf32>
    tpu.vector_store %arg20[%c0_29, %c64], %94 {strides = array<i32>} : memref<80x128xf32, #tpu.memory_space<vmem>>, vector<80x32xf32>,
    %96 = vector.extract_strided_slice %86 {offsets = [3, 0, 0], sizes = [1, 80, 32], strides = [1, 1, 1]} : vector<4x80x32xf32> to vector<1x80x32xf32>
    %97 = vector.shape_cast %96 : vector<1x80x32xf32> to vector<80x32xf32>
    %c0_30 = arith.constant 0 : index
    %c96 = arith.constant 96 : index
    %98 = vector.load %arg20[%c0_30, %c96] : memref<80x128xf32, #tpu.memory_space<vmem>>, vector<80x32xf32>
    tpu.vector_store %arg20[%c0_30, %c96], %97 {strides = array<i32>} : memref<80x128xf32, #tpu.memory_space<vmem>>, vector<80x32xf32>,
    %c0_31 = arith.constant 0 : index
    %c0_32 = arith.constant 0 : index
    %99 = vector.load %arg20[%c0_31, %c0_32] : memref<80x128xf32, #tpu.memory_space<vmem>>, vector<80x128xf32>
    %100 = arith.truncf %99 : vector<80x128xf32> to vector<80x128xbf16>
    %c0_33 = arith.constant 0 : index
    %c0_34 = arith.constant 0 : index
    %c0_35 = arith.constant 0 : index
    %101 = vector.load %arg8[%c0_33, %c0_34, %c0_35] : memref<1x128x128xbf16, #tpu.memory_space<vmem>>, vector<1x128x128xbf16>
    %102 = vector.shape_cast %101 : vector<1x128x128xbf16> to vector<128x128xbf16>
    %cst_36 = arith.constant dense<0.000000e+00> : vector<80x128xf32>
    %103 = tpu.matmul %100, %102, %cst_36 {dimension_numbers = #tpu.dot_dimension_numbers<[1], [0], [0], [1], [0, 0, 1, 1], [], []>} : vector<80x128xbf16>, vector<128x128xbf16>, vector<80x128xf32> -> vector<80x128xf32>
    %c0_37 = arith.constant 0 : index
    %c0_38 = arith.constant 0 : index
    %c0_39 = arith.constant 0 : index
    %104 = vector.load %arg9[%c0_37, %c0_38, %c0_39] : memref<1x1x128xf32, #tpu.memory_space<vmem>>, vector<1x1x128xf32>
    %105 = vector.shape_cast %104 : vector<1x1x128xf32> to vector<1x128xf32>
    %106 = vector.broadcast %105 : vector<1x128xf32> to vector<80x128xf32>
    %107 = arith.addf %103, %106 : vector<80x128xf32>
    %108 = arith.addf %107, %3 : vector<80x128xf32>
    %c0_40 = arith.constant 0 : index
    %c0_41 = arith.constant 0 : index
    %c0_42 = arith.constant 0 : index
    %109 = vector.load %arg10[%c0_40, %c0_41, %c0_42] : memref<1x1x128xf32, #tpu.memory_space<vmem>>, vector<1x1x128xf32>
    %110 = vector.shape_cast %109 : vector<1x1x128xf32> to vector<1x128xf32>
    %c0_43 = arith.constant 0 : index
    %c0_44 = arith.constant 0 : index
    %c0_45 = arith.constant 0 : index
    %111 = vector.load %arg11[%c0_43, %c0_44, %c0_45] : memref<1x1x128xf32, #tpu.memory_space<vmem>>, vector<1x1x128xf32>
    %112 = vector.shape_cast %111 : vector<1x1x128xf32> to vector<1x128xf32>
    %cst_46 = arith.constant dense<0.000000e+00> : vector<80xf32>
    %113 = vector.multi_reduction <add>, %108, %cst_46 [1] : vector<80x128xf32> to vector<80xf32>
    %114 = vector.shape_cast %113 : vector<80xf32> to vector<80x1xf32>
    %cst_47 = arith.constant 1.280000e+02 : f32
    %115 = vector.broadcast %cst_47 : f32 to vector<80x1xf32>
    %116 = arith.divf %114, %115 : vector<80x1xf32>
    %117 = vector.broadcast %116 : vector<80x1xf32> to vector<80x128xf32>
    %118 = arith.subf %108, %117 : vector<80x128xf32>
    %119 = arith.mulf %118, %118 : vector<80x128xf32>
    %cst_48 = arith.constant dense<0.000000e+00> : vector<80xf32>
    %120 = vector.multi_reduction <add>, %119, %cst_48 [1] : vector<80x128xf32> to vector<80xf32>
    %121 = vector.shape_cast %120 : vector<80xf32> to vector<80x1xf32>
    %cst_49 = arith.constant 1.280000e+02 : f32
    %122 = vector.broadcast %cst_49 : f32 to vector<80x1xf32>
    %123 = arith.divf %121, %122 : vector<80x1xf32>
    %124 = vector.broadcast %116 : vector<80x1xf32> to vector<80x128xf32>
    %125 = arith.subf %108, %124 : vector<80x128xf32>
    %cst_50 = arith.constant 9.99999974E-6 : f32
    %126 = vector.broadcast %cst_50 : f32 to vector<80x1xf32>
    %127 = arith.addf %123, %126 : vector<80x1xf32>
    %128 = math.rsqrt %127 : vector<80x1xf32>
    %129 = vector.broadcast %128 : vector<80x1xf32> to vector<80x128xf32>
    %130 = arith.mulf %125, %129 : vector<80x128xf32>
    %131 = vector.broadcast %110 : vector<1x128xf32> to vector<80x128xf32>
    %132 = arith.mulf %130, %131 : vector<80x128xf32>
    %133 = vector.broadcast %112 : vector<1x128xf32> to vector<80x128xf32>
    %134 = arith.addf %132, %133 : vector<80x128xf32>
    %135 = arith.truncf %134 : vector<80x128xf32> to vector<80x128xbf16>
    %c0_51 = arith.constant 0 : index
    %c0_52 = arith.constant 0 : index
    %c0_53 = arith.constant 0 : index
    %136 = vector.load %arg12[%c0_51, %c0_52, %c0_53] : memref<1x128x512xbf16, #tpu.memory_space<vmem>>, vector<1x128x512xbf16>
    %137 = vector.shape_cast %136 : vector<1x128x512xbf16> to vector<128x512xbf16>
    %cst_54 = arith.constant dense<0.000000e+00> : vector<80x512xf32>
    %138 = tpu.matmul %135, %137, %cst_54 {dimension_numbers = #tpu.dot_dimension_numbers<[1], [0], [0], [1], [0, 0, 1, 1], [], []>} : vector<80x128xbf16>, vector<128x512xbf16>, vector<80x512xf32> -> vector<80x512xf32>
    %c0_55 = arith.constant 0 : index
    %c0_56 = arith.constant 0 : index
    %c0_57 = arith.constant 0 : index
    %139 = vector.load %arg13[%c0_55, %c0_56, %c0_57] : memref<1x1x512xf32, #tpu.memory_space<vmem>>, vector<1x1x512xf32>
    %140 = vector.shape_cast %139 : vector<1x1x512xf32> to vector<1x512xf32>
    %141 = vector.broadcast %140 : vector<1x512xf32> to vector<80x512xf32>
    %142 = arith.addf %138, %141 : vector<80x512xf32>
    %cst_58 = arith.constant 1.702000e+00 : f32
    %143 = vector.broadcast %cst_58 : f32 to vector<80x512xf32>
    %144 = arith.mulf %143, %142 : vector<80x512xf32>
    %145 = arith.negf %144 : vector<80x512xf32>
    %146 = math.exp %145 : vector<80x512xf32>
    %cst_59 = arith.constant 1.000000e+00 : f32
    %147 = vector.broadcast %cst_59 : f32 to vector<80x512xf32>
    %148 = arith.addf %147, %146 : vector<80x512xf32>
    %149 = arith.divf %147, %148 : vector<80x512xf32>
    %150 = arith.mulf %142, %149 : vector<80x512xf32>
    %151 = arith.truncf %150 : vector<80x512xf32> to vector<80x512xbf16>
    %c0_60 = arith.constant 0 : index
    %c0_61 = arith.constant 0 : index
    %c0_62 = arith.constant 0 : index
    %152 = vector.load %arg14[%c0_60, %c0_61, %c0_62] : memref<1x512x128xbf16, #tpu.memory_space<vmem>>, vector<1x512x128xbf16>
    %153 = vector.shape_cast %152 : vector<1x512x128xbf16> to vector<512x128xbf16>
    %cst_63 = arith.constant dense<0.000000e+00> : vector<80x128xf32>
    %154 = tpu.matmul %151, %153, %cst_63 {dimension_numbers = #tpu.dot_dimension_numbers<[1], [0], [0], [1], [0, 0, 1, 1], [], []>} : vector<80x512xbf16>, vector<512x128xbf16>, vector<80x128xf32> -> vector<80x128xf32>
    %c0_64 = arith.constant 0 : index
    %c0_65 = arith.constant 0 : index
    %c0_66 = arith.constant 0 : index
    %155 = vector.load %arg15[%c0_64, %c0_65, %c0_66] : memref<1x1x128xf32, #tpu.memory_space<vmem>>, vector<1x1x128xf32>
    %156 = vector.shape_cast %155 : vector<1x1x128xf32> to vector<1x128xf32>
    %157 = vector.broadcast %156 : vector<1x128xf32> to vector<80x128xf32>
    %158 = arith.addf %154, %157 : vector<80x128xf32>
    %159 = arith.addf %158, %108 : vector<80x128xf32>
    %c0_67 = arith.constant 0 : index
    %c0_68 = arith.constant 0 : index
    %160 = vector.load %arg19[%c0_67, %c0_68] : memref<80x128xf32, #tpu.memory_space<vmem>>, vector<80x128xf32>
    tpu.vector_store %arg19[%c0_67, %c0_68], %159 {strides = array<i32>} : memref<80x128xf32, #tpu.memory_space<vmem>>, vector<80x128xf32>,
    %c1_i32 = arith.constant 1 : i32
    %161 = arith.cmpi eq, %arg1, %c1_i32 : i32
    %162 = arith.extui %161 : i1 to i32
    %c0_i32_69 = arith.constant 0 : i32
    %163 = arith.cmpi ne, %162, %c0_i32_69 : i32
    scf.if %163 {
      %c0_70 = arith.constant 0 : index
      %c0_71 = arith.constant 0 : index
      %164 = vector.load %arg16[%c0_70, %c0_71] : memref<1x128xf32, #tpu.memory_space<vmem>>, vector<1x128xf32>
      %c0_72 = arith.constant 0 : index
      %c0_73 = arith.constant 0 : index
      %165 = vector.load %arg17[%c0_72, %c0_73] : memref<1x128xf32, #tpu.memory_space<vmem>>, vector<1x128xf32>
      %cst_74 = arith.constant dense<0.000000e+00> : vector<80xf32>
      %166 = vector.multi_reduction <add>, %159, %cst_74 [1] : vector<80x128xf32> to vector<80xf32>
      %167 = vector.shape_cast %166 : vector<80xf32> to vector<80x1xf32>
      %cst_75 = arith.constant 1.280000e+02 : f32
      %168 = vector.broadcast %cst_75 : f32 to vector<80x1xf32>
      %169 = arith.divf %167, %168 : vector<80x1xf32>
      %170 = vector.broadcast %169 : vector<80x1xf32> to vector<80x128xf32>
      %171 = arith.subf %159, %170 : vector<80x128xf32>
      %172 = arith.mulf %171, %171 : vector<80x128xf32>
      %cst_76 = arith.constant dense<0.000000e+00> : vector<80xf32>
      %173 = vector.multi_reduction <add>, %172, %cst_76 [1] : vector<80x128xf32> to vector<80xf32>
      %174 = vector.shape_cast %173 : vector<80xf32> to vector<80x1xf32>
      %cst_77 = arith.constant 1.280000e+02 : f32
      %175 = vector.broadcast %cst_77 : f32 to vector<80x1xf32>
      %176 = arith.divf %174, %175 : vector<80x1xf32>
      %177 = vector.broadcast %169 : vector<80x1xf32> to vector<80x128xf32>
      %178 = arith.subf %159, %177 : vector<80x128xf32>
      %cst_78 = arith.constant 9.99999974E-6 : f32
      %179 = vector.broadcast %cst_78 : f32 to vector<80x1xf32>
      %180 = arith.addf %176, %179 : vector<80x1xf32>
      %181 = math.rsqrt %180 : vector<80x1xf32>
      %182 = vector.broadcast %181 : vector<80x1xf32> to vector<80x128xf32>
      %183 = arith.mulf %178, %182 : vector<80x128xf32>
      %184 = vector.broadcast %164 : vector<1x128xf32> to vector<80x128xf32>
      %185 = arith.mulf %183, %184 : vector<80x128xf32>
      %186 = vector.broadcast %165 : vector<1x128xf32> to vector<80x128xf32>
      %187 = arith.addf %185, %186 : vector<80x128xf32>
      %c0_79 = arith.constant 0 : index
      %c0_80 = arith.constant 0 : index
      %c0_81 = arith.constant 0 : index
      %188 = vector.load %arg18[%c0_79, %c0_80, %c0_81] : memref<1x80x128xf32, #tpu.memory_space<vmem>>, vector<1x80x128xf32>
      %189 = vector.shape_cast %188 : vector<1x80x128xf32> to vector<80x128xf32>
      %190 = vector.shape_cast %187 : vector<80x128xf32> to vector<1x80x128xf32>
      tpu.vector_store %arg18[%c0_79, %c0_80, %c0_81], %190 {strides = array<i32>} : memref<1x80x128xf32, #tpu.memory_space<vmem>>, vector<1x80x128xf32>,
    } else {
    }
    return
  }
  func.func @transform_0(%arg0: i32, %arg1: i32) -> (i32, i32, i32) {
    %c0_i32 = arith.constant 0 : i32
    %c0_i32_0 = arith.constant 0 : i32
    %c0_i32_1 = arith.constant 0 : i32
    return %arg0, %c0_i32, %c0_i32_0 : i32, i32, i32
  }
  func.func @transform_1(%arg0: i32, %arg1: i32) -> (i32, i32) {
    %c0_i32 = arith.constant 0 : i32
    %c0_i32_0 = arith.constant 0 : i32
    %c0_i32_1 = arith.constant 0 : i32
    return %c0_i32, %c0_i32_0 : i32, i32
  }
  func.func @transform_2(%arg0: i32, %arg1: i32) -> (i32, i32, i32) {
    %c0_i32 = arith.constant 0 : i32
    %c0_i32_0 = arith.constant 0 : i32
    %c0_i32_1 = arith.constant 0 : i32
    return %arg1, %c0_i32, %c0_i32_0 : i32, i32, i32
  }
  func.func @transform_3(%arg0: i32, %arg1: i32) -> (i32, i32, i32) {
    %c0_i32 = arith.constant 0 : i32
    %c0_i32_0 = arith.constant 0 : i32
    %c0_i32_1 = arith.constant 0 : i32
    return %arg1, %c0_i32, %c0_i32_0 : i32, i32, i32
  }
  func.func @transform_4(%arg0: i32, %arg1: i32) -> (i32, i32, i32) {
    %c0_i32 = arith.constant 0 : i32
    %c0_i32_0 = arith.constant 0 : i32
    %c0_i32_1 = arith.constant 0 : i32
    return %arg1, %c0_i32, %c0_i32_0 : i32, i32, i32
  }
  func.func @transform_5(%arg0: i32, %arg1: i32) -> (i32, i32, i32) {
    %c0_i32 = arith.constant 0 : i32
    %c0_i32_0 = arith.constant 0 : i32
    %c0_i32_1 = arith.constant 0 : i32
    return %arg1, %c0_i32, %c0_i32_0 : i32, i32, i32
  }
  func.func @transform_6(%arg0: i32, %arg1: i32) -> (i32, i32, i32) {
    %c0_i32 = arith.constant 0 : i32
    %c0_i32_0 = arith.constant 0 : i32
    %c0_i32_1 = arith.constant 0 : i32
    return %arg1, %c0_i32, %c0_i32_0 : i32, i32, i32
  }
  func.func @transform_7(%arg0: i32, %arg1: i32) -> (i32, i32, i32) {
    %c0_i32 = arith.constant 0 : i32
    %c0_i32_0 = arith.constant 0 : i32
    %c0_i32_1 = arith.constant 0 : i32
    return %arg1, %c0_i32, %c0_i32_0 : i32, i32, i32
  }
  func.func @transform_8(%arg0: i32, %arg1: i32) -> (i32, i32, i32) {
    %c0_i32 = arith.constant 0 : i32
    %c0_i32_0 = arith.constant 0 : i32
    %c0_i32_1 = arith.constant 0 : i32
    return %arg1, %c0_i32, %c0_i32_0 : i32, i32, i32
  }
  func.func @transform_9(%arg0: i32, %arg1: i32) -> (i32, i32, i32) {
    %c0_i32 = arith.constant 0 : i32
    %c0_i32_0 = arith.constant 0 : i32
    %c0_i32_1 = arith.constant 0 : i32
    return %arg1, %c0_i32, %c0_i32_0 : i32, i32, i32
  }
  func.func @transform_10(%arg0: i32, %arg1: i32) -> (i32, i32, i32) {
    %c0_i32 = arith.constant 0 : i32
    %c0_i32_0 = arith.constant 0 : i32
    %c0_i32_1 = arith.constant 0 : i32
    return %arg1, %c0_i32, %c0_i32_0 : i32, i32, i32
  }
  func.func @transform_11(%arg0: i32, %arg1: i32) -> (i32, i32, i32) {
    %c0_i32 = arith.constant 0 : i32
    %c0_i32_0 = arith.constant 0 : i32
    %c0_i32_1 = arith.constant 0 : i32
    return %arg1, %c0_i32, %c0_i32_0 : i32, i32, i32
  }
  func.func @transform_12(%arg0: i32, %arg1: i32) -> (i32, i32, i32) {
    %c0_i32 = arith.constant 0 : i32
    %c0_i32_0 = arith.constant 0 : i32
    %c0_i32_1 = arith.constant 0 : i32
    return %arg1, %c0_i32, %c0_i32_0 : i32, i32, i32
  }
  func.func @transform_13(%arg0: i32, %arg1: i32) -> (i32, i32, i32) {
    %c0_i32 = arith.constant 0 : i32
    %c0_i32_0 = arith.constant 0 : i32
    %c0_i32_1 = arith.constant 0 : i32
    return %arg1, %c0_i32, %c0_i32_0 : i32, i32, i32
  }
  func.func @transform_14(%arg0: i32, %arg1: i32) -> (i32, i32) {
    %c0_i32 = arith.constant 0 : i32
    %c0_i32_0 = arith.constant 0 : i32
    %c0_i32_1 = arith.constant 0 : i32
    return %c0_i32, %c0_i32_0 : i32, i32
  }
  func.func @transform_15(%arg0: i32, %arg1: i32) -> (i32, i32) {
    %c0_i32 = arith.constant 0 : i32
    %c0_i32_0 = arith.constant 0 : i32
    %c0_i32_1 = arith.constant 0 : i32
    return %c0_i32, %c0_i32_0 : i32, i32
  }
  func.func @transform_16(%arg0: i32, %arg1: i32) -> (i32, i32, i32) {
    %c0_i32 = arith.constant 0 : i32
    %c0_i32_0 = arith.constant 0 : i32
    %c0_i32_1 = arith.constant 0 : i32
    return %arg0, %c0_i32, %c0_i32_0 : i32, i32, i32
  }
}

</mosaic_0001>

<llo_original>
// kernel: tpu_custom_call.1
$region0: #{tpu_custom_call.1}
  #allocation0 [shape = 'u32[]', space=smem, size = 0x4, offset = 0x4, fixed_abs, tag = 'smem constant byte address 0x4 - core index']
  #allocation1 [shape = 'u32[144,128]{1,0:T(1,128)}', space=vmem, size = 0x12000, scoped, tag = 'internal scratch']
  #allocation2 [shape = 'f32[80,128]{1,0:T(8,128)}', space=vmem, size = 0xa000, scoped, tag = 'scratch operand']
  #allocation3 [shape = 'f32[80,128]{1,0:T(8,128)}', space=vmem, size = 0xa000, scoped, tag = 'scratch operand']
  %s0 = inlined_call_operand.hbm [shape: f32[2,80,128], index: 0, kind: input, shape index: {}]
  %s1 = inlined_call_operand.hbm [shape: f32[80,80], index: 1, kind: input, shape index: {}]
  %s2 = inlined_call_operand.hbm [shape: f32[2,1,128], index: 2, kind: input, shape index: {}]
  %s3 = inlined_call_operand.hbm [shape: f32[2,1,128], index: 3, kind: input, shape index: {}]
  %s4 = inlined_call_operand.hbm [shape: bf16[2,128,384], index: 4, kind: input, shape index: {}]
  %s5 = inlined_call_operand.vmem [shape: f32[2,1,384], index: 5, kind: input, shape index: {}]
  %s6 = inlined_call_operand.hbm [shape: bf16[2,128,128], index: 6, kind: input, shape index: {}]
  %s7 = inlined_call_operand.vmem [shape: f32[2,1,128], index: 7, kind: input, shape index: {}]
  %s8 = inlined_call_operand.vmem [shape: f32[2,1,128], index: 8, kind: input, shape index: {}]
  %s9 = inlined_call_operand.vmem [shape: f32[2,1,128], index: 9, kind: input, shape index: {}]
  %s10 = inlined_call_operand.hbm [shape: bf16[2,128,512], index: 10, kind: input, shape index: {}]
  %s11 = inlined_call_operand.vmem [shape: f32[2,1,512], index: 11, kind: input, shape index: {}]
  %s12 = inlined_call_operand.hbm [shape: bf16[2,512,128], index: 12, kind: input, shape index: {}]
  %s13 = inlined_call_operand.vmem [shape: f32[2,1,128], index: 13, kind: input, shape index: {}]
  %s14 = inlined_call_operand.vmem [shape: f32[1,128], index: 14, kind: input, shape index: {}]
  %s15 = inlined_call_operand.vmem [shape: f32[1,128], index: 15, kind: input, shape index: {}]
  %s16 = inlined_call_operand.hbm [shape: f32[2,80,128], index: 16, kind: output, shape index: {}]
  %s17 = sld [smem:[#allocation0]]
  $region137: #{tpu_custom_call.1} parent=0
    _
  %s19 = ssub.s32 1, %s17
  %s20 = scalar_select 0, %s19, %s17
  $region1: #{tpu_custom_call.1} parent=0
    #allocation4 [shape = 'u8[81920]{0}', space=vmem, size = 0x14000, scoped, tag = 'input window, operand 0']
    #allocation5 [shape = 's32[2]{0}', space=sflag, size = 0x8, scoped, tag = 'scoped memory for tpu_custom_call.1']
    #allocation6 [shape = 's32[2]{0}', space=sflag, size = 0x8, scoped, tag = 'scoped memory for tpu_custom_call.1']
    #allocation7 [shape = 'u8[40960]{0}', space=vmem, size = 0xa000, scoped, tag = 'input window, operand 1, single buffered']
    #allocation8 [shape = 's32[1]{0}', space=sflag, size = 0x4, scoped, tag = 'scoped memory for tpu_custom_call.1']
    #allocation9 [shape = 'u8[1024]{0}', space=vmem, size = 0x400, scoped, tag = 'input window, operand 2']
    #allocation10 [shape = 'u8[1024]{0}', space=vmem, size = 0x400, scoped, tag = 'input window, operand 3']
    #allocation11 [shape = 'u8[196608]{0}', space=vmem, size = 0x30000, scoped, tag = 'input window, operand 4']
    #allocation12 [shape = 'u8[65536]{0}', space=vmem, size = 0x10000, scoped, tag = 'input window, operand 6']
    #allocation13 [shape = 'u8[262144]{0}', space=vmem, size = 0x40000, scoped, tag = 'input window, operand 10']
    #allocation14 [shape = 'u8[262144]{0}', space=vmem, size = 0x40000, scoped, tag = 'input window, operand 12']
    #allocation15 [shape = 'u8[81920]{0}', space=vmem, size = 0x14000, scoped, tag = 'output window, operand 0']
    %21 = vsyncpa [#allocation5], 0
    %s22 = scalar_lea.sflag [#allocation5], 1
    %23 = vsyncpa %s22, 0
    %24 = vsyncpa [#allocation8], 0
    %25 = vsyncpa [#allocation6], 0
    %s26 = scalar_lea.sflag [#allocation6], 1
    %27 = vsyncpa %s26, 0
    loop: start=0, step=1, limit=6
    $region2: #{tpu_custom_call.1} parent=1 // loop_pre_header
      _
    $region3: #{tpu_custom_call.1} parent=1 // loop_header
      %s29 = sphi 0, %s33
      %p30 = scmp.ge.s32.totalorder %s29, 6
      %s36 = sphi 0, %s48
      %s37 = sphi 0, %s44
      %s38 = sphi 0, %s36
      %s39 = sphi 0, %s37
      %s40 = sphi 0, %s38
      %s41 = sphi 0, %s39
      %s51 = sphi 0, %s53
      %s54 = sphi 0, %s51
      %s55 = sphi 0, %s54
      %s71 = sphi 0, %s55
      %s75 = sphi 0, %s75
      %s77 = sphi 0, %s75
      %s78 = sphi 0, %s77
      %s92 = sphi 0, %s78
      %s98 = sphi 0, %s100
      %s101 = sphi 0, %s98
      %s102 = sphi 0, %s101
      %s118 = sphi 0, %s102
      %s124 = sphi 0, %s126
      %s127 = sphi 0, %s124
      %s128 = sphi 0, %s127
      %s144 = sphi 0, %s128
      %s150 = sphi 0, %s152
      %s153 = sphi 0, %s150
      %s154 = sphi 0, %s153
      %s170 = sphi 0, %s154
      %s176 = sphi 0, %s178
      %s179 = sphi 0, %s176
      %s180 = sphi 0, %s179
      %s196 = sphi 0, %s180
      %s202 = sphi 0, %s204
      %s205 = sphi 0, %s202
      %s206 = sphi 0, %s205
      %s222 = sphi 0, %s206
      %s228 = sphi 0, %s230
      %s231 = sphi 0, %s228
      %s232 = sphi 0, %s231
      %s248 = sphi 0, %s232
      %s254 = sphi 0, %s256
      %s257 = sphi 0, %s254
      %s258 = sphi 0, %s257
      %s274 = sphi 0, %s258
      %s280 = sphi 0, %s282
      %s283 = sphi 0, %s280
      %s284 = sphi 0, %s283
      %s300 = sphi 0, %s284
      %s306 = sphi 0, %s308
      %s309 = sphi 0, %s306
      %s310 = sphi 0, %s309
      %s326 = sphi 0, %s310
      %s332 = sphi 0, %s334
      %s335 = sphi 0, %s332
      %s336 = sphi 0, %s335
      %s352 = sphi 0, %s336
      %s358 = sphi 0, %s360
      %s361 = sphi 0, %s358
      %s362 = sphi 0, %s361
      %s378 = sphi 0, %s362
      %s384 = sphi 0, %s386
      %s387 = sphi 0, %s384
      %s388 = sphi 0, %s387
      %s404 = sphi 0, %s388
      %s408 = sphi 0, %s408
      %s410 = sphi 0, %s408
      %s411 = sphi 0, %s410
      %s425 = sphi 0, %s411
      %s429 = sphi 0, %s429
      %s431 = sphi 0, %s429
      %s432 = sphi 0, %s431
      %s446 = sphi 0, %s432
      %s452 = sphi 0, %s454
      %s455 = sphi 0, %s452
      %s456 = sphi 0, %s455
      %s472 = sphi 0, %s456
    $region4: #{tpu_custom_call.1} parent=1 // loop_header_branch
      %32 = sbr.rel (%p30) target = $region8
    $region5: #{tpu_custom_call.1} parent=1 // loop_body
      %s34 = ssub.s32 %s29, 1
      %s35 = ssub.s32 %s29, 2
      %s42 = sadd.s32 1, %s37
      %p43 = scmp.ge.s32.totalorder %s42, 2
      %s44 = scalar_select %p43, 0, %s42
      %s45 = sadd.s32 1, %s36
      %s46 = scalar_select %p43, %s45, %s36
      %p47 = scmp.ge.s32.totalorder %s46, 2
      %s48 = scalar_select %p47, 0, %s46
      %s49 = ssub.s32 %s36, %s48
      %p50 = scmp.eq.s32.totalorder %s49, 0
      %s52 = sadd.s32 %s51, 1
      %s53 = scalar_select %p50, %s51, %s52
      %p56 = pneg %p50
      %p57 = scmp.eq.s32.totalorder %s29, 3
      %p58 = por %p56, %p57
      %p59 = scmp.ne.s32.totalorder %s51, %s54
      %p60 = scmp.eq.s32.totalorder %s29, 0
      %p61 = por %p59, %p60
      %p62 = scmp.ne.s32.totalorder %s51, %s54
      %p63 = scmp.eq.s32.totalorder %s34, 3
      %p64 = por %p62, %p63
      %p65 = scmp.ne.s32.totalorder %s54, %s55
      %p66 = scmp.eq.s32.totalorder %s34, 0
      %p67 = por %p65, %p66
      %p68 = scmp.ne.s32.totalorder %s54, %s55
      %p69 = scmp.eq.s32.totalorder %s35, 3
      %p70 = por %p68, %p69
      %p72 = scmp.ne.s32.totalorder %s55, %s71
      %p73 = scmp.eq.s32.totalorder %s35, 0
      %p74 = por %p72, %p73
      %s76 = sadd.s32 %s75, 1
      %p79 = scmp.eq.s32.totalorder %s29, 3
      %p80 = scmp.ne.s32.totalorder %s75, %s77
      %p81 = scmp.eq.s32.totalorder %s29, 0
      %p82 = por %p80, %p81
      %p83 = scmp.ne.s32.totalorder %s75, %s77
      %p84 = scmp.eq.s32.totalorder %s34, 3
      %p85 = por %p83, %p84
      %p86 = scmp.ne.s32.totalorder %s77, %s78
      %p87 = scmp.eq.s32.totalorder %s34, 0
      %p88 = por %p86, %p87
      %p89 = scmp.ne.s32.totalorder %s77, %s78
      %p90 = scmp.eq.s32.totalorder %s35, 3
      %p91 = por %p89, %p90
      %p93 = scmp.ne.s32.totalorder %s78, %s92
      %p94 = scmp.eq.s32.totalorder %s35, 0
      %p95 = por %p93, %p94
      %s96 = ssub.s32 %s37, %s44
      %p97 = scmp.eq.s32.totalorder %s96, 0
      %s99 = sadd.s32 %s98, 1
      %s100 = scalar_select %p97, %s98, %s99
      %p103 = pneg %p97
      %p104 = scmp.eq.s32.totalorder %s29, 3
      %p105 = por %p103, %p104
      %p106 = scmp.ne.s32.totalorder %s98, %s101
      %p107 = scmp.eq.s32.totalorder %s29, 0
      %p108 = por %p106, %p107
      %p109 = scmp.ne.s32.totalorder %s98, %s101
      %p110 = scmp.eq.s32.totalorder %s34, 3
      %p111 = por %p109, %p110
      %p112 = scmp.ne.s32.totalorder %s101, %s102
      %p113 = scmp.eq.s32.totalorder %s34, 0
      %p114 = por %p112, %p113
      %p115 = scmp.ne.s32.totalorder %s101, %s102
      %p116 = scmp.eq.s32.totalorder %s35, 3
      %p117 = por %p115, %p116
      %p119 = scmp.ne.s32.totalorder %s102, %s118
      %p120 = scmp.eq.s32.totalorder %s35, 0
      %p121 = por %p119, %p120
      %s122 = ssub.s32 %s37, %s44
      %p123 = scmp.eq.s32.totalorder %s122, 0
      %s125 = sadd.s32 %s124, 1
      %s126 = scalar_select %p123, %s124, %s125
      %p129 = pneg %p123
      %p130 = scmp.eq.s32.totalorder %s29, 3
      %p131 = por %p129, %p130
      %p132 = scmp.ne.s32.totalorder %s124, %s127
      %p133 = scmp.eq.s32.totalorder %s29, 0
      %p134 = por %p132, %p133
      %p135 = scmp.ne.s32.totalorder %s124, %s127
      %p136 = scmp.eq.s32.totalorder %s34, 3
      %p137 = por %p135, %p136
      %p138 = scmp.ne.s32.totalorder %s127, %s128
      %p139 = scmp.eq.s32.totalorder %s34, 0
      %p140 = por %p138, %p139
      %p141 = scmp.ne.s32.totalorder %s127, %s128
      %p142 = scmp.eq.s32.totalorder %s35, 3
      %p143 = por %p141, %p142
      %p145 = scmp.ne.s32.totalorder %s128, %s144
      %p146 = scmp.eq.s32.totalorder %s35, 0
      %p147 = por %p145, %p146
      %s148 = ssub.s32 %s37, %s44
      %p149 = scmp.eq.s32.totalorder %s148, 0
      %s151 = sadd.s32 %s150, 1
      %s152 = scalar_select %p149, %s150, %s151
      %p155 = pneg %p149
      %p156 = scmp.eq.s32.totalorder %s29, 3
      %p157 = por %p155, %p156
      %p158 = scmp.ne.s32.totalorder %s150, %s153
      %p159 = scmp.eq.s32.totalorder %s29, 0
      %p160 = por %p158, %p159
      %p161 = scmp.ne.s32.totalorder %s150, %s153
      %p162 = scmp.eq.s32.totalorder %s34, 3
      %p163 = por %p161, %p162
      %p164 = scmp.ne.s32.totalorder %s153, %s154
      %p165 = scmp.eq.s32.totalorder %s34, 0
      %p166 = por %p164, %p165
      %p167 = scmp.ne.s32.totalorder %s153, %s154
      %p168 = scmp.eq.s32.totalorder %s35, 3
      %p169 = por %p167, %p168
      %p171 = scmp.ne.s32.totalorder %s154, %s170
      %p172 = scmp.eq.s32.totalorder %s35, 0
      %p173 = por %p171, %p172
      %s174 = ssub.s32 %s37, %s44
      %p175 = scmp.eq.s32.totalorder %s174, 0
      %s177 = sadd.s32 %s176, 1
      %s178 = scalar_select %p175, %s176, %s177
      %p181 = pneg %p175
      %p182 = scmp.eq.s32.totalorder %s29, 3
      %p183 = por %p181, %p182
      %p184 = scmp.ne.s32.totalorder %s176, %s179
      %p185 = scmp.eq.s32.totalorder %s29, 0
      %p186 = por %p184, %p185
      %p187 = scmp.ne.s32.totalorder %s176, %s179
      %p188 = scmp.eq.s32.totalorder %s34, 3
      %p189 = por %p187, %p188
      %p190 = scmp.ne.s32.totalorder %s179, %s180
      %p191 = scmp.eq.s32.totalorder %s34, 0
      %p192 = por %p190, %p191
      %p193 = scmp.ne.s32.totalorder %s179, %s180
      %p194 = scmp.eq.s32.totalorder %s35, 3
      %p195 = por %p193, %p194
      %p197 = scmp.ne.s32.totalorder %s180, %s196
      %p198 = scmp.eq.s32.totalorder %s35, 0
      %p199 = por %p197, %p198
      %s200 = ssub.s32 %s37, %s44
      %p201 = scmp.eq.s32.totalorder %s200, 0
      %s203 = sadd.s32 %s202, 1
      %s204 = scalar_select %p201, %s202, %s203
      %p207 = pneg %p201
      %p208 = scmp.eq.s32.totalorder %s29, 3
      %p209 = por %p207, %p208
      %p210 = scmp.ne.s32.totalorder %s202, %s205
      %p211 = scmp.eq.s32.totalorder %s29, 0
      %p212 = por %p210, %p211
      %p213 = scmp.ne.s32.totalorder %s202, %s205
      %p214 = scmp.eq.s32.totalorder %s34, 3
      %p215 = por %p213, %p214
      %p216 = scmp.ne.s32.totalorder %s205, %s206
      %p217 = scmp.eq.s32.totalorder %s34, 0
      %p218 = por %p216, %p217
      %p219 = scmp.ne.s32.totalorder %s205, %s206
      %p220 = scmp.eq.s32.totalorder %s35, 3
      %p221 = por %p219, %p220
      %p223 = scmp.ne.s32.totalorder %s206, %s222
      %p224 = scmp.eq.s32.totalorder %s35, 0
      %p225 = por %p223, %p224
      %s226 = ssub.s32 %s37, %s44
      %p227 = scmp.eq.s32.totalorder %s226, 0
      %s229 = sadd.s32 %s228, 1
      %s230 = scalar_select %p227, %s228, %s229
      %p233 = pneg %p227
      %p234 = scmp.eq.s32.totalorder %s29, 3
      %p235 = por %p233, %p234
      %p236 = scmp.ne.s32.totalorder %s228, %s231
      %p237 = scmp.eq.s32.totalorder %s29, 0
      %p238 = por %p236, %p237
      %p239 = scmp.ne.s32.totalorder %s228, %s231
      %p240 = scmp.eq.s32.totalorder %s34, 3
      %p241 = por %p239, %p240
      %p242 = scmp.ne.s32.totalorder %s231, %s232
      %p243 = scmp.eq.s32.totalorder %s34, 0
      %p244 = por %p242, %p243
      %p245 = scmp.ne.s32.totalorder %s231, %s232
      %p246 = scmp.eq.s32.totalorder %s35, 3
      %p247 = por %p245, %p246
      %p249 = scmp.ne.s32.totalorder %s232, %s248
      %p250 = scmp.eq.s32.totalorder %s35, 0
      %p251 = por %p249, %p250
      %s252 = ssub.s32 %s37, %s44
      %p253 = scmp.eq.s32.totalorder %s252, 0
      %s255 = sadd.s32 %s254, 1
      %s256 = scalar_select %p253, %s254, %s255
      %p259 = pneg %p253
      %p260 = scmp.eq.s32.totalorder %s29, 3
      %p261 = por %p259, %p260
      %p262 = scmp.ne.s32.totalorder %s254, %s257
      %p263 = scmp.eq.s32.totalorder %s29, 0
      %p264 = por %p262, %p263
      %p265 = scmp.ne.s32.totalorder %s254, %s257
      %p266 = scmp.eq.s32.totalorder %s34, 3
      %p267 = por %p265, %p266
      %p268 = scmp.ne.s32.totalorder %s257, %s258
      %p269 = scmp.eq.s32.totalorder %s34, 0
      %p270 = por %p268, %p269
      %p271 = scmp.ne.s32.totalorder %s257, %s258
      %p272 = scmp.eq.s32.totalorder %s35, 3
      %p273 = por %p271, %p272
      %p275 = scmp.ne.s32.totalorder %s258, %s274
      %p276 = scmp.eq.s32.totalorder %s35, 0
      %p277 = por %p275, %p276
      %s278 = ssub.s32 %s37, %s44
      %p279 = scmp.eq.s32.totalorder %s278, 0
      %s281 = sadd.s32 %s280, 1
      %s282 = scalar_select %p279, %s280, %s281
      %p285 = pneg %p279
      %p286 = scmp.eq.s32.totalorder %s29, 3
      %p287 = por %p285, %p286
      %p288 = scmp.ne.s32.totalorder %s280, %s283
      %p289 = scmp.eq.s32.totalorder %s29, 0
      %p290 = por %p288, %p289
      %p291 = scmp.ne.s32.totalorder %s280, %s283
      %p292 = scmp.eq.s32.totalorder %s34, 3
      %p293 = por %p291, %p292
      %p294 = scmp.ne.s32.totalorder %s283, %s284
      %p295 = scmp.eq.s32.totalorder %s34, 0
      %p296 = por %p294, %p295
      %p297 = scmp.ne.s32.totalorder %s283, %s284
      %p298 = scmp.eq.s32.totalorder %s35, 3
      %p299 = por %p297, %p298
      %p301 = scmp.ne.s32.totalorder %s284, %s300
      %p302 = scmp.eq.s32.totalorder %s35, 0
      %p303 = por %p301, %p302
      %s304 = ssub.s32 %s37, %s44
      %p305 = scmp.eq.s32.totalorder %s304, 0
      %s307 = sadd.s32 %s306, 1
      %s308 = scalar_select %p305, %s306, %s307
      %p311 = pneg %p305
      %p312 = scmp.eq.s32.totalorder %s29, 3
      %p313 = por %p311, %p312
      %p314 = scmp.ne.s32.totalorder %s306, %s309
      %p315 = scmp.eq.s32.totalorder %s29, 0
      %p316 = por %p314, %p315
      %p317 = scmp.ne.s32.totalorder %s306, %s309
      %p318 = scmp.eq.s32.totalorder %s34, 3
      %p319 = por %p317, %p318
      %p320 = scmp.ne.s32.totalorder %s309, %s310
      %p321 = scmp.eq.s32.totalorder %s34, 0
      %p322 = por %p320, %p321
      %p323 = scmp.ne.s32.totalorder %s309, %s310
      %p324 = scmp.eq.s32.totalorder %s35, 3
      %p325 = por %p323, %p324
      %p327 = scmp.ne.s32.totalorder %s310, %s326
      %p328 = scmp.eq.s32.totalorder %s35, 0
      %p329 = por %p327, %p328
      %s330 = ssub.s32 %s37, %s44
      %p331 = scmp.eq.s32.totalorder %s330, 0
      %s333 = sadd.s32 %s332, 1
      %s334 = scalar_select %p331, %s332, %s333
      %p337 = pneg %p331
      %p338 = scmp.eq.s32.totalorder %s29, 3
      %p339 = por %p337, %p338
      %p340 = scmp.ne.s32.totalorder %s332, %s335
      %p341 = scmp.eq.s32.totalorder %s29, 0
      %p342 = por %p340, %p341
      %p343 = scmp.ne.s32.totalorder %s332, %s335
      %p344 = scmp.eq.s32.totalorder %s34, 3
      %p345 = por %p343, %p344
      %p346 = scmp.ne.s32.totalorder %s335, %s336
      %p347 = scmp.eq.s32.totalorder %s34, 0
      %p348 = por %p346, %p347
      %p349 = scmp.ne.s32.totalorder %s335, %s336
      %p350 = scmp.eq.s32.totalorder %s35, 3
      %p351 = por %p349, %p350
      %p353 = scmp.ne.s32.totalorder %s336, %s352
      %p354 = scmp.eq.s32.totalorder %s35, 0
      %p355 = por %p353, %p354
      %s356 = ssub.s32 %s37, %s44
      %p357 = scmp.eq.s32.totalorder %s356, 0
      %s359 = sadd.s32 %s358, 1
      %s360 = scalar_select %p357, %s358, %s359
      %p363 = pneg %p357
      %p364 = scmp.eq.s32.totalorder %s29, 3
      %p365 = por %p363, %p364
      %p366 = scmp.ne.s32.totalorder %s358, %s361
      %p367 = scmp.eq.s32.totalorder %s29, 0
      %p368 = por %p366, %p367
      %p369 = scmp.ne.s32.totalorder %s358, %s361
      %p370 = scmp.eq.s32.totalorder %s34, 3
      %p371 = por %p369, %p370
      %p372 = scmp.ne.s32.totalorder %s361, %s362
      %p373 = scmp.eq.s32.totalorder %s34, 0
      %p374 = por %p372, %p373
      %p375 = scmp.ne.s32.totalorder %s361, %s362
      %p376 = scmp.eq.s32.totalorder %s35, 3
      %p377 = por %p375, %p376
      %p379 = scmp.ne.s32.totalorder %s362, %s378
      %p380 = scmp.eq.s32.totalorder %s35, 0
      %p381 = por %p379, %p380
      %s382 = ssub.s32 %s37, %s44
      %p383 = scmp.eq.s32.totalorder %s382, 0
      %s385 = sadd.s32 %s384, 1
      %s386 = scalar_select %p383, %s384, %s385
      %p389 = pneg %p383
      %p390 = scmp.eq.s32.totalorder %s29, 3
      %p391 = por %p389, %p390
      %p392 = scmp.ne.s32.totalorder %s384, %s387
      %p393 = scmp.eq.s32.totalorder %s29, 0
      %p394 = por %p392, %p393
      %p395 = scmp.ne.s32.totalorder %s384, %s387
      %p396 = scmp.eq.s32.totalorder %s34, 3
      %p397 = por %p395, %p396
      %p398 = scmp.ne.s32.totalorder %s387, %s388
      %p399 = scmp.eq.s32.totalorder %s34, 0
      %p400 = por %p398, %p399
      %p401 = scmp.ne.s32.totalorder %s387, %s388
      %p402 = scmp.eq.s32.totalorder %s35, 3
      %p403 = por %p401, %p402
      %p405 = scmp.ne.s32.totalorder %s388, %s404
      %p406 = scmp.eq.s32.totalorder %s35, 0
      %p407 = por %p405, %p406
      %s409 = sadd.s32 %s408, 1
      %p412 = scmp.eq.s32.totalorder %s29, 3
      %p413 = scmp.ne.s32.totalorder %s408, %s410
      %p414 = scmp.eq.s32.totalorder %s29, 0
      %p415 = por %p413, %p414
      %p416 = scmp.ne.s32.totalorder %s408, %s410
      %p417 = scmp.eq.s32.totalorder %s34, 3
      %p418 = por %p416, %p417
      %p419 = scmp.ne.s32.totalorder %s410, %s411
      %p420 = scmp.eq.s32.totalorder %s34, 0
      %p421 = por %p419, %p420
      %p422 = scmp.ne.s32.totalorder %s410, %s411
      %p423 = scmp.eq.s32.totalorder %s35, 3
      %p424 = por %p422, %p423
      %p426 = scmp.ne.s32.totalorder %s411, %s425
      %p427 = scmp.eq.s32.totalorder %s35, 0
      %p428 = por %p426, %p427
      %s430 = sadd.s32 %s429, 1
      %p433 = scmp.eq.s32.totalorder %s29, 3
      %p434 = scmp.ne.s32.totalorder %s429, %s431
      %p435 = scmp.eq.s32.totalorder %s29, 0
      %p436 = por %p434, %p435
      %p437 = scmp.ne.s32.totalorder %s429, %s431
      %p438 = scmp.eq.s32.totalorder %s34, 3
      %p439 = por %p437, %p438
      %p440 = scmp.ne.s32.totalorder %s431, %s432
      %p441 = scmp.eq.s32.totalorder %s34, 0
      %p442 = por %p440, %p441
      %p443 = scmp.ne.s32.totalorder %s431, %s432
      %p444 = scmp.eq.s32.totalorder %s35, 3
      %p445 = por %p443, %p444
      %p447 = scmp.ne.s32.totalorder %s432, %s446
      %p448 = scmp.eq.s32.totalorder %s35, 0
      %p449 = por %p447, %p448
      %s450 = ssub.s32 %s36, %s48
      %p451 = scmp.eq.s32.totalorder %s450, 0
      %s453 = sadd.s32 %s452, 1
      %s454 = scalar_select %p451, %s452, %s453
      %p457 = pneg %p451
      %p458 = scmp.eq.s32.totalorder %s29, 3
      %p459 = por %p457, %p458
      %p460 = scmp.ne.s32.totalorder %s452, %s455
      %p461 = scmp.eq.s32.totalorder %s29, 0
      %p462 = por %p460, %p461
      %p463 = scmp.ne.s32.totalorder %s452, %s455
      %p464 = scmp.eq.s32.totalorder %s34, 3
      %p465 = por %p463, %p464
      %p466 = scmp.ne.s32.totalorder %s455, %s456
      %p467 = scmp.eq.s32.totalorder %s34, 0
      %p468 = por %p466, %p467
      %p469 = scmp.ne.s32.totalorder %s455, %s456
      %p470 = scmp.eq.s32.totalorder %s35, 3
      %p471 = por %p469, %p470
      %p473 = scmp.ne.s32.totalorder %s456, %s472
      %p474 = scmp.eq.s32.totalorder %s35, 0
      %p475 = por %p473, %p474
      %p476 = scmp.le.s32.totalorder 1, %s29
      %p477 = scmp.lt.s32.totalorder %s29, 5
      %p478 = pnand %p476, %p477
      %p479 = pneg %p478
      // Predicated region
      $region9: #{tpu_custom_call.1} parent=5 // pred_check
        _
      $region10: #{tpu_custom_call.1} parent=5 // pred_check_branch
        %481 = sbr.rel (%p478) target = $region12
      $region11: #{tpu_custom_call.1} parent=5 // pred_region
        %s482 = ssub.s32 %s29, 1
        // Predicated region
        $region13: #{tpu_custom_call.1} parent=11 // pred_check
          %p483 = pneg %p88
        $region14: #{tpu_custom_call.1} parent=11 // pred_check_branch
          %485 = sbr.rel (%p483) target = $region16
        $region15: #{tpu_custom_call.1} parent=11 // pred_region
          %s487 = ssub.s32 1280, 1280
          %488 = vsyncadd [#allocation8], %s487
          %s489 = sshll.u32 [#allocation7], 4
          %s490 = int_to_ptr.vmem [resolvable:$true] %s489
          %495 = dma.hbm_to_vmem [thread:$0]  %s1, 1280, %s490, [#allocation8], 128, 128, 8
        $region16: #{tpu_custom_call.1} parent=11 // pred_fallthru
          _
        // Predicated region
        $region17: #{tpu_custom_call.1} parent=11 // pred_check
          %p496 = pneg %p421
        $region18: #{tpu_custom_call.1} parent=11 // pred_check_branch
          %498 = sbr.rel (%p496) target = $region20
        $region19: #{tpu_custom_call.1} parent=11 // pred_region
          _
        $region20: #{tpu_custom_call.1} parent=11 // pred_fallthru
          _
        // Predicated region
        $region21: #{tpu_custom_call.1} parent=11 // pred_check
          %p499 = pneg %p442
        $region22: #{tpu_custom_call.1} parent=11 // pred_check_branch
          %501 = sbr.rel (%p499) target = $region24
        $region23: #{tpu_custom_call.1} parent=11 // pred_region
          _
        $region24: #{tpu_custom_call.1} parent=11 // pred_fallthru
          _
      $region12: #{tpu_custom_call.1} parent=5 // pred_fallthru
        _
      %p502 = scmp.lt.s32.totalorder %s29, 4
      // Predicated region
      $region25: #{tpu_custom_call.1} parent=5 // pred_check
        %p503 = pneg %p502
      $region26: #{tpu_custom_call.1} parent=5 // pred_check_branch
        %505 = sbr.rel (%p503) target = $region28
      $region27: #{tpu_custom_call.1} parent=5 // pred_region
        // Predicated region
        $region29: #{tpu_custom_call.1} parent=27 // pred_check
          %p506 = pneg %p61
        $region30: #{tpu_custom_call.1} parent=27 // pred_check_branch
          %508 = sbr.rel (%p506) target = $region32
        $region31: #{tpu_custom_call.1} parent=27 // pred_region
          %s509 = sand.u32 %s29, 1
          %s510 = scalar_lea.sflag [#allocation5], %s509
          %s511 = sand.u32 %s51, 1
          %s512 = smul.addr %s511, 80
          %s513 = scalar_lea.vmem [#allocation4], %s512
          %s515 = ssub.s32 1280, 1280
          %516 = vsyncadd %s510, %s515
          %s517 = smul.addr %s36, 10
          %s518 = smul.addr %s517, 128
          %s519 = scalar_lea.hbm %s0, %s518
          %s520 = sshll.u32 %s513, 4
          %s521 = int_to_ptr.vmem [resolvable:$true] %s520
          %526 = dma.hbm_to_vmem [thread:$0]  %s519, 1280, %s521, %s510, 128, 128, 8
        $region32: #{tpu_custom_call.1} parent=27 // pred_fallthru
          _
        // Predicated region
        $region33: #{tpu_custom_call.1} parent=27 // pred_check
          %p527 = pneg %p108
        $region34: #{tpu_custom_call.1} parent=27 // pred_check_branch
          %529 = sbr.rel (%p527) target = $region36
        $region35: #{tpu_custom_call.1} parent=27 // pred_region
          %s530 = sand.u32 %s29, 1
          %s531 = scalar_lea.sflag [#allocation5], %s530
          %s532 = sand.u32 %s98, 1
          %s533 = scalar_lea.vmem [#allocation9], %s532
          %s535 = ssub.s32 16, 16
          %536 = vsyncadd %s531, %s535
          %s537 = smul.addr %s37, 16
          %s538 = scalar_lea.hbm %s2, %s537
          %s540 = sshll.u32 %s533, 4
          %s541 = int_to_ptr.vmem [resolvable:$true] %s540
          %543 = dma.hbm_to_vmem [thread:$0]  %s538, 16, %s541, %s531
        $region36: #{tpu_custom_call.1} parent=27 // pred_fallthru
          _
        // Predicated region
        $region37: #{tpu_custom_call.1} parent=27 // pred_check
          %p544 = pneg %p134
        $region38: #{tpu_custom_call.1} parent=27 // pred_check_branch
          %546 = sbr.rel (%p544) target = $region40
        $region39: #{tpu_custom_call.1} parent=27 // pred_region
          %s547 = sand.u32 %s29, 1
          %s548 = scalar_lea.sflag [#allocation5], %s547
          %s549 = sand.u32 %s124, 1
          %s550 = scalar_lea.vmem [#allocation10], %s549
          %s552 = ssub.s32 16, 16
          %553 = vsyncadd %s548, %s552
          %s554 = smul.addr %s37, 16
          %s555 = scalar_lea.hbm %s3, %s554
          %s557 = sshll.u32 %s550, 4
          %s558 = int_to_ptr.vmem [resolvable:$true] %s557
          %560 = dma.hbm_to_vmem [thread:$0]  %s555, 16, %s558, %s548
        $region40: #{tpu_custom_call.1} parent=27 // pred_fallthru
          _
        // Predicated region
        $region41: #{tpu_custom_call.1} parent=27 // pred_check
          %p561 = pneg %p160
        $region42: #{tpu_custom_call.1} parent=27 // pred_check_branch
          %563 = sbr.rel (%p561) target = $region44
        $region43: #{tpu_custom_call.1} parent=27 // pred_region
          %s564 = sand.u32 %s29, 1
          %s565 = scalar_lea.sflag [#allocation5], %s564
          %s566 = sand.u32 %s150, 1
          %s567 = smul.addr %s566, 192
          %s568 = scalar_lea.vmem [#allocation11], %s567
          %s570 = ssub.s32 3072, 3072
          %571 = vsyncadd %s565, %s570
          %s572 = smul.addr %s37, 48
          %s573 = smul.addr %s572, 64
          %s574 = scalar_lea.hbm %s4, %s573
          %s575 = sshll.u32 %s568, 4
          %s576 = int_to_ptr.vmem [resolvable:$true] %s575
          %581 = dma.hbm_to_vmem [thread:$0]  %s574, 3072, %s576, %s565, 192, 192, 12
        $region44: #{tpu_custom_call.1} parent=27 // pred_fallthru
          _
        // Predicated region
        $region45: #{tpu_custom_call.1} parent=27 // pred_check
          %p582 = pneg %p186
        $region46: #{tpu_custom_call.1} parent=27 // pred_check_branch
          %584 = sbr.rel (%p582) target = $region48
        $region47: #{tpu_custom_call.1} parent=27 // pred_region
          %p585 = scmp.lt.s32.totalorder %s37, 1
          %s586 = scalar_select %p585, %s37, 1
          %s587 = smul.addr %s586, 3
          %s588 = scalar_lea.vmem %s5, %s587
        $region48: #{tpu_custom_call.1} parent=27 // pred_fallthru
          _
        // Predicated region
        $region49: #{tpu_custom_call.1} parent=27 // pred_check
          %p589 = pneg %p212
        $region50: #{tpu_custom_call.1} parent=27 // pred_check_branch
          %591 = sbr.rel (%p589) target = $region52
        $region51: #{tpu_custom_call.1} parent=27 // pred_region
          %s592 = sand.u32 %s29, 1
          %s593 = scalar_lea.sflag [#allocation5], %s592
          %s594 = sand.u32 %s202, 1
          %s595 = smul.addr %s594, 64
          %s596 = scalar_lea.vmem [#allocation12], %s595
          %s598 = ssub.s32 1024, 1024
          %599 = vsyncadd %s593, %s598
          %s600 = smul.addr %s37, 16
          %s601 = smul.addr %s600, 64
          %s602 = scalar_lea.hbm %s6, %s601
          %s603 = sshll.u32 %s596, 4
          %s604 = int_to_ptr.vmem [resolvable:$true] %s603
          %609 = dma.hbm_to_vmem [thread:$0]  %s602, 1024, %s604, %s593, 64, 64, 4
        $region52: #{tpu_custom_call.1} parent=27 // pred_fallthru
          _
        // Predicated region
        $region53: #{tpu_custom_call.1} parent=27 // pred_check
          %p610 = pneg %p238
        $region54: #{tpu_custom_call.1} parent=27 // pred_check_branch
          %612 = sbr.rel (%p610) target = $region56
        $region55: #{tpu_custom_call.1} parent=27 // pred_region
          %p613 = scmp.lt.s32.totalorder %s37, 1
          %s614 = scalar_select %p613, %s37, 1
          %s615 = scalar_lea.vmem %s7, %s614
        $region56: #{tpu_custom_call.1} parent=27 // pred_fallthru
          _
        // Predicated region
        $region57: #{tpu_custom_call.1} parent=27 // pred_check
          %p616 = pneg %p264
        $region58: #{tpu_custom_call.1} parent=27 // pred_check_branch
          %618 = sbr.rel (%p616) target = $region60
        $region59: #{tpu_custom_call.1} parent=27 // pred_region
          %p619 = scmp.lt.s32.totalorder %s37, 1
          %s620 = scalar_select %p619, %s37, 1
          %s621 = scalar_lea.vmem %s8, %s620
        $region60: #{tpu_custom_call.1} parent=27 // pred_fallthru
          _
        // Predicated region
        $region61: #{tpu_custom_call.1} parent=27 // pred_check
          %p622 = pneg %p290
        $region62: #{tpu_custom_call.1} parent=27 // pred_check_branch
          %624 = sbr.rel (%p622) target = $region64
        $region63: #{tpu_custom_call.1} parent=27 // pred_region
          %p625 = scmp.lt.s32.totalorder %s37, 1
          %s626 = scalar_select %p625, %s37, 1
          %s627 = scalar_lea.vmem %s9, %s626
        $region64: #{tpu_custom_call.1} parent=27 // pred_fallthru
          _
        // Predicated region
        $region65: #{tpu_custom_call.1} parent=27 // pred_check
          %p628 = pneg %p316
        $region66: #{tpu_custom_call.1} parent=27 // pred_check_branch
          %630 = sbr.rel (%p628) target = $region68
        $region67: #{tpu_custom_call.1} parent=27 // pred_region
          %s631 = sand.u32 %s29, 1
          %s632 = scalar_lea.sflag [#allocation5], %s631
          %s633 = sand.u32 %s306, 1
          %s634 = smul.addr %s633, 256
          %s635 = scalar_lea.vmem [#allocation13], %s634
          %s637 = ssub.s32 4096, 4096
          %638 = vsyncadd %s632, %s637
          %s639 = smul.addr %s37, 64
          %s640 = smul.addr %s639, 64
          %s641 = scalar_lea.hbm %s10, %s640
          %s642 = sshll.u32 %s635, 4
          %s643 = int_to_ptr.vmem [resolvable:$true] %s642
          %648 = dma.hbm_to_vmem [thread:$0]  %s641, 4096, %s643, %s632, 256, 256, 16
        $region68: #{tpu_custom_call.1} parent=27 // pred_fallthru
          _
        // Predicated region
        $region69: #{tpu_custom_call.1} parent=27 // pred_check
          %p649 = pneg %p342
        $region70: #{tpu_custom_call.1} parent=27 // pred_check_branch
          %651 = sbr.rel (%p649) target = $region72
        $region71: #{tpu_custom_call.1} parent=27 // pred_region
          %p652 = scmp.lt.s32.totalorder %s37, 1
          %s653 = scalar_select %p652, %s37, 1
          %s654 = smul.addr %s653, 4
          %s655 = scalar_lea.vmem %s11, %s654
        $region72: #{tpu_custom_call.1} parent=27 // pred_fallthru
          _
        // Predicated region
        $region73: #{tpu_custom_call.1} parent=27 // pred_check
          %p656 = pneg %p368
        $region74: #{tpu_custom_call.1} parent=27 // pred_check_branch
          %658 = sbr.rel (%p656) target = $region76
        $region75: #{tpu_custom_call.1} parent=27 // pred_region
          %s659 = sand.u32 %s29, 1
          %s660 = scalar_lea.sflag [#allocation5], %s659
          %s661 = sand.u32 %s358, 1
          %s662 = smul.addr %s661, 256
          %s663 = scalar_lea.vmem [#allocation14], %s662
          %s665 = ssub.s32 4096, 4096
          %666 = vsyncadd %s660, %s665
          %s667 = smul.addr %s37, 64
          %s668 = smul.addr %s667, 64
          %s669 = scalar_lea.hbm %s12, %s668
          %s670 = sshll.u32 %s663, 4
          %s671 = int_to_ptr.vmem [resolvable:$true] %s670
          %676 = dma.hbm_to_vmem [thread:$0]  %s669, 4096, %s671, %s660, 64, 64, 4
        $region76: #{tpu_custom_call.1} parent=27 // pred_fallthru
          _
        // Predicated region
        $region77: #{tpu_custom_call.1} parent=27 // pred_check
          %p677 = pneg %p394
        $region78: #{tpu_custom_call.1} parent=27 // pred_check_branch
          %679 = sbr.rel (%p677) target = $region80
        $region79: #{tpu_custom_call.1} parent=27 // pred_region
          %p680 = scmp.lt.s32.totalorder %s37, 1
          %s681 = scalar_select %p680, %s37, 1
          %s682 = scalar_lea.vmem %s13, %s681
        $region80: #{tpu_custom_call.1} parent=27 // pred_fallthru
          _
      $region28: #{tpu_custom_call.1} parent=5 // pred_fallthru
        _
      %p683 = scmp.le.s32.totalorder 1, %s29
      %p684 = scmp.lt.s32.totalorder %s29, 5
      %p685 = pnand %p683, %p684
      %p686 = pneg %p685
      // Predicated region
      $region81: #{tpu_custom_call.1} parent=5 // pred_check
        _
      $region82: #{tpu_custom_call.1} parent=5 // pred_check_branch
        %688 = sbr.rel (%p685) target = $region84
      $region83: #{tpu_custom_call.1} parent=5 // pred_region
        %s689 = ssub.s32 %s29, 1
        %s690 = sand.u32 %s34, 1
        %s691 = scalar_lea.sflag [#allocation5], %s690
        %s692 = sand.u32 %s54, 1
        %s693 = smul.addr %s692, 80
        %s694 = scalar_lea.vmem [#allocation4], %s693
        // Predicated region
        $region85: #{tpu_custom_call.1} parent=83 // pred_check
          %p695 = pneg %p67
        $region86: #{tpu_custom_call.1} parent=83 // pred_check_branch
          %697 = sbr.rel (%p695) target = $region88
        $region87: #{tpu_custom_call.1} parent=83 // pred_region
          %698 = dma.done %s691, 1280
        $region88: #{tpu_custom_call.1} parent=83 // pred_fallthru
          _
        // Predicated region
        $region89: #{tpu_custom_call.1} parent=83 // pred_check
          %p699 = pneg %p88
        $region90: #{tpu_custom_call.1} parent=83 // pred_check_branch
          %701 = sbr.rel (%p699) target = $region92
        $region91: #{tpu_custom_call.1} parent=83 // pred_region
          %702 = dma.done [#allocation8], 1280
        $region92: #{tpu_custom_call.1} parent=83 // pred_fallthru
          _
        %s703 = sand.u32 %s34, 1
        %s704 = scalar_lea.sflag [#allocation5], %s703
        %s705 = sand.u32 %s101, 1
        %s706 = scalar_lea.vmem [#allocation9], %s705
        // Predicated region
        $region93: #{tpu_custom_call.1} parent=83 // pred_check
          %p707 = pneg %p114
        $region94: #{tpu_custom_call.1} parent=83 // pred_check_branch
          %709 = sbr.rel (%p707) target = $region96
        $region95: #{tpu_custom_call.1} parent=83 // pred_region
          %710 = dma.done %s704, 16
        $region96: #{tpu_custom_call.1} parent=83 // pred_fallthru
          _
        %s711 = sand.u32 %s34, 1
        %s712 = scalar_lea.sflag [#allocation5], %s711
        %s713 = sand.u32 %s127, 1
        %s714 = scalar_lea.vmem [#allocation10], %s713
        // Predicated region
        $region97: #{tpu_custom_call.1} parent=83 // pred_check
          %p715 = pneg %p140
        $region98: #{tpu_custom_call.1} parent=83 // pred_check_branch
          %717 = sbr.rel (%p715) target = $region100
        $region99: #{tpu_custom_call.1} parent=83 // pred_region
          %718 = dma.done %s712, 16
        $region100: #{tpu_custom_call.1} parent=83 // pred_fallthru
          _
        %s719 = sand.u32 %s34, 1
        %s720 = scalar_lea.sflag [#allocation5], %s719
        %s721 = sand.u32 %s153, 1
        %s722 = smul.addr %s721, 192
        %s723 = scalar_lea.vmem [#allocation11], %s722
        // Predicated region
        $region101: #{tpu_custom_call.1} parent=83 // pred_check
          %p724 = pneg %p166
        $region102: #{tpu_custom_call.1} parent=83 // pred_check_branch
          %726 = sbr.rel (%p724) target = $region104
        $region103: #{tpu_custom_call.1} parent=83 // pred_region
          %727 = dma.done %s720, 3072
        $region104: #{tpu_custom_call.1} parent=83 // pred_fallthru
          _
        %s728 = sand.u32 %s34, 1
        %s729 = scalar_lea.sflag [#allocation5], %s728
        %s730 = sand.u32 %s205, 1
        %s731 = smul.addr %s730, 64
        %s732 = scalar_lea.vmem [#allocation12], %s731
        // Predicated region
        $region105: #{tpu_custom_call.1} parent=83 // pred_check
          %p733 = pneg %p218
        $region106: #{tpu_custom_call.1} parent=83 // pred_check_branch
          %735 = sbr.rel (%p733) target = $region108
        $region107: #{tpu_custom_call.1} parent=83 // pred_region
          %736 = dma.done %s729, 1024
        $region108: #{tpu_custom_call.1} parent=83 // pred_fallthru
          _
        %s737 = sand.u32 %s34, 1
        %s738 = scalar_lea.sflag [#allocation5], %s737
        %s739 = sand.u32 %s309, 1
        %s740 = smul.addr %s739, 256
        %s741 = scalar_lea.vmem [#allocation13], %s740
        // Predicated region
        $region109: #{tpu_custom_call.1} parent=83 // pred_check
          %p742 = pneg %p322
        $region110: #{tpu_custom_call.1} parent=83 // pred_check_branch
          %744 = sbr.rel (%p742) target = $region112
        $region111: #{tpu_custom_call.1} parent=83 // pred_region
          %745 = dma.done %s738, 4096
        $region112: #{tpu_custom_call.1} parent=83 // pred_fallthru
          _
        %s746 = sand.u32 %s34, 1
        %s747 = scalar_lea.sflag [#allocation5], %s746
        %s748 = sand.u32 %s361, 1
        %s749 = smul.addr %s748, 256
        %s750 = scalar_lea.vmem [#allocation14], %s749
        // Predicated region
        $region113: #{tpu_custom_call.1} parent=83 // pred_check
          %p751 = pneg %p374
        $region114: #{tpu_custom_call.1} parent=83 // pred_check_branch
          %753 = sbr.rel (%p751) target = $region116
        $region115: #{tpu_custom_call.1} parent=83 // pred_region
          %754 = dma.done %s747, 4096
        $region116: #{tpu_custom_call.1} parent=83 // pred_fallthru
          _
        %s755 = sand.u32 %s34, 1
        %s756 = scalar_lea.sflag [#allocation5], %s755
        %s757 = sand.u32 %s54, 1
        %s758 = smul.addr %s757, 80
        %s759 = scalar_lea.vmem [#allocation4], %s758
        %p760 = pneg %p67
        %p761 = pneg %p64
        %p762 = pneg %p88
        %p763 = pneg %p85
        %s764 = sand.u32 %s34, 1
        %s765 = scalar_lea.sflag [#allocation5], %s764
        %s766 = sand.u32 %s101, 1
        %s767 = scalar_lea.vmem [#allocation9], %s766
        %p768 = pneg %p114
        %p769 = pneg %p111
        %s770 = sand.u32 %s34, 1
        %s771 = scalar_lea.sflag [#allocation5], %s770
        %s772 = sand.u32 %s127, 1
        %s773 = scalar_lea.vmem [#allocation10], %s772
        %p774 = pneg %p140
        %p775 = pneg %p137
        %s776 = sand.u32 %s34, 1
        %s777 = scalar_lea.sflag [#allocation5], %s776
        %s778 = sand.u32 %s153, 1
        %s779 = smul.addr %s778, 192
        %s780 = scalar_lea.vmem [#allocation11], %s779
        %p781 = pneg %p166
        %p782 = pneg %p163
        %p783 = scmp.lt.s32.totalorder %s39, 1
        %s784 = scalar_select %p783, %s39, 1
        %s785 = smul.addr %s784, 3
        %s786 = scalar_lea.vmem %s5, %s785
        %p787 = pneg %p192
        %p788 = pneg %p189
        %s789 = sand.u32 %s34, 1
        %s790 = scalar_lea.sflag [#allocation5], %s789
        %s791 = sand.u32 %s205, 1
        %s792 = smul.addr %s791, 64
        %s793 = scalar_lea.vmem [#allocation12], %s792
        %p794 = pneg %p218
        %p795 = pneg %p215
        %p796 = scmp.lt.s32.totalorder %s39, 1
        %s797 = scalar_select %p796, %s39, 1
        %s798 = scalar_lea.vmem %s7, %s797
        %p799 = pneg %p244
        %p800 = pneg %p241
        %p801 = scmp.lt.s32.totalorder %s39, 1
        %s802 = scalar_select %p801, %s39, 1
        %s803 = scalar_lea.vmem %s8, %s802
        %p804 = pneg %p270
        %p805 = pneg %p267
        %p806 = scmp.lt.s32.totalorder %s39, 1
        %s807 = scalar_select %p806, %s39, 1
        %s808 = scalar_lea.vmem %s9, %s807
        %p809 = pneg %p296
        %p810 = pneg %p293
        %s811 = sand.u32 %s34, 1
        %s812 = scalar_lea.sflag [#allocation5], %s811
        %s813 = sand.u32 %s309, 1
        %s814 = smul.addr %s813, 256
        %s815 = scalar_lea.vmem [#allocation13], %s814
        %p816 = pneg %p322
        %p817 = pneg %p319
        %p818 = scmp.lt.s32.totalorder %s39, 1
        %s819 = scalar_select %p818, %s39, 1
        %s820 = smul.addr %s819, 4
        %s821 = scalar_lea.vmem %s11, %s820
        %p822 = pneg %p348
        %p823 = pneg %p345
        %s824 = sand.u32 %s34, 1
        %s825 = scalar_lea.sflag [#allocation5], %s824
        %s826 = sand.u32 %s361, 1
        %s827 = smul.addr %s826, 256
        %s828 = scalar_lea.vmem [#allocation14], %s827
        %p829 = pneg %p374
        %p830 = pneg %p371
        %p831 = scmp.lt.s32.totalorder %s39, 1
        %s832 = scalar_select %p831, %s39, 1
        %s833 = scalar_lea.vmem %s13, %s832
        %p834 = pneg %p400
        %p835 = pneg %p397
        %p836 = pneg %p421
        %p837 = pneg %p418
        %p838 = pneg %p442
        %p839 = pneg %p439
        %p840 = pneg %p468
        %p841 = pneg %p465
        %s842 = sand.u32 %s455, 1
        %s843 = scalar_lea.sflag [#allocation6], %s842
        %s844 = sand.u32 %s455, 1
        %s845 = smul.addr %s844, 80
        %s846 = scalar_lea.vmem [#allocation15], %s845
        %p847 = scmp.lt.s32.totalorder %s39, 1
        %s848 = scalar_select %p847, %s39, 1
        %s849 = smul.addr %s848, 3
        %s850 = scalar_lea.vmem %s5, %s849
        %p851 = scmp.lt.s32.totalorder %s39, 1
        %s852 = scalar_select %p851, %s39, 1
        %s853 = scalar_lea.vmem %s7, %s852
        %p854 = scmp.lt.s32.totalorder %s39, 1
        %s855 = scalar_select %p854, %s39, 1
        %s856 = scalar_lea.vmem %s8, %s855
        %p857 = scmp.lt.s32.totalorder %s39, 1
        %s858 = scalar_select %p857, %s39, 1
        %s859 = scalar_lea.vmem %s9, %s858
        %p860 = scmp.lt.s32.totalorder %s39, 1
        %s861 = scalar_select %p860, %s39, 1
        %s862 = smul.addr %s861, 4
        %s863 = scalar_lea.vmem %s11, %s862
        %p864 = scmp.lt.s32.totalorder %s39, 1
        %s865 = scalar_select %p864, %s39, 1
        %s866 = scalar_lea.vmem %s13, %s865
        %p868 = scmp.eq.s32.totalorder %s39, 0
        // Predicated region
        $region117: #{tpu_custom_call.1} parent=83 // pred_check
          %p869 = pneg %p868
        $region118: #{tpu_custom_call.1} parent=83 // pred_check_branch
          %871 = sbr.rel (%p869) target = $region120
        $region119: #{tpu_custom_call.1} parent=83 // pred_region
          %v872 = vld [vmem:[%s694] sm:$0xff]
          %v873 = vld [vmem:[%s694 + $0x8] sm:$0xff]
          %v874 = vld [vmem:[%s694 + $0x10] sm:$0xff]
          %v875 = vld [vmem:[%s694 + $0x18] sm:$0xff]
          %v876 = vld [vmem:[%s694 + $0x20] sm:$0xff]
          %v877 = vld [vmem:[%s694 + $0x28] sm:$0xff]
          %v878 = vld [vmem:[%s694 + $0x30] sm:$0xff]
          %v879 = vld [vmem:[%s694 + $0x38] sm:$0xff]
          %v880 = vld [vmem:[%s694 + $0x40] sm:$0xff]
          %v881 = vld [vmem:[%s694 + $0x48] sm:$0xff]
          %882 = vst [vmem:[#allocation2] sm:$0xff] %v872
          %883 = vst [vmem:[#allocation2 + $0x8] sm:$0xff] %v873
          %884 = vst [vmem:[#allocation2 + $0x10] sm:$0xff] %v874
          %885 = vst [vmem:[#allocation2 + $0x18] sm:$0xff] %v875
          %886 = vst [vmem:[#allocation2 + $0x20] sm:$0xff] %v876
          %887 = vst [vmem:[#allocation2 + $0x28] sm:$0xff] %v877
          %888 = vst [vmem:[#allocation2 + $0x30] sm:$0xff] %v878
          %889 = vst [vmem:[#allocation2 + $0x38] sm:$0xff] %v879
          %890 = vst [vmem:[#allocation2 + $0x40] sm:$0xff] %v880
          %891 = vst [vmem:[#allocation2 + $0x48] sm:$0xff] %v881
        $region120: #{tpu_custom_call.1} parent=83 // pred_fallthru
          _
        %v892 = vld [vmem:[#allocation2] sm:$0xff]
        %v893 = vld [vmem:[#allocation2 + $0x8] sm:$0xff]
        %v894 = vld [vmem:[#allocation2 + $0x10] sm:$0xff]
        %v895 = vld [vmem:[#allocation2 + $0x18] sm:$0xff]
        %v896 = vld [vmem:[#allocation2 + $0x20] sm:$0xff]
        %v897 = vld [vmem:[#allocation2 + $0x28] sm:$0xff]
        %v898 = vld [vmem:[#allocation2 + $0x30] sm:$0xff]
        %v899 = vld [vmem:[#allocation2 + $0x38] sm:$0xff]
        %v900 = vld [vmem:[#allocation2 + $0x40] sm:$0xff]
        %v901 = vld [vmem:[#allocation2 + $0x48] sm:$0xff]
        %v902 = vld [vmem:[%s706] sm:$0x1]
        %v903 = vld [vmem:[%s714] sm:$0x1]
        %904 = vadd.xlane.f32.xlu0 %v892
        %v905 = vpop.xlane.xlu0 %904
        %906 = vadd.xlane.f32.xlu0 %v893
        %v907 = vpop.xlane.xlu0 %906
        %908 = vadd.xlane.f32.xlu0 %v894
        %v909 = vpop.xlane.xlu0 %908
        %910 = vadd.xlane.f32.xlu0 %v895
        %v911 = vpop.xlane.xlu0 %910
        %912 = vadd.xlane.f32.xlu0 %v896
        %v913 = vpop.xlane.xlu0 %912
        %914 = vadd.xlane.f32.xlu0 %v897
        %v915 = vpop.xlane.xlu0 %914
        %916 = vadd.xlane.f32.xlu0 %v898
        %v917 = vpop.xlane.xlu0 %916
        %918 = vadd.xlane.f32.xlu0 %v899
        %v919 = vpop.xlane.xlu0 %918
        %920 = vadd.xlane.f32.xlu0 %v900
        %v921 = vpop.xlane.xlu0 %920
        %922 = vadd.xlane.f32.xlu0 %v901
        %v923 = vpop.xlane.xlu0 %922
        %v924 = vrcp.pop 128.0
        %v925 = vmul.f32 %v905, %v924
        %v926 = vmul.f32 %v907, %v924
        %v927 = vmul.f32 %v909, %v924
        %v928 = vmul.f32 %v911, %v924
        %v929 = vmul.f32 %v913, %v924
        %v930 = vmul.f32 %v915, %v924
        %v931 = vmul.f32 %v917, %v924
        %v932 = vmul.f32 %v919, %v924
        %v933 = vmul.f32 %v921, %v924
        %v934 = vmul.f32 %v923, %v924
        %v935 = vsub.f32 %v892, %v925
        %v936 = vsub.f32 %v893, %v926
        %v937 = vsub.f32 %v894, %v927
        %v938 = vsub.f32 %v895, %v928
        %v939 = vsub.f32 %v896, %v929
        %v940 = vsub.f32 %v897, %v930
        %v941 = vsub.f32 %v898, %v931
        %v942 = vsub.f32 %v899, %v932
        %v943 = vsub.f32 %v900, %v933
        %v944 = vsub.f32 %v901, %v934
        %v945 = vmul.f32 %v935, %v935
        %v946 = vmul.f32 %v936, %v936
        %v947 = vmul.f32 %v937, %v937
        %v948 = vmul.f32 %v938, %v938
        %v949 = vmul.f32 %v939, %v939
        %v950 = vmul.f32 %v940, %v940
        %v951 = vmul.f32 %v941, %v941
        %v952 = vmul.f32 %v942, %v942
        %v953 = vmul.f32 %v943, %v943
        %v954 = vmul.f32 %v944, %v944
        %955 = vadd.xlane.f32.xlu0 %v945
        %v956 = vpop.xlane.xlu0 %955
        %957 = vadd.xlane.f32.xlu0 %v946
        %v958 = vpop.xlane.xlu0 %957
        %959 = vadd.xlane.f32.xlu0 %v947
        %v960 = vpop.xlane.xlu0 %959
        %961 = vadd.xlane.f32.xlu0 %v948
        %v962 = vpop.xlane.xlu0 %961
        %963 = vadd.xlane.f32.xlu0 %v949
        %v964 = vpop.xlane.xlu0 %963
        %965 = vadd.xlane.f32.xlu0 %v950
        %v966 = vpop.xlane.xlu0 %965
        %967 = vadd.xlane.f32.xlu0 %v951
        %v968 = vpop.xlane.xlu0 %967
        %969 = vadd.xlane.f32.xlu0 %v952
        %v970 = vpop.xlane.xlu0 %969
        %971 = vadd.xlane.f32.xlu0 %v953
        %v972 = vpop.xlane.xlu0 %971
        %973 = vadd.xlane.f32.xlu0 %v954
        %v974 = vpop.xlane.xlu0 %973
        %v975 = vmul.f32 %v956, %v924
        %v976 = vmul.f32 %v958, %v924
        %v977 = vmul.f32 %v960, %v924
        %v978 = vmul.f32 %v962, %v924
        %v979 = vmul.f32 %v964, %v924
        %v980 = vmul.f32 %v966, %v924
        %v981 = vmul.f32 %v968, %v924
        %v982 = vmul.f32 %v970, %v924
        %v983 = vmul.f32 %v972, %v924
        %v984 = vmul.f32 %v974, %v924
        %v985 = vadd.f32 %v975, 1e-05
        %v986 = vadd.f32 %v976, 1e-05
        %v987 = vadd.f32 %v977, 1e-05
        %v988 = vadd.f32 %v978, 1e-05
        %v989 = vadd.f32 %v979, 1e-05
        %v990 = vadd.f32 %v980, 1e-05
        %v991 = vadd.f32 %v981, 1e-05
        %v992 = vadd.f32 %v982, 1e-05
        %v993 = vadd.f32 %v983, 1e-05
        %v994 = vadd.f32 %v984, 1e-05
        %v995 = vrsqrt.pop %v985
        %v996 = vrsqrt.pop %v986
        %v997 = vrsqrt.pop %v987
        %v998 = vrsqrt.pop %v988
        %v999 = vrsqrt.pop %v989
        %v1000 = vrsqrt.pop %v990
        %v1001 = vrsqrt.pop %v991
        %v1002 = vrsqrt.pop %v992
        %v1003 = vrsqrt.pop %v993
        %v1004 = vrsqrt.pop %v994
        %v1005 = vmul.f32 %v935, %v995
        %v1006 = vmul.f32 %v936, %v996
        %v1007 = vmul.f32 %v937, %v997
        %v1008 = vmul.f32 %v938, %v998
        %v1009 = vmul.f32 %v939, %v999
        %v1010 = vmul.f32 %v940, %v1000
        %v1011 = vmul.f32 %v941, %v1001
        %v1012 = vmul.f32 %v942, %v1002
        %v1013 = vmul.f32 %v943, %v1003
        %v1014 = vmul.f32 %v944, %v1004
        %v1016 = vlaneseq
        %v1017 = vshrl.u32 %v1016, 7
        %v1018 = vsub.s32 0, %v1017
        %v1019 = vrot.slane %v902, %v1018
        %v1021 = vmul.f32 %v1005, %v1019
        %v1022 = vmul.f32 %v1006, %v1019
        %v1023 = vmul.f32 %v1007, %v1019
        %v1024 = vmul.f32 %v1008, %v1019
        %v1025 = vmul.f32 %v1009, %v1019
        %v1026 = vmul.f32 %v1010, %v1019
        %v1027 = vmul.f32 %v1011, %v1019
        %v1028 = vmul.f32 %v1012, %v1019
        %v1029 = vmul.f32 %v1013, %v1019
        %v1030 = vmul.f32 %v1014, %v1019
        %v1032 = vlaneseq
        %v1033 = vshrl.u32 %v1032, 7
        %v1034 = vsub.s32 0, %v1033
        %v1035 = vrot.slane %v903, %v1034
        %v1037 = vadd.f32 %v1021, %v1035
        %v1038 = vadd.f32 %v1022, %v1035
        %v1039 = vadd.f32 %v1023, %v1035
        %v1040 = vadd.f32 %v1024, %v1035
        %v1041 = vadd.f32 %v1025, %v1035
        %v1042 = vadd.f32 %v1026, %v1035
        %v1043 = vadd.f32 %v1027, %v1035
        %v1044 = vadd.f32 %v1028, %v1035
        %v1045 = vadd.f32 %v1029, %v1035
        %v1046 = vadd.f32 %v1030, %v1035
        %v1047 = vpack.c.bf16 %v1038, %v1037
        %v1048 = vpack.c.bf16 %v1040, %v1039
        %v1049 = vpack.c.bf16 %v1042, %v1041
        %v1050 = vpack.c.bf16 %v1044, %v1043
        %v1051 = vpack.c.bf16 %v1046, %v1045
        %v1052 = vld [vmem:[%s723] sm:$0xff]
        %v1053 = vld [vmem:[%s723 + $0x8] sm:$0xf]
        %v1054 = vld [vmem:[%s723 + $0xc] sm:$0xff]
        %v1055 = vld [vmem:[%s723 + $0x14] sm:$0xf]
        %v1056 = vld [vmem:[%s723 + $0x18] sm:$0xff]
        %v1057 = vld [vmem:[%s723 + $0x20] sm:$0xf]
        %v1058 = vld [vmem:[%s723 + $0x24] sm:$0xff]
        %v1059 = vld [vmem:[%s723 + $0x2c] sm:$0xf]
        %v1060 = vld [vmem:[%s723 + $0x30] sm:$0xff]
        %v1061 = vld [vmem:[%s723 + $0x38] sm:$0xf]
        %v1062 = vld [vmem:[%s723 + $0x3c] sm:$0xff]
        %v1063 = vld [vmem:[%s723 + $0x44] sm:$0xf]
        %v1064 = vld [vmem:[%s723 + $0x48] sm:$0xff]
        %v1065 = vld [vmem:[%s723 + $0x50] sm:$0xf]
        %v1066 = vld [vmem:[%s723 + $0x54] sm:$0xff]
        %v1067 = vld [vmem:[%s723 + $0x5c] sm:$0xf]
        %v1068 = vld [vmem:[%s723 + $0x60] sm:$0xff]
        %v1069 = vld [vmem:[%s723 + $0x68] sm:$0xf]
        %v1070 = vld [vmem:[%s723 + $0x6c] sm:$0xff]
        %v1071 = vld [vmem:[%s723 + $0x74] sm:$0xf]
        %v1072 = vld [vmem:[%s723 + $0x78] sm:$0xff]
        %v1073 = vld [vmem:[%s723 + $0x80] sm:$0xf]
        %v1074 = vld [vmem:[%s723 + $0x84] sm:$0xff]
        %v1075 = vld [vmem:[%s723 + $0x8c] sm:$0xf]
        %v1076 = vld [vmem:[%s723 + $0x90] sm:$0xff]
        %v1077 = vld [vmem:[%s723 + $0x98] sm:$0xf]
        %v1078 = vld [vmem:[%s723 + $0x9c] sm:$0xff]
        %v1079 = vld [vmem:[%s723 + $0xa4] sm:$0xf]
        %v1080 = vld [vmem:[%s723 + $0xa8] sm:$0xff]
        %v1081 = vld [vmem:[%s723 + $0xb0] sm:$0xf]
        %v1082 = vld [vmem:[%s723 + $0xb4] sm:$0xff]
        %v1083 = vld [vmem:[%s723 + $0xbc] sm:$0xf]
        %v1084 = vld [vmem:[%s850] sm:$0x7]
        %v1086 = vlaneseq
        %v1087 = vshrl.u32 %v1086, 7
        %v1088 = vsub.s32 0, %v1087
        %v1089 = vrot.slane %v1084, %v1088
        %v1090 = vlaneseq
        %v1091 = vshrl.u32 %v1090, 7
        %v1092 = vsub.s32 1, %v1091
        %v1093 = vrot.slane %v1084, %v1092
        %v1094 = vlaneseq
        %v1095 = vshrl.u32 %v1094, 7
        %v1096 = vsub.s32 2, %v1095
        %v1097 = vrot.slane %v1084, %v1096
        %v1133 = vunpack.c.l.b16 %v1052
        %v1134 = vunpack.c.h.b16 %v1052
        %v1135 = vunpack.c.l.b16 %v1053
        %v1136 = vunpack.c.l.b16 %v1054
        %v1137 = vunpack.c.h.b16 %v1054
        %v1138 = vunpack.c.l.b16 %v1055
        %v1139 = vunpack.c.l.b16 %v1056
        %v1140 = vunpack.c.h.b16 %v1056
        %v1141 = vunpack.c.l.b16 %v1057
        %v1142 = vunpack.c.l.b16 %v1058
        %v1143 = vunpack.c.h.b16 %v1058
        %v1144 = vunpack.c.l.b16 %v1059
        %v1145 = vunpack.c.l.b16 %v1060
        %v1146 = vunpack.c.h.b16 %v1060
        %v1147 = vunpack.c.l.b16 %v1061
        %v1148 = vunpack.c.l.b16 %v1062
        %v1149 = vunpack.c.h.b16 %v1062
        %v1150 = vunpack.c.l.b16 %v1063
        %v1151 = vunpack.c.l.b16 %v1064
        %v1152 = vunpack.c.h.b16 %v1064
        %v1153 = vunpack.c.l.b16 %v1065
        %v1154 = vunpack.c.l.b16 %v1066
        %v1155 = vunpack.c.h.b16 %v1066
        %v1156 = vunpack.c.l.b16 %v1067
        %v1157 = vunpack.c.l.b16 %v1068
        %v1158 = vunpack.c.h.b16 %v1068
        %v1159 = vunpack.c.l.b16 %v1069
        %v1160 = vunpack.c.l.b16 %v1070
        %v1161 = vunpack.c.h.b16 %v1070
        %v1162 = vunpack.c.l.b16 %v1071
        %v1163 = vunpack.c.l.b16 %v1072
        %v1164 = vunpack.c.h.b16 %v1072
        %v1165 = vunpack.c.l.b16 %v1073
        %v1166 = vunpack.c.l.b16 %v1074
        %v1167 = vunpack.c.h.b16 %v1074
        %v1168 = vunpack.c.l.b16 %v1075
        %v1169 = vunpack.c.l.b16 %v1076
        %v1170 = vunpack.c.h.b16 %v1076
        %v1171 = vunpack.c.l.b16 %v1077
        %v1172 = vunpack.c.l.b16 %v1078
        %v1173 = vunpack.c.h.b16 %v1078
        %v1174 = vunpack.c.l.b16 %v1079
        %v1175 = vunpack.c.l.b16 %v1080
        %v1176 = vunpack.c.h.b16 %v1080
        %v1177 = vunpack.c.l.b16 %v1081
        %v1178 = vunpack.c.l.b16 %v1082
        %v1179 = vunpack.c.h.b16 %v1082
        %v1180 = vunpack.c.l.b16 %v1083
        %v1181 = vpack.c.b16 %v1136, %v1133
        %v1182 = vpack.c.b16 %v1137, %v1134
        %v1183 = vpack.c.b16 %v1138, %v1135
        %v1184 = vpack.c.b16 %v1142, %v1139
        %v1185 = vpack.c.b16 %v1143, %v1140
        %v1186 = vpack.c.b16 %v1144, %v1141
        %v1187 = vpack.c.b16 %v1148, %v1145
        %v1188 = vpack.c.b16 %v1149, %v1146
        %v1189 = vpack.c.b16 %v1150, %v1147
        %v1190 = vpack.c.b16 %v1154, %v1151
        %v1191 = vpack.c.b16 %v1155, %v1152
        %v1192 = vpack.c.b16 %v1156, %v1153
        %v1193 = vpack.c.b16 %v1160, %v1157
        %v1194 = vpack.c.b16 %v1161, %v1158
        %v1195 = vpack.c.b16 %v1162, %v1159
        %v1196 = vpack.c.b16 %v1166, %v1163
        %v1197 = vpack.c.b16 %v1167, %v1164
        %v1198 = vpack.c.b16 %v1168, %v1165
        %v1199 = vpack.c.b16 %v1172, %v1169
        %v1200 = vpack.c.b16 %v1173, %v1170
        %v1201 = vpack.c.b16 %v1174, %v1171
        %v1202 = vpack.c.b16 %v1178, %v1175
        %v1203 = vpack.c.b16 %v1179, %v1176
        %v1204 = vpack.c.b16 %v1180, %v1177
        %1229 = vmatprep.subr.bf16.mxu0 %v1182
        %1230 = vmatpush1.bf16.msra.mxu0 %v1181
        %1231 = vmatprep.subr.bf16.mxu0 %v1185
        %1232 = vmatpush1.bf16.msra.mxu0 %v1184
        %1233 = vmatprep.subr.bf16.mxu0 %v1188
        %1234 = vmatpush1.bf16.msra.mxu0 %v1187
        %1235 = vmatprep.subr.bf16.mxu0 %v1191
        %1236 = vmatpush1.bf16.msra.mxu0 %v1190
        %1237 = vmatprep.subr.bf16.mxu0 %v1194
        %1238 = vmatpush1.bf16.msra.mxu0 %v1193
        %1239 = vmatprep.subr.bf16.mxu0 %v1197
        %1240 = vmatpush1.bf16.msra.mxu0 %v1196
        %1241 = vmatprep.subr.bf16.mxu0 %v1200
        %1242 = vmatpush1.bf16.msra.mxu0 %v1199
        %1243 = vmatprep.subr.bf16.mxu0 %v1203
        %1244 = vmatpush1.bf16.msra.mxu0 %v1202
        %1245 = vmatprep.subr.bf16.mxu0 0
        %1246 = vmatpush1.bf16.msra.mxu0 0
        %1247 = vmatprep.subr.bf16.mxu0 0
        %1248 = vmatpush1.bf16.msra.mxu0 0
        %1249 = vmatprep.subr.bf16.mxu0 0
        %1250 = vmatpush1.bf16.msra.mxu0 0
        %1251 = vmatprep.subr.bf16.mxu0 0
        %1252 = vmatpush1.bf16.msra.mxu0 0
        %1253 = vmatprep.subr.bf16.mxu0 0
        %1254 = vmatpush1.bf16.msra.mxu0 0
        %1255 = vmatprep.subr.bf16.mxu0 0
        %1256 = vmatpush1.bf16.msra.mxu0 0
        %1257 = vmatprep.subr.bf16.mxu0 0
        %1258 = vmatpush1.bf16.msra.mxu0 0
        %1259 = vmatprep.subr.bf16.mxu0 0
        %1260 = vmatpush1.bf16.msra.mxu0 0
        %1261 = vmatprep.mubr.bf16.mxu0 0
        %1262 = vmatmul.mubr.bf16.gmra.mrb[0].mxu0 %v1047
        %v1263 = vpop.f32.mrb[0].mxu0
        %v1264 = vadd.f32 %v1089, %v1263
        %v1265 = vpop.f32.mrb[0].mxu0
        %v1266 = vadd.f32 %v1093, %v1265
        %v1267 = vpop.f32.mrb[0].mxu0
        %v1268 = vadd.f32 %v1089, %v1267
        %v1269 = vpop.f32.mrb[0].mxu0
        %v1270 = vadd.f32 %v1093, %v1269
        %1271 = vmatprep.mubr.bf16.mxu0 0
        %1272 = vmatmul.mubr.bf16.gmra.mrb[0].mxu0 %v1048
        %v1273 = vpop.f32.mrb[0].mxu0
        %v1274 = vadd.f32 %v1089, %v1273
        %v1275 = vpop.f32.mrb[0].mxu0
        %v1276 = vadd.f32 %v1093, %v1275
        %v1277 = vpop.f32.mrb[0].mxu0
        %v1278 = vadd.f32 %v1089, %v1277
        %v1279 = vpop.f32.mrb[0].mxu0
        %v1280 = vadd.f32 %v1093, %v1279
        %1281 = vmatprep.mubr.bf16.mxu0 0
        %1282 = vmatmul.mubr.bf16.gmra.mrb[0].mxu0 %v1049
        %v1283 = vpop.f32.mrb[0].mxu0
        %v1284 = vadd.f32 %v1089, %v1283
        %v1285 = vpop.f32.mrb[0].mxu0
        %v1286 = vadd.f32 %v1093, %v1285
        %v1287 = vpop.f32.mrb[0].mxu0
        %v1288 = vadd.f32 %v1089, %v1287
        %v1289 = vpop.f32.mrb[0].mxu0
        %v1290 = vadd.f32 %v1093, %v1289
        %1291 = vmatprep.mubr.bf16.mxu0 0
        %1292 = vmatmul.mubr.bf16.gmra.mrb[0].mxu0 %v1050
        %v1293 = vpop.f32.mrb[0].mxu0
        %v1294 = vadd.f32 %v1089, %v1293
        %v1295 = vpop.f32.mrb[0].mxu0
        %v1296 = vadd.f32 %v1093, %v1295
        %v1297 = vpop.f32.mrb[0].mxu0
        %v1298 = vadd.f32 %v1089, %v1297
        %v1299 = vpop.f32.mrb[0].mxu0
        %v1300 = vadd.f32 %v1093, %v1299
        %1301 = vmatprep.mubr.bf16.mxu0 0
        %1302 = vmatmul.mubr.bf16.gmra.mrb[0].mxu0 %v1051
        %v1303 = vpop.f32.mrb[0].mxu0
        %v1304 = vadd.f32 %v1089, %v1303
        %v1305 = vpop.f32.mrb[0].mxu0
        %v1306 = vadd.f32 %v1093, %v1305
        %v1307 = vpop.f32.mrb[0].mxu0
        %v1308 = vadd.f32 %v1089, %v1307
        %v1309 = vpop.f32.mrb[0].mxu0
        %v1310 = vadd.f32 %v1093, %v1309
        %1311 = vdwg.mxu0
        %1312 = vmatprep.subr.bf16.mxu0 0
        %1313 = vmatpush1.bf16.msra.mxu0 %v1183
        %1314 = vmatprep.subr.bf16.mxu0 0
        %1315 = vmatpush1.bf16.msra.mxu0 %v1186
        %1316 = vmatprep.subr.bf16.mxu0 0
        %1317 = vmatpush1.bf16.msra.mxu0 %v1189
        %1318 = vmatprep.subr.bf16.mxu0 0
        %1319 = vmatpush1.bf16.msra.mxu0 %v1192
        %1320 = vmatprep.subr.bf16.mxu0 0
        %1321 = vmatpush1.bf16.msra.mxu0 %v1195
        %1322 = vmatprep.subr.bf16.mxu0 0
        %1323 = vmatpush1.bf16.msra.mxu0 %v1198
        %1324 = vmatprep.subr.bf16.mxu0 0
        %1325 = vmatpush1.bf16.msra.mxu0 %v1201
        %1326 = vmatprep.subr.bf16.mxu0 0
        %1327 = vmatpush1.bf16.msra.mxu0 %v1204
        %1328 = vmatprep.subr.bf16.mxu0 0
        %1329 = vmatpush1.bf16.msra.mxu0 0
        %1330 = vmatprep.subr.bf16.mxu0 0
        %1331 = vmatpush1.bf16.msra.mxu0 0
        %1332 = vmatprep.subr.bf16.mxu0 0
        %1333 = vmatpush1.bf16.msra.mxu0 0
        %1334 = vmatprep.subr.bf16.mxu0 0
        %1335 = vmatpush1.bf16.msra.mxu0 0
        %1336 = vmatprep.subr.bf16.mxu0 0
        %1337 = vmatpush1.bf16.msra.mxu0 0
        %1338 = vmatprep.subr.bf16.mxu0 0
        %1339 = vmatpush1.bf16.msra.mxu0 0
        %1340 = vmatprep.subr.bf16.mxu0 0
        %1341 = vmatpush1.bf16.msra.mxu0 0
        %1342 = vmatprep.subr.bf16.mxu0 0
        %1343 = vmatpush1.bf16.msra.mxu0 0
        %1344 = vmatprep.mubr.bf16.mxu0 0
        %1345 = vmatmul.mubr.bf16.gmra.mrb[0].mxu0 %v1047
        %v1346 = vpop.f32.mrb[0].mxu0
        %v1347 = vadd.f32 %v1097, %v1346
        %v1348 = vpop.f32.mrb[0].mxu0
        %v1349 = vpop.f32.mrb[0].mxu0
        %v1350 = vadd.f32 %v1097, %v1349
        %v1351 = vpop.f32.mrb[0].mxu0
        %1352 = vmatprep.mubr.bf16.mxu0 0
        %1353 = vmatmul.mubr.bf16.gmra.mrb[0].mxu0 %v1048
        %v1354 = vpop.f32.mrb[0].mxu0
        %v1355 = vadd.f32 %v1097, %v1354
        %v1356 = vpop.f32.mrb[0].mxu0
        %v1357 = vpop.f32.mrb[0].mxu0
        %v1358 = vadd.f32 %v1097, %v1357
        %v1359 = vpop.f32.mrb[0].mxu0
        %1360 = vmatprep.mubr.bf16.mxu0 0
        %1361 = vmatmul.mubr.bf16.gmra.mrb[0].mxu0 %v1049
        %v1362 = vpop.f32.mrb[0].mxu0
        %v1363 = vadd.f32 %v1097, %v1362
        %v1364 = vpop.f32.mrb[0].mxu0
        %v1365 = vpop.f32.mrb[0].mxu0
        %v1366 = vadd.f32 %v1097, %v1365
        %v1367 = vpop.f32.mrb[0].mxu0
        %1368 = vmatprep.mubr.bf16.mxu0 0
        %1369 = vmatmul.mubr.bf16.gmra.mrb[0].mxu0 %v1050
        %v1370 = vpop.f32.mrb[0].mxu0
        %v1371 = vadd.f32 %v1097, %v1370
        %v1372 = vpop.f32.mrb[0].mxu0
        %v1373 = vpop.f32.mrb[0].mxu0
        %v1374 = vadd.f32 %v1097, %v1373
        %v1375 = vpop.f32.mrb[0].mxu0
        %1376 = vmatprep.mubr.bf16.mxu0 0
        %1377 = vmatmul.mubr.bf16.gmra.mrb[0].mxu0 %v1051
        %v1378 = vpop.f32.mrb[0].mxu0
        %v1379 = vadd.f32 %v1097, %v1378
        %v1380 = vpop.f32.mrb[0].mxu0
        %v1381 = vpop.f32.mrb[0].mxu0
        %v1382 = vadd.f32 %v1097, %v1381
        %v1383 = vpop.f32.mrb[0].mxu0
        %1384 = vdwg.mxu0
        %1395 = vrot.lane.b32.xlu0 %v1264, 96
        %v1396 = vpop.permute.xlu0 %1395
        %1397 = vrot.lane.b32.xlu0 %v1268, 96
        %v1398 = vpop.permute.xlu0 %1397
        %1399 = vrot.lane.b32.xlu0 %v1274, 96
        %v1400 = vpop.permute.xlu0 %1399
        %1401 = vrot.lane.b32.xlu0 %v1278, 96
        %v1402 = vpop.permute.xlu0 %1401
        %1403 = vrot.lane.b32.xlu0 %v1284, 96
        %v1404 = vpop.permute.xlu0 %1403
        %1405 = vrot.lane.b32.xlu0 %v1288, 96
        %v1406 = vpop.permute.xlu0 %1405
        %1407 = vrot.lane.b32.xlu0 %v1294, 96
        %v1408 = vpop.permute.xlu0 %1407
        %1409 = vrot.lane.b32.xlu0 %v1298, 96
        %v1410 = vpop.permute.xlu0 %1409
        %1411 = vrot.lane.b32.xlu0 %v1304, 96
        %v1412 = vpop.permute.xlu0 %1411
        %1413 = vrot.lane.b32.xlu0 %v1308, 96
        %v1414 = vpop.permute.xlu0 %1413
        %1425 = vrot.lane.b32.xlu0 %v1264, 64
        %v1426 = vpop.permute.xlu0 %1425
        %1427 = vrot.lane.b32.xlu0 %v1268, 64
        %v1428 = vpop.permute.xlu0 %1427
        %1429 = vrot.lane.b32.xlu0 %v1274, 64
        %v1430 = vpop.permute.xlu0 %1429
        %1431 = vrot.lane.b32.xlu0 %v1278, 64
        %v1432 = vpop.permute.xlu0 %1431
        %1433 = vrot.lane.b32.xlu0 %v1284, 64
        %v1434 = vpop.permute.xlu0 %1433
        %1435 = vrot.lane.b32.xlu0 %v1288, 64
        %v1436 = vpop.permute.xlu0 %1435
        %1437 = vrot.lane.b32.xlu0 %v1294, 64
        %v1438 = vpop.permute.xlu0 %1437
        %1439 = vrot.lane.b32.xlu0 %v1298, 64
        %v1440 = vpop.permute.xlu0 %1439
        %1441 = vrot.lane.b32.xlu0 %v1304, 64
        %v1442 = vpop.permute.xlu0 %1441
        %1443 = vrot.lane.b32.xlu0 %v1308, 64
        %v1444 = vpop.permute.xlu0 %1443
        %1455 = vrot.lane.b32.xlu0 %v1264, 32
        %v1456 = vpop.permute.xlu0 %1455
        %1457 = vrot.lane.b32.xlu0 %v1268, 32
        %v1458 = vpop.permute.xlu0 %1457
        %1459 = vrot.lane.b32.xlu0 %v1274, 32
        %v1460 = vpop.permute.xlu0 %1459
        %1461 = vrot.lane.b32.xlu0 %v1278, 32
        %v1462 = vpop.permute.xlu0 %1461
        %1463 = vrot.lane.b32.xlu0 %v1284, 32
        %v1464 = vpop.permute.xlu0 %1463
        %1465 = vrot.lane.b32.xlu0 %v1288, 32
        %v1466 = vpop.permute.xlu0 %1465
        %1467 = vrot.lane.b32.xlu0 %v1294, 32
        %v1468 = vpop.permute.xlu0 %1467
        %1469 = vrot.lane.b32.xlu0 %v1298, 32
        %v1470 = vpop.permute.xlu0 %1469
        %1471 = vrot.lane.b32.xlu0 %v1304, 32
        %v1472 = vpop.permute.xlu0 %1471
        %1473 = vrot.lane.b32.xlu0 %v1308, 32
        %v1474 = vpop.permute.xlu0 %1473
        %1495 = vrot.lane.b32.xlu0 %v1266, 96
        %v1496 = vpop.permute.xlu0 %1495
        %1497 = vrot.lane.b32.xlu0 %v1270, 96
        %v1498 = vpop.permute.xlu0 %1497
        %1499 = vrot.lane.b32.xlu0 %v1276, 96
        %v1500 = vpop.permute.xlu0 %1499
        %1501 = vrot.lane.b32.xlu0 %v1280, 96
        %v1502 = vpop.permute.xlu0 %1501
        %1503 = vrot.lane.b32.xlu0 %v1286, 96
        %v1504 = vpop.permute.xlu0 %1503
        %1505 = vrot.lane.b32.xlu0 %v1290, 96
        %v1506 = vpop.permute.xlu0 %1505
        %1507 = vrot.lane.b32.xlu0 %v1296, 96
        %v1508 = vpop.permute.xlu0 %1507
        %1509 = vrot.lane.b32.xlu0 %v1300, 96
        %v1510 = vpop.permute.xlu0 %1509
        %1511 = vrot.lane.b32.xlu0 %v1306, 96
        %v1512 = vpop.permute.xlu0 %1511
        %1513 = vrot.lane.b32.xlu0 %v1310, 96
        %v1514 = vpop.permute.xlu0 %1513
        %1525 = vrot.lane.b32.xlu0 %v1266, 64
        %v1526 = vpop.permute.xlu0 %1525
        %1527 = vrot.lane.b32.xlu0 %v1270, 64
        %v1528 = vpop.permute.xlu0 %1527
        %1529 = vrot.lane.b32.xlu0 %v1276, 64
        %v1530 = vpop.permute.xlu0 %1529
        %1531 = vrot.lane.b32.xlu0 %v1280, 64
        %v1532 = vpop.permute.xlu0 %1531
        %1533 = vrot.lane.b32.xlu0 %v1286, 64
        %v1534 = vpop.permute.xlu0 %1533
        %1535 = vrot.lane.b32.xlu0 %v1290, 64
        %v1536 = vpop.permute.xlu0 %1535
        %1537 = vrot.lane.b32.xlu0 %v1296, 64
        %v1538 = vpop.permute.xlu0 %1537
        %1539 = vrot.lane.b32.xlu0 %v1300, 64
        %v1540 = vpop.permute.xlu0 %1539
        %1541 = vrot.lane.b32.xlu0 %v1306, 64
        %v1542 = vpop.permute.xlu0 %1541
        %1543 = vrot.lane.b32.xlu0 %v1310, 64
        %v1544 = vpop.permute.xlu0 %1543
        %1555 = vrot.lane.b32.xlu0 %v1266, 32
        %v1556 = vpop.permute.xlu0 %1555
        %1557 = vrot.lane.b32.xlu0 %v1270, 32
        %v1558 = vpop.permute.xlu0 %1557
        %1559 = vrot.lane.b32.xlu0 %v1276, 32
        %v1560 = vpop.permute.xlu0 %1559
        %1561 = vrot.lane.b32.xlu0 %v1280, 32
        %v1562 = vpop.permute.xlu0 %1561
        %1563 = vrot.lane.b32.xlu0 %v1286, 32
        %v1564 = vpop.permute.xlu0 %1563
        %1565 = vrot.lane.b32.xlu0 %v1290, 32
        %v1566 = vpop.permute.xlu0 %1565
        %1567 = vrot.lane.b32.xlu0 %v1296, 32
        %v1568 = vpop.permute.xlu0 %1567
        %1569 = vrot.lane.b32.xlu0 %v1300, 32
        %v1570 = vpop.permute.xlu0 %1569
        %1571 = vrot.lane.b32.xlu0 %v1306, 32
        %v1572 = vpop.permute.xlu0 %1571
        %1573 = vrot.lane.b32.xlu0 %v1310, 32
        %v1574 = vpop.permute.xlu0 %1573
        %1595 = vrot.lane.b32.xlu0 %v1347, 96
        %v1596 = vpop.permute.xlu0 %1595
        %1597 = vrot.lane.b32.xlu0 %v1350, 96
        %v1598 = vpop.permute.xlu0 %1597
        %1599 = vrot.lane.b32.xlu0 %v1355, 96
        %v1600 = vpop.permute.xlu0 %1599
        %1601 = vrot.lane.b32.xlu0 %v1358, 96
        %v1602 = vpop.permute.xlu0 %1601
        %1603 = vrot.lane.b32.xlu0 %v1363, 96
        %v1604 = vpop.permute.xlu0 %1603
        %1605 = vrot.lane.b32.xlu0 %v1366, 96
        %v1606 = vpop.permute.xlu0 %1605
        %1607 = vrot.lane.b32.xlu0 %v1371, 96
        %v1608 = vpop.permute.xlu0 %1607
        %1609 = vrot.lane.b32.xlu0 %v1374, 96
        %v1610 = vpop.permute.xlu0 %1609
        %1611 = vrot.lane.b32.xlu0 %v1379, 96
        %v1612 = vpop.permute.xlu0 %1611
        %1613 = vrot.lane.b32.xlu0 %v1382, 96
        %v1614 = vpop.permute.xlu0 %1613
        %1625 = vrot.lane.b32.xlu0 %v1347, 64
        %v1626 = vpop.permute.xlu0 %1625
        %1627 = vrot.lane.b32.xlu0 %v1350, 64
        %v1628 = vpop.permute.xlu0 %1627
        %1629 = vrot.lane.b32.xlu0 %v1355, 64
        %v1630 = vpop.permute.xlu0 %1629
        %1631 = vrot.lane.b32.xlu0 %v1358, 64
        %v1632 = vpop.permute.xlu0 %1631
        %1633 = vrot.lane.b32.xlu0 %v1363, 64
        %v1634 = vpop.permute.xlu0 %1633
        %1635 = vrot.lane.b32.xlu0 %v1366, 64
        %v1636 = vpop.permute.xlu0 %1635
        %1637 = vrot.lane.b32.xlu0 %v1371, 64
        %v1638 = vpop.permute.xlu0 %1637
        %1639 = vrot.lane.b32.xlu0 %v1374, 64
        %v1640 = vpop.permute.xlu0 %1639
        %1641 = vrot.lane.b32.xlu0 %v1379, 64
        %v1642 = vpop.permute.xlu0 %1641
        %1643 = vrot.lane.b32.xlu0 %v1382, 64
        %v1644 = vpop.permute.xlu0 %1643
        %1655 = vrot.lane.b32.xlu0 %v1347, 32
        %v1656 = vpop.permute.xlu0 %1655
        %1657 = vrot.lane.b32.xlu0 %v1350, 32
        %v1658 = vpop.permute.xlu0 %1657
        %1659 = vrot.lane.b32.xlu0 %v1355, 32
        %v1660 = vpop.permute.xlu0 %1659
        %1661 = vrot.lane.b32.xlu0 %v1358, 32
        %v1662 = vpop.permute.xlu0 %1661
        %1663 = vrot.lane.b32.xlu0 %v1363, 32
        %v1664 = vpop.permute.xlu0 %1663
        %1665 = vrot.lane.b32.xlu0 %v1366, 32
        %v1666 = vpop.permute.xlu0 %1665
        %1667 = vrot.lane.b32.xlu0 %v1371, 32
        %v1668 = vpop.permute.xlu0 %1667
        %1669 = vrot.lane.b32.xlu0 %v1374, 32
        %v1670 = vpop.permute.xlu0 %1669
        %1671 = vrot.lane.b32.xlu0 %v1379, 32
        %v1672 = vpop.permute.xlu0 %1671
        %1673 = vrot.lane.b32.xlu0 %v1382, 32
        %v1674 = vpop.permute.xlu0 %1673
        %v1685 = vpack.c.bf16 %v1268, %v1264
        %v1686 = vpack.c.bf16 %v1278, %v1274
        %v1687 = vpack.c.bf16 %v1288, %v1284
        %v1688 = vpack.c.bf16 %v1298, %v1294
        %v1689 = vpack.c.bf16 %v1308, %v1304
        %v1690 = vpack.c.bf16 %v1398, %v1396
        %v1691 = vpack.c.bf16 %v1402, %v1400
        %v1692 = vpack.c.bf16 %v1406, %v1404
        %v1693 = vpack.c.bf16 %v1410, %v1408
        %v1694 = vpack.c.bf16 %v1414, %v1412
        %v1695 = vpack.c.bf16 %v1428, %v1426
        %v1696 = vpack.c.bf16 %v1432, %v1430
        %v1697 = vpack.c.bf16 %v1436, %v1434
        %v1698 = vpack.c.bf16 %v1440, %v1438
        %v1699 = vpack.c.bf16 %v1444, %v1442
        %v1700 = vpack.c.bf16 %v1458, %v1456
        %v1701 = vpack.c.bf16 %v1462, %v1460
        %v1702 = vpack.c.bf16 %v1466, %v1464
        %v1703 = vpack.c.bf16 %v1470, %v1468
        %v1704 = vpack.c.bf16 %v1474, %v1472
        %v1705 = vpack.c.bf16 %v1270, %v1266
        %v1706 = vpack.c.bf16 %v1280, %v1276
        %v1707 = vpack.c.bf16 %v1290, %v1286
        %v1708 = vpack.c.bf16 %v1300, %v1296
        %v1709 = vpack.c.bf16 %v1310, %v1306
        %v1710 = vpack.c.bf16 %v1498, %v1496
        %v1711 = vpack.c.bf16 %v1502, %v1500
        %v1712 = vpack.c.bf16 %v1506, %v1504
        %v1713 = vpack.c.bf16 %v1510, %v1508
        %v1714 = vpack.c.bf16 %v1514, %v1512
        %v1715 = vpack.c.bf16 %v1528, %v1526
        %v1716 = vpack.c.bf16 %v1532, %v1530
        %v1717 = vpack.c.bf16 %v1536, %v1534
        %v1718 = vpack.c.bf16 %v1540, %v1538
        %v1719 = vpack.c.bf16 %v1544, %v1542
        %v1720 = vpack.c.bf16 %v1558, %v1556
        %v1721 = vpack.c.bf16 %v1562, %v1560
        %v1722 = vpack.c.bf16 %v1566, %v1564
        %v1723 = vpack.c.bf16 %v1570, %v1568
        %v1724 = vpack.c.bf16 %v1574, %v1572
        %vm1725 = vcmask 261120
        %v1727 = vsel %vm1725, %v1685, 0
        %v1730 = vsel %vm1725, %v1686, 0
        %v1733 = vsel %vm1725, %v1687, 0
        %v1736 = vsel %vm1725, %v1688, 0
        %v1739 = vsel %vm1725, %v1689, 0
        %v1742 = vsel %vm1725, %v1705, 0
        %v1745 = vsel %vm1725, %v1706, 0
        %v1748 = vsel %vm1725, %v1707, 0
        %v1751 = vsel %vm1725, %v1708, 0
        %v1754 = vsel %vm1725, %v1709, 0
        %1756 = vmatprep.subr.bf16.mxu0 0
        %1757 = vmatpush1.bf16.xpose.msra.mxu0 %v1742
        %1758 = vmatprep.subr.bf16.mxu0 0
        %1759 = vmatpush1.bf16.xpose.msra.mxu0 %v1745
        %1760 = vmatprep.subr.bf16.mxu0 0
        %1761 = vmatpush1.bf16.xpose.msra.mxu0 %v1748
        %1762 = vmatprep.subr.bf16.mxu0 0
        %1763 = vmatpush1.bf16.xpose.msra.mxu0 %v1751
        %1764 = vmatprep.subr.bf16.mxu0 0
        %1765 = vmatpush1.bf16.xpose.msra.mxu0 %v1754
        %1766 = vmatprep.subr.bf16.mxu0 0
        %1767 = vmatpush1.bf16.xpose.msra.mxu0 0
        %1768 = vmatprep.subr.bf16.mxu0 0
        %1769 = vmatpush1.bf16.xpose.msra.mxu0 0
        %1770 = vmatprep.subr.bf16.mxu0 0
        %1771 = vmatpush1.bf16.xpose.msra.mxu0 0
        %1772 = vmatprep.subr.bf16.mxu0 0
        %1773 = vmatpush1.bf16.xpose.msra.mxu0 0
        %1774 = vmatprep.subr.bf16.mxu0 0
        %1775 = vmatpush1.bf16.xpose.msra.mxu0 0
        %1776 = vmatprep.subr.bf16.mxu0 0
        %1777 = vmatpush1.bf16.xpose.msra.mxu0 0
        %1778 = vmatprep.subr.bf16.mxu0 0
        %1779 = vmatpush1.bf16.xpose.msra.mxu0 0
        %1780 = vmatprep.subr.bf16.mxu0 0
        %1781 = vmatpush1.bf16.xpose.msra.mxu0 0
        %1782 = vmatprep.subr.bf16.mxu0 0
        %1783 = vmatpush1.bf16.xpose.msra.mxu0 0
        %1784 = vmatprep.subr.bf16.mxu0 0
        %1785 = vmatpush1.bf16.xpose.msra.mxu0 0
        %1786 = vmatprep.subr.bf16.mxu0 0
        %1787 = vmatpush1.bf16.xpose.msra.mxu0 0
        %1788 = vmatprep.mubr.bf16.mxu0 0
        %1789 = vmatmul.mubr.bf16.gmra.mrb[0].mxu0 %v1727
        %v1790 = vpop.f32.mrb[0].mxu0
        %v1791 = vadd.f32 0.0, %v1790
        %v1792 = vpop.f32.mrb[0].mxu0
        %v1793 = vpop.f32.mrb[0].mxu0
        %v1794 = vadd.f32 0.0, %v1793
        %v1795 = vpop.f32.mrb[0].mxu0
        %1796 = vmatprep.mubr.bf16.mxu0 0
        %1797 = vmatmul.mubr.bf16.gmra.mrb[0].mxu0 %v1730
        %v1798 = vpop.f32.mrb[0].mxu0
        %v1799 = vadd.f32 0.0, %v1798
        %v1800 = vpop.f32.mrb[0].mxu0
        %v1801 = vpop.f32.mrb[0].mxu0
        %v1802 = vadd.f32 0.0, %v1801
        %v1803 = vpop.f32.mrb[0].mxu0
        %1804 = vmatprep.mubr.bf16.mxu0 0
        %1805 = vmatmul.mubr.bf16.gmra.mrb[0].mxu0 %v1733
        %v1806 = vpop.f32.mrb[0].mxu0
        %v1807 = vadd.f32 0.0, %v1806
        %v1808 = vpop.f32.mrb[0].mxu0
        %v1809 = vpop.f32.mrb[0].mxu0
        %v1810 = vadd.f32 0.0, %v1809
        %v1811 = vpop.f32.mrb[0].mxu0
        %1812 = vmatprep.mubr.bf16.mxu0 0
        %1813 = vmatmul.mubr.bf16.gmra.mrb[0].mxu0 %v1736
        %v1814 = vpop.f32.mrb[0].mxu0
        %v1815 = vadd.f32 0.0, %v1814
        %v1816 = vpop.f32.mrb[0].mxu0
        %v1817 = vpop.f32.mrb[0].mxu0
        %v1818 = vadd.f32 0.0, %v1817
        %v1819 = vpop.f32.mrb[0].mxu0
        %1820 = vmatprep.mubr.bf16.mxu0 0
        %1821 = vmatmul.mubr.bf16.gmra.mrb[0].mxu0 %v1739
        %v1822 = vpop.f32.mrb[0].mxu0
        %v1823 = vadd.f32 0.0, %v1822
        %v1824 = vpop.f32.mrb[0].mxu0
        %v1825 = vpop.f32.mrb[0].mxu0
        %v1826 = vadd.f32 0.0, %v1825
        %v1827 = vpop.f32.mrb[0].mxu0
        %1828 = vdwg.mxu0
        %v1830 = vsel %vm1725, %v1690, 0
        %v1833 = vsel %vm1725, %v1691, 0
        %v1836 = vsel %vm1725, %v1692, 0
        %v1839 = vsel %vm1725, %v1693, 0
        %v1842 = vsel %vm1725, %v1694, 0
        %v1845 = vsel %vm1725, %v1710, 0
        %v1848 = vsel %vm1725, %v1711, 0
        %v1851 = vsel %vm1725, %v1712, 0
        %v1854 = vsel %vm1725, %v1713, 0
        %v1857 = vsel %vm1725, %v1714, 0
        %1859 = vmatprep.subr.bf16.mxu0 0
        %1860 = vmatpush1.bf16.xpose.msra.mxu0 %v1845
        %1861 = vmatprep.subr.bf16.mxu0 0
        %1862 = vmatpush1.bf16.xpose.msra.mxu0 %v1848
        %1863 = vmatprep.subr.bf16.mxu0 0
        %1864 = vmatpush1.bf16.xpose.msra.mxu0 %v1851
        %1865 = vmatprep.subr.bf16.mxu0 0
        %1866 = vmatpush1.bf16.xpose.msra.mxu0 %v1854
        %1867 = vmatprep.subr.bf16.mxu0 0
        %1868 = vmatpush1.bf16.xpose.msra.mxu0 %v1857
        %1869 = vmatprep.subr.bf16.mxu0 0
        %1870 = vmatpush1.bf16.xpose.msra.mxu0 0
        %1871 = vmatprep.subr.bf16.mxu0 0
        %1872 = vmatpush1.bf16.xpose.msra.mxu0 0
        %1873 = vmatprep.subr.bf16.mxu0 0
        %1874 = vmatpush1.bf16.xpose.msra.mxu0 0
        %1875 = vmatprep.subr.bf16.mxu0 0
        %1876 = vmatpush1.bf16.xpose.msra.mxu0 0
        %1877 = vmatprep.subr.bf16.mxu0 0
        %1878 = vmatpush1.bf16.xpose.msra.mxu0 0
        %1879 = vmatprep.subr.bf16.mxu0 0
        %1880 = vmatpush1.bf16.xpose.msra.mxu0 0
        %1881 = vmatprep.subr.bf16.mxu0 0
        %1882 = vmatpush1.bf16.xpose.msra.mxu0 0
        %1883 = vmatprep.subr.bf16.mxu0 0
        %1884 = vmatpush1.bf16.xpose.msra.mxu0 0
        %1885 = vmatprep.subr.bf16.mxu0 0
        %1886 = vmatpush1.bf16.xpose.msra.mxu0 0
        %1887 = vmatprep.subr.bf16.mxu0 0
        %1888 = vmatpush1.bf16.xpose.msra.mxu0 0
        %1889 = vmatprep.subr.bf16.mxu0 0
        %1890 = vmatpush1.bf16.xpose.msra.mxu0 0
        %1891 = vmatprep.mubr.bf16.mxu0 0
        %1892 = vmatmul.mubr.bf16.gmra.mrb[0].mxu0 %v1830
        %v1893 = vpop.f32.mrb[0].mxu0
        %v1894 = vadd.f32 0.0, %v1893
        %v1895 = vpop.f32.mrb[0].mxu0
        %v1896 = vpop.f32.mrb[0].mxu0
        %v1897 = vadd.f32 0.0, %v1896
        %v1898 = vpop.f32.mrb[0].mxu0
        %1899 = vmatprep.mubr.bf16.mxu0 0
        %1900 = vmatmul.mubr.bf16.gmra.mrb[0].mxu0 %v1833
        %v1901 = vpop.f32.mrb[0].mxu0
        %v1902 = vadd.f32 0.0, %v1901
        %v1903 = vpop.f32.mrb[0].mxu0
        %v1904 = vpop.f32.mrb[0].mxu0
        %v1905 = vadd.f32 0.0, %v1904
        %v1906 = vpop.f32.mrb[0].mxu0
        %1907 = vmatprep.mubr.bf16.mxu0 0
        %1908 = vmatmul.mubr.bf16.gmra.mrb[0].mxu0 %v1836
        %v1909 = vpop.f32.mrb[0].mxu0
        %v1910 = vadd.f32 0.0, %v1909
        %v1911 = vpop.f32.mrb[0].mxu0
        %v1912 = vpop.f32.mrb[0].mxu0
        %v1913 = vadd.f32 0.0, %v1912
        %v1914 = vpop.f32.mrb[0].mxu0
        %1915 = vmatprep.mubr.bf16.mxu0 0
        %1916 = vmatmul.mubr.bf16.gmra.mrb[0].mxu0 %v1839
        %v1917 = vpop.f32.mrb[0].mxu0
        %v1918 = vadd.f32 0.0, %v1917
        %v1919 = vpop.f32.mrb[0].mxu0
        %v1920 = vpop.f32.mrb[0].mxu0
        %v1921 = vadd.f32 0.0, %v1920
        %v1922 = vpop.f32.mrb[0].mxu0
        %1923 = vmatprep.mubr.bf16.mxu0 0
        %1924 = vmatmul.mubr.bf16.gmra.mrb[0].mxu0 %v1842
        %v1925 = vpop.f32.mrb[0].mxu0
        %v1926 = vadd.f32 0.0, %v1925
        %v1927 = vpop.f32.mrb[0].mxu0
        %v1928 = vpop.f32.mrb[0].mxu0
        %v1929 = vadd.f32 0.0, %v1928
        %v1930 = vpop.f32.mrb[0].mxu0
        %1931 = vdwg.mxu0
        %v1933 = vsel %vm1725, %v1695, 0
        %v1936 = vsel %vm1725, %v1696, 0
        %v1939 = vsel %vm1725, %v1697, 0
        %v1942 = vsel %vm1725, %v1698, 0
        %v1945 = vsel %vm1725, %v1699, 0
        %v1948 = vsel %vm1725, %v1715, 0
        %v1951 = vsel %vm1725, %v1716, 0
        %v1954 = vsel %vm1725, %v1717, 0
        %v1957 = vsel %vm1725, %v1718, 0
        %v1960 = vsel %vm1725, %v1719, 0
        %1962 = vmatprep.subr.bf16.mxu0 0
        %1963 = vmatpush1.bf16.xpose.msra.mxu0 %v1948
        %1964 = vmatprep.subr.bf16.mxu0 0
        %1965 = vmatpush1.bf16.xpose.msra.mxu0 %v1951
        %1966 = vmatprep.subr.bf16.mxu0 0
        %1967 = vmatpush1.bf16.xpose.msra.mxu0 %v1954
        %1968 = vmatprep.subr.bf16.mxu0 0
        %1969 = vmatpush1.bf16.xpose.msra.mxu0 %v1957
        %1970 = vmatprep.subr.bf16.mxu0 0
        %1971 = vmatpush1.bf16.xpose.msra.mxu0 %v1960
        %1972 = vmatprep.subr.bf16.mxu0 0
        %1973 = vmatpush1.bf16.xpose.msra.mxu0 0
        %1974 = vmatprep.subr.bf16.mxu0 0
        %1975 = vmatpush1.bf16.xpose.msra.mxu0 0
        %1976 = vmatprep.subr.bf16.mxu0 0
        %1977 = vmatpush1.bf16.xpose.msra.mxu0 0
        %1978 = vmatprep.subr.bf16.mxu0 0
        %1979 = vmatpush1.bf16.xpose.msra.mxu0 0
        %1980 = vmatprep.subr.bf16.mxu0 0
        %1981 = vmatpush1.bf16.xpose.msra.mxu0 0
        %1982 = vmatprep.subr.bf16.mxu0 0
        %1983 = vmatpush1.bf16.xpose.msra.mxu0 0
        %1984 = vmatprep.subr.bf16.mxu0 0
        %1985 = vmatpush1.bf16.xpose.msra.mxu0 0
        %1986 = vmatprep.subr.bf16.mxu0 0
        %1987 = vmatpush1.bf16.xpose.msra.mxu0 0
        %1988 = vmatprep.subr.bf16.mxu0 0
        %1989 = vmatpush1.bf16.xpose.msra.mxu0 0
        %1990 = vmatprep.subr.bf16.mxu0 0
        %1991 = vmatpush1.bf16.xpose.msra.mxu0 0
        %1992 = vmatprep.subr.bf16.mxu0 0
        %1993 = vmatpush1.bf16.xpose.msra.mxu0 0
        %1994 = vmatprep.mubr.bf16.mxu0 0
        %1995 = vmatmul.mubr.bf16.gmra.mrb[0].mxu0 %v1933
        %v1996 = vpop.f32.mrb[0].mxu0
        %v1997 = vadd.f32 0.0, %v1996
        %v1998 = vpop.f32.mrb[0].mxu0
        %v1999 = vpop.f32.mrb[0].mxu0
        %v2000 = vadd.f32 0.0, %v1999
        %v2001 = vpop.f32.mrb[0].mxu0
        %2002 = vmatprep.mubr.bf16.mxu0 0
        %2003 = vmatmul.mubr.bf16.gmra.mrb[0].mxu0 %v1936
        %v2004 = vpop.f32.mrb[0].mxu0
        %v2005 = vadd.f32 0.0, %v2004
        %v2006 = vpop.f32.mrb[0].mxu0
        %v2007 = vpop.f32.mrb[0].mxu0
        %v2008 = vadd.f32 0.0, %v2007
        %v2009 = vpop.f32.mrb[0].mxu0
        %2010 = vmatprep.mubr.bf16.mxu0 0
        %2011 = vmatmul.mubr.bf16.gmra.mrb[0].mxu0 %v1939
        %v2012 = vpop.f32.mrb[0].mxu0
        %v2013 = vadd.f32 0.0, %v2012
        %v2014 = vpop.f32.mrb[0].mxu0
        %v2015 = vpop.f32.mrb[0].mxu0
        %v2016 = vadd.f32 0.0, %v2015
        %v2017 = vpop.f32.mrb[0].mxu0
        %2018 = vmatprep.mubr.bf16.mxu0 0
        %2019 = vmatmul.mubr.bf16.gmra.mrb[0].mxu0 %v1942
        %v2020 = vpop.f32.mrb[0].mxu0
        %v2021 = vadd.f32 0.0, %v2020
        %v2022 = vpop.f32.mrb[0].mxu0
        %v2023 = vpop.f32.mrb[0].mxu0
        %v2024 = vadd.f32 0.0, %v2023
        %v2025 = vpop.f32.mrb[0].mxu0
        %2026 = vmatprep.mubr.bf16.mxu0 0
        %2027 = vmatmul.mubr.bf16.gmra.mrb[0].mxu0 %v1945
        %v2028 = vpop.f32.mrb[0].mxu0
        %v2029 = vadd.f32 0.0, %v2028
        %v2030 = vpop.f32.mrb[0].mxu0
        %v2031 = vpop.f32.mrb[0].mxu0
        %v2032 = vadd.f32 0.0, %v2031
        %v2033 = vpop.f32.mrb[0].mxu0
        %2034 = vdwg.mxu0
        %v2036 = vsel %vm1725, %v1700, 0
        %v2039 = vsel %vm1725, %v1701, 0
        %v2042 = vsel %vm1725, %v1702, 0
        %v2045 = vsel %vm1725, %v1703, 0
        %v2048 = vsel %vm1725, %v1704, 0
        %v2051 = vsel %vm1725, %v1720, 0
        %v2054 = vsel %vm1725, %v1721, 0
        %v2057 = vsel %vm1725, %v1722, 0
        %v2060 = vsel %vm1725, %v1723, 0
        %v2063 = vsel %vm1725, %v1724, 0
        %2065 = vmatprep.subr.bf16.mxu0 0
        %2066 = vmatpush1.bf16.xpose.msra.mxu0 %v2051
        %2067 = vmatprep.subr.bf16.mxu0 0
        %2068 = vmatpush1.bf16.xpose.msra.mxu0 %v2054
        %2069 = vmatprep.subr.bf16.mxu0 0
        %2070 = vmatpush1.bf16.xpose.msra.mxu0 %v2057
        %2071 = vmatprep.subr.bf16.mxu0 0
        %2072 = vmatpush1.bf16.xpose.msra.mxu0 %v2060
        %2073 = vmatprep.subr.bf16.mxu0 0
        %2074 = vmatpush1.bf16.xpose.msra.mxu0 %v2063
        %2075 = vmatprep.subr.bf16.mxu0 0
        %2076 = vmatpush1.bf16.xpose.msra.mxu0 0
        %2077 = vmatprep.subr.bf16.mxu0 0
        %2078 = vmatpush1.bf16.xpose.msra.mxu0 0
        %2079 = vmatprep.subr.bf16.mxu0 0
        %2080 = vmatpush1.bf16.xpose.msra.mxu0 0
        %2081 = vmatprep.subr.bf16.mxu0 0
        %2082 = vmatpush1.bf16.xpose.msra.mxu0 0
        %2083 = vmatprep.subr.bf16.mxu0 0
        %2084 = vmatpush1.bf16.xpose.msra.mxu0 0
        %2085 = vmatprep.subr.bf16.mxu0 0
        %2086 = vmatpush1.bf16.xpose.msra.mxu0 0
        %2087 = vmatprep.subr.bf16.mxu0 0
        %2088 = vmatpush1.bf16.xpose.msra.mxu0 0
        %2089 = vmatprep.subr.bf16.mxu0 0
        %2090 = vmatpush1.bf16.xpose.msra.mxu0 0
        %2091 = vmatprep.subr.bf16.mxu0 0
        %2092 = vmatpush1.bf16.xpose.msra.mxu0 0
        %2093 = vmatprep.subr.bf16.mxu0 0
        %2094 = vmatpush1.bf16.xpose.msra.mxu0 0
        %2095 = vmatprep.subr.bf16.mxu0 0
        %2096 = vmatpush1.bf16.xpose.msra.mxu0 0
        %2097 = vmatprep.mubr.bf16.mxu0 0
        %2098 = vmatmul.mubr.bf16.gmra.mrb[0].mxu0 %v2036
        %v2099 = vpop.f32.mrb[0].mxu0
        %v2100 = vadd.f32 0.0, %v2099
        %v2101 = vpop.f32.mrb[0].mxu0
        %v2102 = vpop.f32.mrb[0].mxu0
        %v2103 = vadd.f32 0.0, %v2102
        %v2104 = vpop.f32.mrb[0].mxu0
        %2105 = vmatprep.mubr.bf16.mxu0 0
        %2106 = vmatmul.mubr.bf16.gmra.mrb[0].mxu0 %v2039
        %v2107 = vpop.f32.mrb[0].mxu0
        %v2108 = vadd.f32 0.0, %v2107
        %v2109 = vpop.f32.mrb[0].mxu0
        %v2110 = vpop.f32.mrb[0].mxu0
        %v2111 = vadd.f32 0.0, %v2110
        %v2112 = vpop.f32.mrb[0].mxu0
        %2113 = vmatprep.mubr.bf16.mxu0 0
        %2114 = vmatmul.mubr.bf16.gmra.mrb[0].mxu0 %v2042
        %v2115 = vpop.f32.mrb[0].mxu0
        %v2116 = vadd.f32 0.0, %v2115
        %v2117 = vpop.f32.mrb[0].mxu0
        %v2118 = vpop.f32.mrb[0].mxu0
        %v2119 = vadd.f32 0.0, %v2118
        %v2120 = vpop.f32.mrb[0].mxu0
        %2121 = vmatprep.mubr.bf16.mxu0 0
        %2122 = vmatmul.mubr.bf16.gmra.mrb[0].mxu0 %v2045
        %v2123 = vpop.f32.mrb[0].mxu0
        %v2124 = vadd.f32 0.0, %v2123
        %v2125 = vpop.f32.mrb[0].mxu0
        %v2126 = vpop.f32.mrb[0].mxu0
        %v2127 = vadd.f32 0.0, %v2126
        %v2128 = vpop.f32.mrb[0].mxu0
        %2129 = vmatprep.mubr.bf16.mxu0 0
        %2130 = vmatmul.mubr.bf16.gmra.mrb[0].mxu0 %v2048
        %v2131 = vpop.f32.mrb[0].mxu0
        %v2132 = vadd.f32 0.0, %v2131
        %v2133 = vpop.f32.mrb[0].mxu0
        %v2134 = vpop.f32.mrb[0].mxu0
        %v2135 = vadd.f32 0.0, %v2134
        %v2136 = vpop.f32.mrb[0].mxu0
        %2137 = vdwg.mxu0
        %v2138 = vmul.f32 %v1791, 0.17677669
        %v2139 = vmul.f32 %v1794, 0.17677669
        %v2140 = vmul.f32 %v1799, 0.17677669
        %v2141 = vmul.f32 %v1802, 0.17677669
        %v2142 = vmul.f32 %v1807, 0.17677669
        %v2143 = vmul.f32 %v1810, 0.17677669
        %v2144 = vmul.f32 %v1815, 0.17677669
        %v2145 = vmul.f32 %v1818, 0.17677669
        %v2146 = vmul.f32 %v1823, 0.17677669
        %v2147 = vmul.f32 %v1826, 0.17677669
        %v2148 = vmul.f32 %v1894, 0.17677669
        %v2149 = vmul.f32 %v1897, 0.17677669
        %v2150 = vmul.f32 %v1902, 0.17677669
        %v2151 = vmul.f32 %v1905, 0.17677669
        %v2152 = vmul.f32 %v1910, 0.17677669
        %v2153 = vmul.f32 %v1913, 0.17677669
        %v2154 = vmul.f32 %v1918, 0.17677669
        %v2155 = vmul.f32 %v1921, 0.17677669
        %v2156 = vmul.f32 %v1926, 0.17677669
        %v2157 = vmul.f32 %v1929, 0.17677669
        %v2158 = vmul.f32 %v1997, 0.17677669
        %v2159 = vmul.f32 %v2000, 0.17677669
        %v2160 = vmul.f32 %v2005, 0.17677669
        %v2161 = vmul.f32 %v2008, 0.17677669
        %v2162 = vmul.f32 %v2013, 0.17677669
        %v2163 = vmul.f32 %v2016, 0.17677669
        %v2164 = vmul.f32 %v2021, 0.17677669
        %v2165 = vmul.f32 %v2024, 0.17677669
        %v2166 = vmul.f32 %v2029, 0.17677669
        %v2167 = vmul.f32 %v2032, 0.17677669
        %v2168 = vmul.f32 %v2100, 0.17677669
        %v2169 = vmul.f32 %v2103, 0.17677669
        %v2170 = vmul.f32 %v2108, 0.17677669
        %v2171 = vmul.f32 %v2111, 0.17677669
        %v2172 = vmul.f32 %v2116, 0.17677669
        %v2173 = vmul.f32 %v2119, 0.17677669
        %v2174 = vmul.f32 %v2124, 0.17677669
        %v2175 = vmul.f32 %v2127, 0.17677669
        %v2176 = vmul.f32 %v2132, 0.17677669
        %v2177 = vmul.f32 %v2135, 0.17677669
        %v2178 = vld [vmem:[#allocation7] sm:$0xff]
        %v2179 = vld [vmem:[#allocation7 + $0x8] sm:$0xff]
        %v2180 = vld [vmem:[#allocation7 + $0x10] sm:$0xff]
        %v2181 = vld [vmem:[#allocation7 + $0x18] sm:$0xff]
        %v2182 = vld [vmem:[#allocation7 + $0x20] sm:$0xff]
        %v2183 = vld [vmem:[#allocation7 + $0x28] sm:$0xff]
        %v2184 = vld [vmem:[#allocation7 + $0x30] sm:$0xff]
        %v2185 = vld [vmem:[#allocation7 + $0x38] sm:$0xff]
        %v2186 = vld [vmem:[#allocation7 + $0x40] sm:$0xff]
        %v2187 = vld [vmem:[#allocation7 + $0x48] sm:$0xff]
        %v2188 = vadd.f32 %v2138, %v2178
        %v2189 = vadd.f32 %v2139, %v2179
        %v2190 = vadd.f32 %v2140, %v2180
        %v2191 = vadd.f32 %v2141, %v2181
        %v2192 = vadd.f32 %v2142, %v2182
        %v2193 = vadd.f32 %v2143, %v2183
        %v2194 = vadd.f32 %v2144, %v2184
        %v2195 = vadd.f32 %v2145, %v2185
        %v2196 = vadd.f32 %v2146, %v2186
        %v2197 = vadd.f32 %v2147, %v2187
        %v2198 = vadd.f32 %v2148, %v2178
        %v2199 = vadd.f32 %v2149, %v2179
        %v2200 = vadd.f32 %v2150, %v2180
        %v2201 = vadd.f32 %v2151, %v2181
        %v2202 = vadd.f32 %v2152, %v2182
        %v2203 = vadd.f32 %v2153, %v2183
        %v2204 = vadd.f32 %v2154, %v2184
        %v2205 = vadd.f32 %v2155, %v2185
        %v2206 = vadd.f32 %v2156, %v2186
        %v2207 = vadd.f32 %v2157, %v2187
        %v2208 = vadd.f32 %v2158, %v2178
        %v2209 = vadd.f32 %v2159, %v2179
        %v2210 = vadd.f32 %v2160, %v2180
        %v2211 = vadd.f32 %v2161, %v2181
        %v2212 = vadd.f32 %v2162, %v2182
        %v2213 = vadd.f32 %v2163, %v2183
        %v2214 = vadd.f32 %v2164, %v2184
        %v2215 = vadd.f32 %v2165, %v2185
        %v2216 = vadd.f32 %v2166, %v2186
        %v2217 = vadd.f32 %v2167, %v2187
        %v2218 = vadd.f32 %v2168, %v2178
        %v2219 = vadd.f32 %v2169, %v2179
        %v2220 = vadd.f32 %v2170, %v2180
        %v2221 = vadd.f32 %v2171, %v2181
        %v2222 = vadd.f32 %v2172, %v2182
        %v2223 = vadd.f32 %v2173, %v2183
        %v2224 = vadd.f32 %v2174, %v2184
        %v2225 = vadd.f32 %v2175, %v2185
        %v2226 = vadd.f32 %v2176, %v2186
        %v2227 = vadd.f32 %v2177, %v2187
        %vm2228 = vcmask 654336
        %v2229 = vsel %vm2228, %v2188, -inf
        %2230 = vmax.xlane.f32.xlu0 %v2229
        %v2231 = vpop.xlane.xlu0 %2230
        %v2232 = vsel %vm2228, %v2189, -inf
        %2233 = vmax.xlane.f32.xlu0 %v2232
        %v2234 = vpop.xlane.xlu0 %2233
        %v2235 = vsel %vm2228, %v2190, -inf
        %2236 = vmax.xlane.f32.xlu0 %v2235
        %v2237 = vpop.xlane.xlu0 %2236
        %v2238 = vsel %vm2228, %v2191, -inf
        %2239 = vmax.xlane.f32.xlu0 %v2238
        %v2240 = vpop.xlane.xlu0 %2239
        %v2241 = vsel %vm2228, %v2192, -inf
        %2242 = vmax.xlane.f32.xlu0 %v2241
        %v2243 = vpop.xlane.xlu0 %2242
        %v2244 = vsel %vm2228, %v2193, -inf
        %2245 = vmax.xlane.f32.xlu0 %v2244
        %v2246 = vpop.xlane.xlu0 %2245
        %v2247 = vsel %vm2228, %v2194, -inf
        %2248 = vmax.xlane.f32.xlu0 %v2247
        %v2249 = vpop.xlane.xlu0 %2248
        %v2250 = vsel %vm2228, %v2195, -inf
        %2251 = vmax.xlane.f32.xlu0 %v2250
        %v2252 = vpop.xlane.xlu0 %2251
        %v2253 = vsel %vm2228, %v2196, -inf
        %2254 = vmax.xlane.f32.xlu0 %v2253
        %v2255 = vpop.xlane.xlu0 %2254
        %v2256 = vsel %vm2228, %v2197, -inf
        %2257 = vmax.xlane.f32.xlu0 %v2256
        %v2258 = vpop.xlane.xlu0 %2257
        %v2259 = vsel %vm2228, %v2198, -inf
        %2260 = vmax.xlane.f32.xlu0 %v2259
        %v2261 = vpop.xlane.xlu0 %2260
        %v2262 = vsel %vm2228, %v2199, -inf
        %2263 = vmax.xlane.f32.xlu0 %v2262
        %v2264 = vpop.xlane.xlu0 %2263
        %v2265 = vsel %vm2228, %v2200, -inf
        %2266 = vmax.xlane.f32.xlu0 %v2265
        %v2267 = vpop.xlane.xlu0 %2266
        %v2268 = vsel %vm2228, %v2201, -inf
        %2269 = vmax.xlane.f32.xlu0 %v2268
        %v2270 = vpop.xlane.xlu0 %2269
        %v2271 = vsel %vm2228, %v2202, -inf
        %2272 = vmax.xlane.f32.xlu0 %v2271
        %v2273 = vpop.xlane.xlu0 %2272
        %v2274 = vsel %vm2228, %v2203, -inf
        %2275 = vmax.xlane.f32.xlu0 %v2274
        %v2276 = vpop.xlane.xlu0 %2275
        %v2277 = vsel %vm2228, %v2204, -inf
        %2278 = vmax.xlane.f32.xlu0 %v2277
        %v2279 = vpop.xlane.xlu0 %2278
        %v2280 = vsel %vm2228, %v2205, -inf
        %2281 = vmax.xlane.f32.xlu0 %v2280
        %v2282 = vpop.xlane.xlu0 %2281
        %v2283 = vsel %vm2228, %v2206, -inf
        %2284 = vmax.xlane.f32.xlu0 %v2283
        %v2285 = vpop.xlane.xlu0 %2284
        %v2286 = vsel %vm2228, %v2207, -inf
        %2287 = vmax.xlane.f32.xlu0 %v2286
        %v2288 = vpop.xlane.xlu0 %2287
        %v2289 = vsel %vm2228, %v2208, -inf
        %2290 = vmax.xlane.f32.xlu0 %v2289
        %v2291 = vpop.xlane.xlu0 %2290
        %v2292 = vsel %vm2228, %v2209, -inf
        %2293 = vmax.xlane.f32.xlu0 %v2292
        %v2294 = vpop.xlane.xlu0 %2293
        %v2295 = vsel %vm2228, %v2210, -inf
        %2296 = vmax.xlane.f32.xlu0 %v2295
        %v2297 = vpop.xlane.xlu0 %2296
        %v2298 = vsel %vm2228, %v2211, -inf
        %2299 = vmax.xlane.f32.xlu0 %v2298
        %v2300 = vpop.xlane.xlu0 %2299
        %v2301 = vsel %vm2228, %v2212, -inf
        %2302 = vmax.xlane.f32.xlu0 %v2301
        %v2303 = vpop.xlane.xlu0 %2302
        %v2304 = vsel %vm2228, %v2213, -inf
        %2305 = vmax.xlane.f32.xlu0 %v2304
        %v2306 = vpop.xlane.xlu0 %2305
        %v2307 = vsel %vm2228, %v2214, -inf
        %2308 = vmax.xlane.f32.xlu0 %v2307
        %v2309 = vpop.xlane.xlu0 %2308
        %v2310 = vsel %vm2228, %v2215, -inf
        %2311 = vmax.xlane.f32.xlu0 %v2310
        %v2312 = vpop.xlane.xlu0 %2311
        %v2313 = vsel %vm2228, %v2216, -inf
        %2314 = vmax.xlane.f32.xlu0 %v2313
        %v2315 = vpop.xlane.xlu0 %2314
        %v2316 = vsel %vm2228, %v2217, -inf
        %2317 = vmax.xlane.f32.xlu0 %v2316
        %v2318 = vpop.xlane.xlu0 %2317
        %v2319 = vsel %vm2228, %v2218, -inf
        %2320 = vmax.xlane.f32.xlu0 %v2319
        %v2321 = vpop.xlane.xlu0 %2320
        %v2322 = vsel %vm2228, %v2219, -inf
        %2323 = vmax.xlane.f32.xlu0 %v2322
        %v2324 = vpop.xlane.xlu0 %2323
        %v2325 = vsel %vm2228, %v2220, -inf
        %2326 = vmax.xlane.f32.xlu0 %v2325
        %v2327 = vpop.xlane.xlu0 %2326
        %v2328 = vsel %vm2228, %v2221, -inf
        %2329 = vmax.xlane.f32.xlu0 %v2328
        %v2330 = vpop.xlane.xlu0 %2329
        %v2331 = vsel %vm2228, %v2222, -inf
        %2332 = vmax.xlane.f32.xlu0 %v2331
        %v2333 = vpop.xlane.xlu0 %2332
        %v2334 = vsel %vm2228, %v2223, -inf
        %2335 = vmax.xlane.f32.xlu0 %v2334
        %v2336 = vpop.xlane.xlu0 %2335
        %v2337 = vsel %vm2228, %v2224, -inf
        %2338 = vmax.xlane.f32.xlu0 %v2337
        %v2339 = vpop.xlane.xlu0 %2338
        %v2340 = vsel %vm2228, %v2225, -inf
        %2341 = vmax.xlane.f32.xlu0 %v2340
        %v2342 = vpop.xlane.xlu0 %2341
        %v2343 = vsel %vm2228, %v2226, -inf
        %2344 = vmax.xlane.f32.xlu0 %v2343
        %v2345 = vpop.xlane.xlu0 %2344
        %v2346 = vsel %vm2228, %v2227, -inf
        %2347 = vmax.xlane.f32.xlu0 %v2346
        %v2348 = vpop.xlane.xlu0 %2347
        %v2349 = vsub.f32 %v2188, %v2231
        %v2350 = vsub.f32 %v2189, %v2234
        %v2351 = vsub.f32 %v2190, %v2237
        %v2352 = vsub.f32 %v2191, %v2240
        %v2353 = vsub.f32 %v2192, %v2243
        %v2354 = vsub.f32 %v2193, %v2246
        %v2355 = vsub.f32 %v2194, %v2249
        %v2356 = vsub.f32 %v2195, %v2252
        %v2357 = vsub.f32 %v2196, %v2255
        %v2358 = vsub.f32 %v2197, %v2258
        %v2359 = vsub.f32 %v2198, %v2261
        %v2360 = vsub.f32 %v2199, %v2264
        %v2361 = vsub.f32 %v2200, %v2267
        %v2362 = vsub.f32 %v2201, %v2270
        %v2363 = vsub.f32 %v2202, %v2273
        %v2364 = vsub.f32 %v2203, %v2276
        %v2365 = vsub.f32 %v2204, %v2279
        %v2366 = vsub.f32 %v2205, %v2282
        %v2367 = vsub.f32 %v2206, %v2285
        %v2368 = vsub.f32 %v2207, %v2288
        %v2369 = vsub.f32 %v2208, %v2291
        %v2370 = vsub.f32 %v2209, %v2294
        %v2371 = vsub.f32 %v2210, %v2297
        %v2372 = vsub.f32 %v2211, %v2300
        %v2373 = vsub.f32 %v2212, %v2303
        %v2374 = vsub.f32 %v2213, %v2306
        %v2375 = vsub.f32 %v2214, %v2309
        %v2376 = vsub.f32 %v2215, %v2312
        %v2377 = vsub.f32 %v2216, %v2315
        %v2378 = vsub.f32 %v2217, %v2318
        %v2379 = vsub.f32 %v2218, %v2321
        %v2380 = vsub.f32 %v2219, %v2324
        %v2381 = vsub.f32 %v2220, %v2327
        %v2382 = vsub.f32 %v2221, %v2330
        %v2383 = vsub.f32 %v2222, %v2333
        %v2384 = vsub.f32 %v2223, %v2336
        %v2385 = vsub.f32 %v2224, %v2339
        %v2386 = vsub.f32 %v2225, %v2342
        %v2387 = vsub.f32 %v2226, %v2345
        %v2388 = vsub.f32 %v2227, %v2348
        %v2389 = vmul.f32 %v2349, 1.442695
        %v2390 = vpow.pop %v2389
        %v2391 = vmul.f32 %v2350, 1.442695
        %v2392 = vpow.pop %v2391
        %v2393 = vmul.f32 %v2351, 1.442695
        %v2394 = vpow.pop %v2393
        %v2395 = vmul.f32 %v2352, 1.442695
        %v2396 = vpow.pop %v2395
        %v2397 = vmul.f32 %v2353, 1.442695
        %v2398 = vpow.pop %v2397
        %v2399 = vmul.f32 %v2354, 1.442695
        %v2400 = vpow.pop %v2399
        %v2401 = vmul.f32 %v2355, 1.442695
        %v2402 = vpow.pop %v2401
        %v2403 = vmul.f32 %v2356, 1.442695
        %v2404 = vpow.pop %v2403
        %v2405 = vmul.f32 %v2357, 1.442695
        %v2406 = vpow.pop %v2405
        %v2407 = vmul.f32 %v2358, 1.442695
        %v2408 = vpow.pop %v2407
        %v2409 = vmul.f32 %v2359, 1.442695
        %v2410 = vpow.pop %v2409
        %v2411 = vmul.f32 %v2360, 1.442695
        %v2412 = vpow.pop %v2411
        %v2413 = vmul.f32 %v2361, 1.442695
        %v2414 = vpow.pop %v2413
        %v2415 = vmul.f32 %v2362, 1.442695
        %v2416 = vpow.pop %v2415
        %v2417 = vmul.f32 %v2363, 1.442695
        %v2418 = vpow.pop %v2417
        %v2419 = vmul.f32 %v2364, 1.442695
        %v2420 = vpow.pop %v2419
        %v2421 = vmul.f32 %v2365, 1.442695
        %v2422 = vpow.pop %v2421
        %v2423 = vmul.f32 %v2366, 1.442695
        %v2424 = vpow.pop %v2423
        %v2425 = vmul.f32 %v2367, 1.442695
        %v2426 = vpow.pop %v2425
        %v2427 = vmul.f32 %v2368, 1.442695
        %v2428 = vpow.pop %v2427
        %v2429 = vmul.f32 %v2369, 1.442695
        %v2430 = vpow.pop %v2429
        %v2431 = vmul.f32 %v2370, 1.442695
        %v2432 = vpow.pop %v2431
        %v2433 = vmul.f32 %v2371, 1.442695
        %v2434 = vpow.pop %v2433
        %v2435 = vmul.f32 %v2372, 1.442695
        %v2436 = vpow.pop %v2435
        %v2437 = vmul.f32 %v2373, 1.442695
        %v2438 = vpow.pop %v2437
        %v2439 = vmul.f32 %v2374, 1.442695
        %v2440 = vpow.pop %v2439
        %v2441 = vmul.f32 %v2375, 1.442695
        %v2442 = vpow.pop %v2441
        %v2443 = vmul.f32 %v2376, 1.442695
        %v2444 = vpow.pop %v2443
        %v2445 = vmul.f32 %v2377, 1.442695
        %v2446 = vpow.pop %v2445
        %v2447 = vmul.f32 %v2378, 1.442695
        %v2448 = vpow.pop %v2447
        %v2449 = vmul.f32 %v2379, 1.442695
        %v2450 = vpow.pop %v2449
        %v2451 = vmul.f32 %v2380, 1.442695
        %v2452 = vpow.pop %v2451
        %v2453 = vmul.f32 %v2381, 1.442695
        %v2454 = vpow.pop %v2453
        %v2455 = vmul.f32 %v2382, 1.442695
        %v2456 = vpow.pop %v2455
        %v2457 = vmul.f32 %v2383, 1.442695
        %v2458 = vpow.pop %v2457
        %v2459 = vmul.f32 %v2384, 1.442695
        %v2460 = vpow.pop %v2459
        %v2461 = vmul.f32 %v2385, 1.442695
        %v2462 = vpow.pop %v2461
        %v2463 = vmul.f32 %v2386, 1.442695
        %v2464 = vpow.pop %v2463
        %v2465 = vmul.f32 %v2387, 1.442695
        %v2466 = vpow.pop %v2465
        %v2467 = vmul.f32 %v2388, 1.442695
        %v2468 = vpow.pop %v2467
        %v2469 = vsel %vm2228, %v2390, 0.0
        %2470 = vadd.xlane.f32.xlu0 %v2469
        %v2471 = vpop.xlane.xlu0 %2470
        %v2472 = vsel %vm2228, %v2392, 0.0
        %2473 = vadd.xlane.f32.xlu0 %v2472
        %v2474 = vpop.xlane.xlu0 %2473
        %v2475 = vsel %vm2228, %v2394, 0.0
        %2476 = vadd.xlane.f32.xlu0 %v2475
        %v2477 = vpop.xlane.xlu0 %2476
        %v2478 = vsel %vm2228, %v2396, 0.0
        %2479 = vadd.xlane.f32.xlu0 %v2478
        %v2480 = vpop.xlane.xlu0 %2479
        %v2481 = vsel %vm2228, %v2398, 0.0
        %2482 = vadd.xlane.f32.xlu0 %v2481
        %v2483 = vpop.xlane.xlu0 %2482
        %v2484 = vsel %vm2228, %v2400, 0.0
        %2485 = vadd.xlane.f32.xlu0 %v2484
        %v2486 = vpop.xlane.xlu0 %2485
        %v2487 = vsel %vm2228, %v2402, 0.0
        %2488 = vadd.xlane.f32.xlu0 %v2487
        %v2489 = vpop.xlane.xlu0 %2488
        %v2490 = vsel %vm2228, %v2404, 0.0
        %2491 = vadd.xlane.f32.xlu0 %v2490
        %v2492 = vpop.xlane.xlu0 %2491
        %v2493 = vsel %vm2228, %v2406, 0.0
        %2494 = vadd.xlane.f32.xlu0 %v2493
        %v2495 = vpop.xlane.xlu0 %2494
        %v2496 = vsel %vm2228, %v2408, 0.0
        %2497 = vadd.xlane.f32.xlu0 %v2496
        %v2498 = vpop.xlane.xlu0 %2497
        %v2499 = vsel %vm2228, %v2410, 0.0
        %2500 = vadd.xlane.f32.xlu0 %v2499
        %v2501 = vpop.xlane.xlu0 %2500
        %v2502 = vsel %vm2228, %v2412, 0.0
        %2503 = vadd.xlane.f32.xlu0 %v2502
        %v2504 = vpop.xlane.xlu0 %2503
        %v2505 = vsel %vm2228, %v2414, 0.0
        %2506 = vadd.xlane.f32.xlu0 %v2505
        %v2507 = vpop.xlane.xlu0 %2506
        %v2508 = vsel %vm2228, %v2416, 0.0
        %2509 = vadd.xlane.f32.xlu0 %v2508
        %v2510 = vpop.xlane.xlu0 %2509
        %v2511 = vsel %vm2228, %v2418, 0.0
        %2512 = vadd.xlane.f32.xlu0 %v2511
        %v2513 = vpop.xlane.xlu0 %2512
        %v2514 = vsel %vm2228, %v2420, 0.0
        %2515 = vadd.xlane.f32.xlu0 %v2514
        %v2516 = vpop.xlane.xlu0 %2515
        %v2517 = vsel %vm2228, %v2422, 0.0
        %2518 = vadd.xlane.f32.xlu0 %v2517
        %v2519 = vpop.xlane.xlu0 %2518
        %v2520 = vsel %vm2228, %v2424, 0.0
        %2521 = vadd.xlane.f32.xlu0 %v2520
        %v2522 = vpop.xlane.xlu0 %2521
        %v2523 = vsel %vm2228, %v2426, 0.0
        %2524 = vadd.xlane.f32.xlu0 %v2523
        %v2525 = vpop.xlane.xlu0 %2524
        %v2526 = vsel %vm2228, %v2428, 0.0
        %2527 = vadd.xlane.f32.xlu0 %v2526
        %v2528 = vpop.xlane.xlu0 %2527
        %v2529 = vsel %vm2228, %v2430, 0.0
        %2530 = vadd.xlane.f32.xlu0 %v2529
        %v2531 = vpop.xlane.xlu0 %2530
        %v2532 = vsel %vm2228, %v2432, 0.0
        %2533 = vadd.xlane.f32.xlu0 %v2532
        %v2534 = vpop.xlane.xlu0 %2533
        %v2535 = vsel %vm2228, %v2434, 0.0
        %2536 = vadd.xlane.f32.xlu0 %v2535
        %v2537 = vpop.xlane.xlu0 %2536
        %v2538 = vsel %vm2228, %v2436, 0.0
        %2539 = vadd.xlane.f32.xlu0 %v2538
        %v2540 = vpop.xlane.xlu0 %2539
        %v2541 = vsel %vm2228, %v2438, 0.0
        %2542 = vadd.xlane.f32.xlu0 %v2541
        %v2543 = vpop.xlane.xlu0 %2542
        %v2544 = vsel %vm2228, %v2440, 0.0
        %2545 = vadd.xlane.f32.xlu0 %v2544
        %v2546 = vpop.xlane.xlu0 %2545
        %v2547 = vsel %vm2228, %v2442, 0.0
        %2548 = vadd.xlane.f32.xlu0 %v2547
        %v2549 = vpop.xlane.xlu0 %2548
        %v2550 = vsel %vm2228, %v2444, 0.0
        %2551 = vadd.xlane.f32.xlu0 %v2550
        %v2552 = vpop.xlane.xlu0 %2551
        %v2553 = vsel %vm2228, %v2446, 0.0
        %2554 = vadd.xlane.f32.xlu0 %v2553
        %v2555 = vpop.xlane.xlu0 %2554
        %v2556 = vsel %vm2228, %v2448, 0.0
        %2557 = vadd.xlane.f32.xlu0 %v2556
        %v2558 = vpop.xlane.xlu0 %2557
        %v2559 = vsel %vm2228, %v2450, 0.0
        %2560 = vadd.xlane.f32.xlu0 %v2559
        %v2561 = vpop.xlane.xlu0 %2560
        %v2562 = vsel %vm2228, %v2452, 0.0
        %2563 = vadd.xlane.f32.xlu0 %v2562
        %v2564 = vpop.xlane.xlu0 %2563
        %v2565 = vsel %vm2228, %v2454, 0.0
        %2566 = vadd.xlane.f32.xlu0 %v2565
        %v2567 = vpop.xlane.xlu0 %2566
        %v2568 = vsel %vm2228, %v2456, 0.0
        %2569 = vadd.xlane.f32.xlu0 %v2568
        %v2570 = vpop.xlane.xlu0 %2569
        %v2571 = vsel %vm2228, %v2458, 0.0
        %2572 = vadd.xlane.f32.xlu0 %v2571
        %v2573 = vpop.xlane.xlu0 %2572
        %v2574 = vsel %vm2228, %v2460, 0.0
        %2575 = vadd.xlane.f32.xlu0 %v2574
        %v2576 = vpop.xlane.xlu0 %2575
        %v2577 = vsel %vm2228, %v2462, 0.0
        %2578 = vadd.xlane.f32.xlu0 %v2577
        %v2579 = vpop.xlane.xlu0 %2578
        %v2580 = vsel %vm2228, %v2464, 0.0
        %2581 = vadd.xlane.f32.xlu0 %v2580
        %v2582 = vpop.xlane.xlu0 %2581
        %v2583 = vsel %vm2228, %v2466, 0.0
        %2584 = vadd.xlane.f32.xlu0 %v2583
        %v2585 = vpop.xlane.xlu0 %2584
        %v2586 = vsel %vm2228, %v2468, 0.0
        %2587 = vadd.xlane.f32.xlu0 %v2586
        %v2588 = vpop.xlane.xlu0 %2587
        %v2589 = vrcp.pop %v2471
        %v2590 = vrcp.pop %v2474
        %v2591 = vrcp.pop %v2477
        %v2592 = vrcp.pop %v2480
        %v2593 = vrcp.pop %v2483
        %v2594 = vrcp.pop %v2486
        %v2595 = vrcp.pop %v2489
        %v2596 = vrcp.pop %v2492
        %v2597 = vrcp.pop %v2495
        %v2598 = vrcp.pop %v2498
        %v2599 = vrcp.pop %v2501
        %v2600 = vrcp.pop %v2504
        %v2601 = vrcp.pop %v2507
        %v2602 = vrcp.pop %v2510
        %v2603 = vrcp.pop %v2513
        %v2604 = vrcp.pop %v2516
        %v2605 = vrcp.pop %v2519
        %v2606 = vrcp.pop %v2522
        %v2607 = vrcp.pop %v2525
        %v2608 = vrcp.pop %v2528
        %v2609 = vrcp.pop %v2531
        %v2610 = vrcp.pop %v2534
        %v2611 = vrcp.pop %v2537
        %v2612 = vrcp.pop %v2540
        %v2613 = vrcp.pop %v2543
        %v2614 = vrcp.pop %v2546
        %v2615 = vrcp.pop %v2549
        %v2616 = vrcp.pop %v2552
        %v2617 = vrcp.pop %v2555
        %v2618 = vrcp.pop %v2558
        %v2619 = vrcp.pop %v2561
        %v2620 = vrcp.pop %v2564
        %v2621 = vrcp.pop %v2567
        %v2622 = vrcp.pop %v2570
        %v2623 = vrcp.pop %v2573
        %v2624 = vrcp.pop %v2576
        %v2625 = vrcp.pop %v2579
        %v2626 = vrcp.pop %v2582
        %v2627 = vrcp.pop %v2585
        %v2628 = vrcp.pop %v2588
        %v2629 = vmul.f32 %v2390, %v2589
        %v2630 = vmul.f32 %v2392, %v2590
        %v2631 = vmul.f32 %v2394, %v2591
        %v2632 = vmul.f32 %v2396, %v2592
        %v2633 = vmul.f32 %v2398, %v2593
        %v2634 = vmul.f32 %v2400, %v2594
        %v2635 = vmul.f32 %v2402, %v2595
        %v2636 = vmul.f32 %v2404, %v2596
        %v2637 = vmul.f32 %v2406, %v2597
        %v2638 = vmul.f32 %v2408, %v2598
        %v2639 = vmul.f32 %v2410, %v2599
        %v2640 = vmul.f32 %v2412, %v2600
        %v2641 = vmul.f32 %v2414, %v2601
        %v2642 = vmul.f32 %v2416, %v2602
        %v2643 = vmul.f32 %v2418, %v2603
        %v2644 = vmul.f32 %v2420, %v2604
        %v2645 = vmul.f32 %v2422, %v2605
        %v2646 = vmul.f32 %v2424, %v2606
        %v2647 = vmul.f32 %v2426, %v2607
        %v2648 = vmul.f32 %v2428, %v2608
        %v2649 = vmul.f32 %v2430, %v2609
        %v2650 = vmul.f32 %v2432, %v2610
        %v2651 = vmul.f32 %v2434, %v2611
        %v2652 = vmul.f32 %v2436, %v2612
        %v2653 = vmul.f32 %v2438, %v2613
        %v2654 = vmul.f32 %v2440, %v2614
        %v2655 = vmul.f32 %v2442, %v2615
        %v2656 = vmul.f32 %v2444, %v2616
        %v2657 = vmul.f32 %v2446, %v2617
        %v2658 = vmul.f32 %v2448, %v2618
        %v2659 = vmul.f32 %v2450, %v2619
        %v2660 = vmul.f32 %v2452, %v2620
        %v2661 = vmul.f32 %v2454, %v2621
        %v2662 = vmul.f32 %v2456, %v2622
        %v2663 = vmul.f32 %v2458, %v2623
        %v2664 = vmul.f32 %v2460, %v2624
        %v2665 = vmul.f32 %v2462, %v2625
        %v2666 = vmul.f32 %v2464, %v2626
        %v2667 = vmul.f32 %v2466, %v2627
        %v2668 = vmul.f32 %v2468, %v2628
        %v2669 = vpack.c.bf16 %v2630, %v2629
        %v2670 = vpack.c.bf16 %v2632, %v2631
        %v2671 = vpack.c.bf16 %v2634, %v2633
        %v2672 = vpack.c.bf16 %v2636, %v2635
        %v2673 = vpack.c.bf16 %v2638, %v2637
        %v2674 = vpack.c.bf16 %v2640, %v2639
        %v2675 = vpack.c.bf16 %v2642, %v2641
        %v2676 = vpack.c.bf16 %v2644, %v2643
        %v2677 = vpack.c.bf16 %v2646, %v2645
        %v2678 = vpack.c.bf16 %v2648, %v2647
        %v2679 = vpack.c.bf16 %v2650, %v2649
        %v2680 = vpack.c.bf16 %v2652, %v2651
        %v2681 = vpack.c.bf16 %v2654, %v2653
        %v2682 = vpack.c.bf16 %v2656, %v2655
        %v2683 = vpack.c.bf16 %v2658, %v2657
        %v2684 = vpack.c.bf16 %v2660, %v2659
        %v2685 = vpack.c.bf16 %v2662, %v2661
        %v2686 = vpack.c.bf16 %v2664, %v2663
        %v2687 = vpack.c.bf16 %v2666, %v2665
        %v2688 = vpack.c.bf16 %v2668, %v2667
        %v2689 = vpack.c.bf16 %v1350, %v1347
        %v2690 = vpack.c.bf16 %v1358, %v1355
        %v2691 = vpack.c.bf16 %v1366, %v1363
        %v2692 = vpack.c.bf16 %v1374, %v1371
        %v2693 = vpack.c.bf16 %v1382, %v1379
        %v2694 = vpack.c.bf16 %v1598, %v1596
        %v2695 = vpack.c.bf16 %v1602, %v1600
        %v2696 = vpack.c.bf16 %v1606, %v1604
        %v2697 = vpack.c.bf16 %v1610, %v1608
        %v2698 = vpack.c.bf16 %v1614, %v1612
        %v2699 = vpack.c.bf16 %v1628, %v1626
        %v2700 = vpack.c.bf16 %v1632, %v1630
        %v2701 = vpack.c.bf16 %v1636, %v1634
        %v2702 = vpack.c.bf16 %v1640, %v1638
        %v2703 = vpack.c.bf16 %v1644, %v1642
        %v2704 = vpack.c.bf16 %v1658, %v1656
        %v2705 = vpack.c.bf16 %v1662, %v1660
        %v2706 = vpack.c.bf16 %v1666, %v1664
        %v2707 = vpack.c.bf16 %v1670, %v1668
        %v2708 = vpack.c.bf16 %v1674, %v1672
        %v2710 = vsel %vm2228, %v2669, 0
        %v2713 = vsel %vm2228, %v2670, 0
        %v2716 = vsel %vm2228, %v2671, 0
        %v2719 = vsel %vm2228, %v2672, 0
        %v2722 = vsel %vm2228, %v2673, 0
        %2724 = vmatprep.subr.bf16.mxu0 0
        %2725 = vmatpush1.bf16.msra.mxu0 %v2689
        %2726 = vmatprep.subr.bf16.mxu0 0
        %2727 = vmatpush1.bf16.msra.mxu0 %v2690
        %2728 = vmatprep.subr.bf16.mxu0 0
        %2729 = vmatpush1.bf16.msra.mxu0 %v2691
        %2730 = vmatprep.subr.bf16.mxu0 0
        %2731 = vmatpush1.bf16.msra.mxu0 %v2692
        %2732 = vmatprep.subr.bf16.mxu0 0
        %2733 = vmatpush1.bf16.msra.mxu0 %v2693
        %2734 = vmatprep.subr.bf16.mxu0 0
        %2735 = vmatpush1.bf16.msra.mxu0 0
        %2736 = vmatprep.subr.bf16.mxu0 0
        %2737 = vmatpush1.bf16.msra.mxu0 0
        %2738 = vmatprep.subr.bf16.mxu0 0
        %2739 = vmatpush1.bf16.msra.mxu0 0
        %2740 = vmatprep.subr.bf16.mxu0 0
        %2741 = vmatpush1.bf16.msra.mxu0 0
        %2742 = vmatprep.subr.bf16.mxu0 0
        %2743 = vmatpush1.bf16.msra.mxu0 0
        %2744 = vmatprep.subr.bf16.mxu0 0
        %2745 = vmatpush1.bf16.msra.mxu0 0
        %2746 = vmatprep.subr.bf16.mxu0 0
        %2747 = vmatpush1.bf16.msra.mxu0 0
        %2748 = vmatprep.subr.bf16.mxu0 0
        %2749 = vmatpush1.bf16.msra.mxu0 0
        %2750 = vmatprep.subr.bf16.mxu0 0
        %2751 = vmatpush1.bf16.msra.mxu0 0
        %2752 = vmatprep.subr.bf16.mxu0 0
        %2753 = vmatpush1.bf16.msra.mxu0 0
        %2754 = vmatprep.subr.bf16.mxu0 0
        %2755 = vmatpush1.bf16.msra.mxu0 0
        %2756 = vmatprep.mubr.bf16.mxu0 0
        %2757 = vmatmul.mubr.bf16.gmra.mrb[0].mxu0 %v2710
        %v2758 = vpop.f32.mrb[0].mxu0
        %v2759 = vadd.f32 0.0, %v2758
        %v2760 = vpop.f32.mrb[0].mxu0
        %v2761 = vpop.f32.mrb[0].mxu0
        %v2762 = vadd.f32 0.0, %v2761
        %v2763 = vpop.f32.mrb[0].mxu0
        %2764 = vmatprep.mubr.bf16.mxu0 0
        %2765 = vmatmul.mubr.bf16.gmra.mrb[0].mxu0 %v2713
        %v2766 = vpop.f32.mrb[0].mxu0
        %v2767 = vadd.f32 0.0, %v2766
        %v2768 = vpop.f32.mrb[0].mxu0
        %v2769 = vpop.f32.mrb[0].mxu0
        %v2770 = vadd.f32 0.0, %v2769
        %v2771 = vpop.f32.mrb[0].mxu0
        %2772 = vmatprep.mubr.bf16.mxu0 0
        %2773 = vmatmul.mubr.bf16.gmra.mrb[0].mxu0 %v2716
        %v2774 = vpop.f32.mrb[0].mxu0
        %v2775 = vadd.f32 0.0, %v2774
        %v2776 = vpop.f32.mrb[0].mxu0
        %v2777 = vpop.f32.mrb[0].mxu0
        %v2778 = vadd.f32 0.0, %v2777
        %v2779 = vpop.f32.mrb[0].mxu0
        %2780 = vmatprep.mubr.bf16.mxu0 0
        %2781 = vmatmul.mubr.bf16.gmra.mrb[0].mxu0 %v2719
        %v2782 = vpop.f32.mrb[0].mxu0
        %v2783 = vadd.f32 0.0, %v2782
        %v2784 = vpop.f32.mrb[0].mxu0
        %v2785 = vpop.f32.mrb[0].mxu0
        %v2786 = vadd.f32 0.0, %v2785
        %v2787 = vpop.f32.mrb[0].mxu0
        %2788 = vmatprep.mubr.bf16.mxu0 0
        %2789 = vmatmul.mubr.bf16.gmra.mrb[0].mxu0 %v2722
        %v2790 = vpop.f32.mrb[0].mxu0
        %v2791 = vadd.f32 0.0, %v2790
        %v2792 = vpop.f32.mrb[0].mxu0
        %v2793 = vpop.f32.mrb[0].mxu0
        %v2794 = vadd.f32 0.0, %v2793
        %v2795 = vpop.f32.mrb[0].mxu0
        %2796 = vdwg.mxu0
        %v2798 = vsel %vm2228, %v2674, 0
        %v2801 = vsel %vm2228, %v2675, 0
        %v2804 = vsel %vm2228, %v2676, 0
        %v2807 = vsel %vm2228, %v2677, 0
        %v2810 = vsel %vm2228, %v2678, 0
        %2812 = vmatprep.subr.bf16.mxu0 0
        %2813 = vmatpush1.bf16.msra.mxu0 %v2694
        %2814 = vmatprep.subr.bf16.mxu0 0
        %2815 = vmatpush1.bf16.msra.mxu0 %v2695
        %2816 = vmatprep.subr.bf16.mxu0 0
        %2817 = vmatpush1.bf16.msra.mxu0 %v2696
        %2818 = vmatprep.subr.bf16.mxu0 0
        %2819 = vmatpush1.bf16.msra.mxu0 %v2697
        %2820 = vmatprep.subr.bf16.mxu0 0
        %2821 = vmatpush1.bf16.msra.mxu0 %v2698
        %2822 = vmatprep.subr.bf16.mxu0 0
        %2823 = vmatpush1.bf16.msra.mxu0 0
        %2824 = vmatprep.subr.bf16.mxu0 0
        %2825 = vmatpush1.bf16.msra.mxu0 0
        %2826 = vmatprep.subr.bf16.mxu0 0
        %2827 = vmatpush1.bf16.msra.mxu0 0
        %2828 = vmatprep.subr.bf16.mxu0 0
        %2829 = vmatpush1.bf16.msra.mxu0 0
        %2830 = vmatprep.subr.bf16.mxu0 0
        %2831 = vmatpush1.bf16.msra.mxu0 0
        %2832 = vmatprep.subr.bf16.mxu0 0
        %2833 = vmatpush1.bf16.msra.mxu0 0
        %2834 = vmatprep.subr.bf16.mxu0 0
        %2835 = vmatpush1.bf16.msra.mxu0 0
        %2836 = vmatprep.subr.bf16.mxu0 0
        %2837 = vmatpush1.bf16.msra.mxu0 0
        %2838 = vmatprep.subr.bf16.mxu0 0
        %2839 = vmatpush1.bf16.msra.mxu0 0
        %2840 = vmatprep.subr.bf16.mxu0 0
        %2841 = vmatpush1.bf16.msra.mxu0 0
        %2842 = vmatprep.subr.bf16.mxu0 0
        %2843 = vmatpush1.bf16.msra.mxu0 0
        %2844 = vmatprep.mubr.bf16.mxu0 0
        %2845 = vmatmul.mubr.bf16.gmra.mrb[0].mxu0 %v2798
        %v2846 = vpop.f32.mrb[0].mxu0
        %v2847 = vadd.f32 0.0, %v2846
        %v2848 = vpop.f32.mrb[0].mxu0
        %v2849 = vpop.f32.mrb[0].mxu0
        %v2850 = vadd.f32 0.0, %v2849
        %v2851 = vpop.f32.mrb[0].mxu0
        %2852 = vmatprep.mubr.bf16.mxu0 0
        %2853 = vmatmul.mubr.bf16.gmra.mrb[0].mxu0 %v2801
        %v2854 = vpop.f32.mrb[0].mxu0
        %v2855 = vadd.f32 0.0, %v2854
        %v2856 = vpop.f32.mrb[0].mxu0
        %v2857 = vpop.f32.mrb[0].mxu0
        %v2858 = vadd.f32 0.0, %v2857
        %v2859 = vpop.f32.mrb[0].mxu0
        %2860 = vmatprep.mubr.bf16.mxu0 0
        %2861 = vmatmul.mubr.bf16.gmra.mrb[0].mxu0 %v2804
        %v2862 = vpop.f32.mrb[0].mxu0
        %v2863 = vadd.f32 0.0, %v2862
        %v2864 = vpop.f32.mrb[0].mxu0
        %v2865 = vpop.f32.mrb[0].mxu0
        %v2866 = vadd.f32 0.0, %v2865
        %v2867 = vpop.f32.mrb[0].mxu0
        %2868 = vmatprep.mubr.bf16.mxu0 0
        %2869 = vmatmul.mubr.bf16.gmra.mrb[0].mxu0 %v2807
        %v2870 = vpop.f32.mrb[0].mxu0
        %v2871 = vadd.f32 0.0, %v2870
        %v2872 = vpop.f32.mrb[0].mxu0
        %v2873 = vpop.f32.mrb[0].mxu0
        %v2874 = vadd.f32 0.0, %v2873
        %v2875 = vpop.f32.mrb[0].mxu0
        %2876 = vmatprep.mubr.bf16.mxu0 0
        %2877 = vmatmul.mubr.bf16.gmra.mrb[0].mxu0 %v2810
        %v2878 = vpop.f32.mrb[0].mxu0
        %v2879 = vadd.f32 0.0, %v2878
        %v2880 = vpop.f32.mrb[0].mxu0
        %v2881 = vpop.f32.mrb[0].mxu0
        %v2882 = vadd.f32 0.0, %v2881
        %v2883 = vpop.f32.mrb[0].mxu0
        %2884 = vdwg.mxu0
        %v2886 = vsel %vm2228, %v2679, 0
        %v2889 = vsel %vm2228, %v2680, 0
        %v2892 = vsel %vm2228, %v2681, 0
        %v2895 = vsel %vm2228, %v2682, 0
        %v2898 = vsel %vm2228, %v2683, 0
        %2900 = vmatprep.subr.bf16.mxu0 0
        %2901 = vmatpush1.bf16.msra.mxu0 %v2699
        %2902 = vmatprep.subr.bf16.mxu0 0
        %2903 = vmatpush1.bf16.msra.mxu0 %v2700
        %2904 = vmatprep.subr.bf16.mxu0 0
        %2905 = vmatpush1.bf16.msra.mxu0 %v2701
        %2906 = vmatprep.subr.bf16.mxu0 0
        %2907 = vmatpush1.bf16.msra.mxu0 %v2702
        %2908 = vmatprep.subr.bf16.mxu0 0
        %2909 = vmatpush1.bf16.msra.mxu0 %v2703
        %2910 = vmatprep.subr.bf16.mxu0 0
        %2911 = vmatpush1.bf16.msra.mxu0 0
        %2912 = vmatprep.subr.bf16.mxu0 0
        %2913 = vmatpush1.bf16.msra.mxu0 0
        %2914 = vmatprep.subr.bf16.mxu0 0
        %2915 = vmatpush1.bf16.msra.mxu0 0
        %2916 = vmatprep.subr.bf16.mxu0 0
        %2917 = vmatpush1.bf16.msra.mxu0 0
        %2918 = vmatprep.subr.bf16.mxu0 0
        %2919 = vmatpush1.bf16.msra.mxu0 0
        %2920 = vmatprep.subr.bf16.mxu0 0
        %2921 = vmatpush1.bf16.msra.mxu0 0
        %2922 = vmatprep.subr.bf16.mxu0 0
        %2923 = vmatpush1.bf16.msra.mxu0 0
        %2924 = vmatprep.subr.bf16.mxu0 0
        %2925 = vmatpush1.bf16.msra.mxu0 0
        %2926 = vmatprep.subr.bf16.mxu0 0
        %2927 = vmatpush1.bf16.msra.mxu0 0
        %2928 = vmatprep.subr.bf16.mxu0 0
        %2929 = vmatpush1.bf16.msra.mxu0 0
        %2930 = vmatprep.subr.bf16.mxu0 0
        %2931 = vmatpush1.bf16.msra.mxu0 0
        %2932 = vmatprep.mubr.bf16.mxu0 0
        %2933 = vmatmul.mubr.bf16.gmra.mrb[0].mxu0 %v2886
        %v2934 = vpop.f32.mrb[0].mxu0
        %v2935 = vadd.f32 0.0, %v2934
        %v2936 = vpop.f32.mrb[0].mxu0
        %v2937 = vpop.f32.mrb[0].mxu0
        %v2938 = vadd.f32 0.0, %v2937
        %v2939 = vpop.f32.mrb[0].mxu0
        %2940 = vmatprep.mubr.bf16.mxu0 0
        %2941 = vmatmul.mubr.bf16.gmra.mrb[0].mxu0 %v2889
        %v2942 = vpop.f32.mrb[0].mxu0
        %v2943 = vadd.f32 0.0, %v2942
        %v2944 = vpop.f32.mrb[0].mxu0
        %v2945 = vpop.f32.mrb[0].mxu0
        %v2946 = vadd.f32 0.0, %v2945
        %v2947 = vpop.f32.mrb[0].mxu0
        %2948 = vmatprep.mubr.bf16.mxu0 0
        %2949 = vmatmul.mubr.bf16.gmra.mrb[0].mxu0 %v2892
        %v2950 = vpop.f32.mrb[0].mxu0
        %v2951 = vadd.f32 0.0, %v2950
        %v2952 = vpop.f32.mrb[0].mxu0
        %v2953 = vpop.f32.mrb[0].mxu0
        %v2954 = vadd.f32 0.0, %v2953
        %v2955 = vpop.f32.mrb[0].mxu0
        %2956 = vmatprep.mubr.bf16.mxu0 0
        %2957 = vmatmul.mubr.bf16.gmra.mrb[0].mxu0 %v2895
        %v2958 = vpop.f32.mrb[0].mxu0
        %v2959 = vadd.f32 0.0, %v2958
        %v2960 = vpop.f32.mrb[0].mxu0
        %v2961 = vpop.f32.mrb[0].mxu0
        %v2962 = vadd.f32 0.0, %v2961
        %v2963 = vpop.f32.mrb[0].mxu0
        %2964 = vmatprep.mubr.bf16.mxu0 0
        %2965 = vmatmul.mubr.bf16.gmra.mrb[0].mxu0 %v2898
        %v2966 = vpop.f32.mrb[0].mxu0
        %v2967 = vadd.f32 0.0, %v2966
        %v2968 = vpop.f32.mrb[0].mxu0
        %v2969 = vpop.f32.mrb[0].mxu0
        %v2970 = vadd.f32 0.0, %v2969
        %v2971 = vpop.f32.mrb[0].mxu0
        %2972 = vdwg.mxu0
        %v2974 = vsel %vm2228, %v2684, 0
        %v2977 = vsel %vm2228, %v2685, 0
        %v2980 = vsel %vm2228, %v2686, 0
        %v2983 = vsel %vm2228, %v2687, 0
        %v2986 = vsel %vm2228, %v2688, 0
        %2988 = vmatprep.subr.bf16.mxu0 0
        %2989 = vmatpush1.bf16.msra.mxu0 %v2704
        %2990 = vmatprep.subr.bf16.mxu0 0
        %2991 = vmatpush1.bf16.msra.mxu0 %v2705
        %2992 = vmatprep.subr.bf16.mxu0 0
        %2993 = vmatpush1.bf16.msra.mxu0 %v2706
        %2994 = vmatprep.subr.bf16.mxu0 0
        %2995 = vmatpush1.bf16.msra.mxu0 %v2707
        %2996 = vmatprep.subr.bf16.mxu0 0
        %2997 = vmatpush1.bf16.msra.mxu0 %v2708
        %2998 = vmatprep.subr.bf16.mxu0 0
        %2999 = vmatpush1.bf16.msra.mxu0 0
        %3000 = vmatprep.subr.bf16.mxu0 0
        %3001 = vmatpush1.bf16.msra.mxu0 0
        %3002 = vmatprep.subr.bf16.mxu0 0
        %3003 = vmatpush1.bf16.msra.mxu0 0
        %3004 = vmatprep.subr.bf16.mxu0 0
        %3005 = vmatpush1.bf16.msra.mxu0 0
        %3006 = vmatprep.subr.bf16.mxu0 0
        %3007 = vmatpush1.bf16.msra.mxu0 0
        %3008 = vmatprep.subr.bf16.mxu0 0
        %3009 = vmatpush1.bf16.msra.mxu0 0
        %3010 = vmatprep.subr.bf16.mxu0 0
        %3011 = vmatpush1.bf16.msra.mxu0 0
        %3012 = vmatprep.subr.bf16.mxu0 0
        %3013 = vmatpush1.bf16.msra.mxu0 0
        %3014 = vmatprep.subr.bf16.mxu0 0
        %3015 = vmatpush1.bf16.msra.mxu0 0
        %3016 = vmatprep.subr.bf16.mxu0 0
        %3017 = vmatpush1.bf16.msra.mxu0 0
        %3018 = vmatprep.subr.bf16.mxu0 0
        %3019 = vmatpush1.bf16.msra.mxu0 0
        %3020 = vmatprep.mubr.bf16.mxu0 0
        %3021 = vmatmul.mubr.bf16.gmra.mrb[0].mxu0 %v2974
        %v3022 = vpop.f32.mrb[0].mxu0
        %v3023 = vadd.f32 0.0, %v3022
        %v3024 = vpop.f32.mrb[0].mxu0
        %v3025 = vpop.f32.mrb[0].mxu0
        %v3026 = vadd.f32 0.0, %v3025
        %v3027 = vpop.f32.mrb[0].mxu0
        %3028 = vmatprep.mubr.bf16.mxu0 0
        %3029 = vmatmul.mubr.bf16.gmra.mrb[0].mxu0 %v2977
        %v3030 = vpop.f32.mrb[0].mxu0
        %v3031 = vadd.f32 0.0, %v3030
        %v3032 = vpop.f32.mrb[0].mxu0
        %v3033 = vpop.f32.mrb[0].mxu0
        %v3034 = vadd.f32 0.0, %v3033
        %v3035 = vpop.f32.mrb[0].mxu0
        %3036 = vmatprep.mubr.bf16.mxu0 0
        %3037 = vmatmul.mubr.bf16.gmra.mrb[0].mxu0 %v2980
        %v3038 = vpop.f32.mrb[0].mxu0
        %v3039 = vadd.f32 0.0, %v3038
        %v3040 = vpop.f32.mrb[0].mxu0
        %v3041 = vpop.f32.mrb[0].mxu0
        %v3042 = vadd.f32 0.0, %v3041
        %v3043 = vpop.f32.mrb[0].mxu0
        %3044 = vmatprep.mubr.bf16.mxu0 0
        %3045 = vmatmul.mubr.bf16.gmra.mrb[0].mxu0 %v2983
        %v3046 = vpop.f32.mrb[0].mxu0
        %v3047 = vadd.f32 0.0, %v3046
        %v3048 = vpop.f32.mrb[0].mxu0
        %v3049 = vpop.f32.mrb[0].mxu0
        %v3050 = vadd.f32 0.0, %v3049
        %v3051 = vpop.f32.mrb[0].mxu0
        %3052 = vmatprep.mubr.bf16.mxu0 0
        %3053 = vmatmul.mubr.bf16.gmra.mrb[0].mxu0 %v2986
        %v3054 = vpop.f32.mrb[0].mxu0
        %v3055 = vadd.f32 0.0, %v3054
        %v3056 = vpop.f32.mrb[0].mxu0
        %v3057 = vpop.f32.mrb[0].mxu0
        %v3058 = vadd.f32 0.0, %v3057
        %v3059 = vpop.f32.mrb[0].mxu0
        %3060 = vdwg.mxu0
        %3061 = vst.msk [vmem:[#allocation3] sm:$0xff] %vm1725, %v2759
        %3062 = vst.msk [vmem:[#allocation3 + $0x8] sm:$0xff] %vm1725, %v2762
        %3063 = vst.msk [vmem:[#allocation3 + $0x10] sm:$0xff] %vm1725, %v2767
        %3064 = vst.msk [vmem:[#allocation3 + $0x18] sm:$0xff] %vm1725, %v2770
        %3065 = vst.msk [vmem:[#allocation3 + $0x20] sm:$0xff] %vm1725, %v2775
        %3066 = vst.msk [vmem:[#allocation3 + $0x28] sm:$0xff] %vm1725, %v2778
        %3067 = vst.msk [vmem:[#allocation3 + $0x30] sm:$0xff] %vm1725, %v2783
        %3068 = vst.msk [vmem:[#allocation3 + $0x38] sm:$0xff] %vm1725, %v2786
        %3069 = vst.msk [vmem:[#allocation3 + $0x40] sm:$0xff] %vm1725, %v2791
        %3070 = vst.msk [vmem:[#allocation3 + $0x48] sm:$0xff] %vm1725, %v2794
        %3081 = vrot.lane.b32.xlu0 %v2847, 32
        %v3082 = vpop.permute.xlu0 %3081
        %3083 = vrot.lane.b32.xlu0 %v2850, 32
        %v3084 = vpop.permute.xlu0 %3083
        %3085 = vrot.lane.b32.xlu0 %v2855, 32
        %v3086 = vpop.permute.xlu0 %3085
        %3087 = vrot.lane.b32.xlu0 %v2858, 32
        %v3088 = vpop.permute.xlu0 %3087
        %3089 = vrot.lane.b32.xlu0 %v2863, 32
        %v3090 = vpop.permute.xlu0 %3089
        %3091 = vrot.lane.b32.xlu0 %v2866, 32
        %v3092 = vpop.permute.xlu0 %3091
        %3093 = vrot.lane.b32.xlu0 %v2871, 32
        %v3094 = vpop.permute.xlu0 %3093
        %3095 = vrot.lane.b32.xlu0 %v2874, 32
        %v3096 = vpop.permute.xlu0 %3095
        %3097 = vrot.lane.b32.xlu0 %v2879, 32
        %v3098 = vpop.permute.xlu0 %3097
        %3099 = vrot.lane.b32.xlu0 %v2882, 32
        %v3100 = vpop.permute.xlu0 %3099
        %vm3111 = vcmask 523520
        %3112 = vst.msk [vmem:[#allocation3] sm:$0xff] %vm3111, %v3082
        %3113 = vst.msk [vmem:[#allocation3 + $0x8] sm:$0xff] %vm3111, %v3084
        %3114 = vst.msk [vmem:[#allocation3 + $0x10] sm:$0xff] %vm3111, %v3086
        %3115 = vst.msk [vmem:[#allocation3 + $0x18] sm:$0xff] %vm3111, %v3088
        %3116 = vst.msk [vmem:[#allocation3 + $0x20] sm:$0xff] %vm3111, %v3090
        %3117 = vst.msk [vmem:[#allocation3 + $0x28] sm:$0xff] %vm3111, %v3092
        %3118 = vst.msk [vmem:[#allocation3 + $0x30] sm:$0xff] %vm3111, %v3094
        %3119 = vst.msk [vmem:[#allocation3 + $0x38] sm:$0xff] %vm3111, %v3096
        %3120 = vst.msk [vmem:[#allocation3 + $0x40] sm:$0xff] %vm3111, %v3098
        %3121 = vst.msk [vmem:[#allocation3 + $0x48] sm:$0xff] %vm3111, %v3100
        %3132 = vrot.lane.b32.xlu0 %v2935, 64
        %v3133 = vpop.permute.xlu0 %3132
        %3134 = vrot.lane.b32.xlu0 %v2938, 64
        %v3135 = vpop.permute.xlu0 %3134
        %3136 = vrot.lane.b32.xlu0 %v2943, 64
        %v3137 = vpop.permute.xlu0 %3136
        %3138 = vrot.lane.b32.xlu0 %v2946, 64
        %v3139 = vpop.permute.xlu0 %3138
        %3140 = vrot.lane.b32.xlu0 %v2951, 64
        %v3141 = vpop.permute.xlu0 %3140
        %3142 = vrot.lane.b32.xlu0 %v2954, 64
        %v3143 = vpop.permute.xlu0 %3142
        %3144 = vrot.lane.b32.xlu0 %v2959, 64
        %v3145 = vpop.permute.xlu0 %3144
        %3146 = vrot.lane.b32.xlu0 %v2962, 64
        %v3147 = vpop.permute.xlu0 %3146
        %3148 = vrot.lane.b32.xlu0 %v2967, 64
        %v3149 = vpop.permute.xlu0 %3148
        %3150 = vrot.lane.b32.xlu0 %v2970, 64
        %v3151 = vpop.permute.xlu0 %3150
        %vm3162 = vcmask 785920
        %3163 = vst.msk [vmem:[#allocation3] sm:$0xff] %vm3162, %v3133
        %3164 = vst.msk [vmem:[#allocation3 + $0x8] sm:$0xff] %vm3162, %v3135
        %3165 = vst.msk [vmem:[#allocation3 + $0x10] sm:$0xff] %vm3162, %v3137
        %3166 = vst.msk [vmem:[#allocation3 + $0x18] sm:$0xff] %vm3162, %v3139
        %3167 = vst.msk [vmem:[#allocation3 + $0x20] sm:$0xff] %vm3162, %v3141
        %3168 = vst.msk [vmem:[#allocation3 + $0x28] sm:$0xff] %vm3162, %v3143
        %3169 = vst.msk [vmem:[#allocation3 + $0x30] sm:$0xff] %vm3162, %v3145
        %3170 = vst.msk [vmem:[#allocation3 + $0x38] sm:$0xff] %vm3162, %v3147
        %3171 = vst.msk [vmem:[#allocation3 + $0x40] sm:$0xff] %vm3162, %v3149
        %3172 = vst.msk [vmem:[#allocation3 + $0x48] sm:$0xff] %vm3162, %v3151
        %3183 = vrot.lane.b32.xlu0 %v3023, 96
        %v3184 = vpop.permute.xlu0 %3183
        %3185 = vrot.lane.b32.xlu0 %v3026, 96
        %v3186 = vpop.permute.xlu0 %3185
        %3187 = vrot.lane.b32.xlu0 %v3031, 96
        %v3188 = vpop.permute.xlu0 %3187
        %3189 = vrot.lane.b32.xlu0 %v3034, 96
        %v3190 = vpop.permute.xlu0 %3189
        %3191 = vrot.lane.b32.xlu0 %v3039, 96
        %v3192 = vpop.permute.xlu0 %3191
        %3193 = vrot.lane.b32.xlu0 %v3042, 96
        %v3194 = vpop.permute.xlu0 %3193
        %3195 = vrot.lane.b32.xlu0 %v3047, 96
        %v3196 = vpop.permute.xlu0 %3195
        %3197 = vrot.lane.b32.xlu0 %v3050, 96
        %v3198 = vpop.permute.xlu0 %3197
        %3199 = vrot.lane.b32.xlu0 %v3055, 96
        %v3200 = vpop.permute.xlu0 %3199
        %3201 = vrot.lane.b32.xlu0 %v3058, 96
        %v3202 = vpop.permute.xlu0 %3201
        %vm3213 = vcmask 1048320
        %3214 = vst.msk [vmem:[#allocation3] sm:$0xff] %vm3213, %v3184
        %3215 = vst.msk [vmem:[#allocation3 + $0x8] sm:$0xff] %vm3213, %v3186
        %3216 = vst.msk [vmem:[#allocation3 + $0x10] sm:$0xff] %vm3213, %v3188
        %3217 = vst.msk [vmem:[#allocation3 + $0x18] sm:$0xff] %vm3213, %v3190
        %3218 = vst.msk [vmem:[#allocation3 + $0x20] sm:$0xff] %vm3213, %v3192
        %3219 = vst.msk [vmem:[#allocation3 + $0x28] sm:$0xff] %vm3213, %v3194
        %3220 = vst.msk [vmem:[#allocation3 + $0x30] sm:$0xff] %vm3213, %v3196
        %3221 = vst.msk [vmem:[#allocation3 + $0x38] sm:$0xff] %vm3213, %v3198
        %3222 = vst.msk [vmem:[#allocation3 + $0x40] sm:$0xff] %vm3213, %v3200
        %3223 = vst.msk [vmem:[#allocation3 + $0x48] sm:$0xff] %vm3213, %v3202
        %v3224 = vld [vmem:[#allocation3] sm:$0xff]
        %v3225 = vld [vmem:[#allocation3 + $0x8] sm:$0xff]
        %v3226 = vld [vmem:[#allocation3 + $0x10] sm:$0xff]
        %v3227 = vld [vmem:[#allocation3 + $0x18] sm:$0xff]
        %v3228 = vld [vmem:[#allocation3 + $0x20] sm:$0xff]
        %v3229 = vld [vmem:[#allocation3 + $0x28] sm:$0xff]
        %v3230 = vld [vmem:[#allocation3 + $0x30] sm:$0xff]
        %v3231 = vld [vmem:[#allocation3 + $0x38] sm:$0xff]
        %v3232 = vld [vmem:[#allocation3 + $0x40] sm:$0xff]
        %v3233 = vld [vmem:[#allocation3 + $0x48] sm:$0xff]
        %v3234 = vpack.c.bf16 %v3225, %v3224
        %v3235 = vpack.c.bf16 %v3227, %v3226
        %v3236 = vpack.c.bf16 %v3229, %v3228
        %v3237 = vpack.c.bf16 %v3231, %v3230
        %v3238 = vpack.c.bf16 %v3233, %v3232
        %v3239 = vld [vmem:[%s732] sm:$0xf]
        %v3240 = vld [vmem:[%s732 + $0x4] sm:$0xf]
        %v3241 = vld [vmem:[%s732 + $0x8] sm:$0xf]
        %v3242 = vld [vmem:[%s732 + $0xc] sm:$0xf]
        %v3243 = vld [vmem:[%s732 + $0x10] sm:$0xf]
        %v3244 = vld [vmem:[%s732 + $0x14] sm:$0xf]
        %v3245 = vld [vmem:[%s732 + $0x18] sm:$0xf]
        %v3246 = vld [vmem:[%s732 + $0x1c] sm:$0xf]
        %v3247 = vld [vmem:[%s732 + $0x20] sm:$0xf]
        %v3248 = vld [vmem:[%s732 + $0x24] sm:$0xf]
        %v3249 = vld [vmem:[%s732 + $0x28] sm:$0xf]
        %v3250 = vld [vmem:[%s732 + $0x2c] sm:$0xf]
        %v3251 = vld [vmem:[%s732 + $0x30] sm:$0xf]
        %v3252 = vld [vmem:[%s732 + $0x34] sm:$0xf]
        %v3253 = vld [vmem:[%s732 + $0x38] sm:$0xf]
        %v3254 = vld [vmem:[%s732 + $0x3c] sm:$0xf]
        %v3255 = vld [vmem:[%s853] sm:$0x1]
        %v3257 = vlaneseq
        %v3258 = vshrl.u32 %v3257, 7
        %v3259 = vsub.s32 0, %v3258
        %v3260 = vrot.slane %v3255, %v3259
        %v3278 = vunpack.c.l.b16 %v3239
        %v3279 = vunpack.c.l.b16 %v3240
        %v3280 = vunpack.c.l.b16 %v3241
        %v3281 = vunpack.c.l.b16 %v3242
        %v3282 = vunpack.c.l.b16 %v3243
        %v3283 = vunpack.c.l.b16 %v3244
        %v3284 = vunpack.c.l.b16 %v3245
        %v3285 = vunpack.c.l.b16 %v3246
        %v3286 = vunpack.c.l.b16 %v3247
        %v3287 = vunpack.c.l.b16 %v3248
        %v3288 = vunpack.c.l.b16 %v3249
        %v3289 = vunpack.c.l.b16 %v3250
        %v3290 = vunpack.c.l.b16 %v3251
        %v3291 = vunpack.c.l.b16 %v3252
        %v3292 = vunpack.c.l.b16 %v3253
        %v3293 = vunpack.c.l.b16 %v3254
        %v3294 = vpack.c.b16 %v3279, %v3278
        %v3295 = vpack.c.b16 %v3281, %v3280
        %v3296 = vpack.c.b16 %v3283, %v3282
        %v3297 = vpack.c.b16 %v3285, %v3284
        %v3298 = vpack.c.b16 %v3287, %v3286
        %v3299 = vpack.c.b16 %v3289, %v3288
        %v3300 = vpack.c.b16 %v3291, %v3290
        %v3301 = vpack.c.b16 %v3293, %v3292
        %3310 = vmatprep.subr.bf16.mxu0 0
        %3311 = vmatpush1.bf16.msra.mxu0 %v3294
        %3312 = vmatprep.subr.bf16.mxu0 0
        %3313 = vmatpush1.bf16.msra.mxu0 %v3295
        %3314 = vmatprep.subr.bf16.mxu0 0
        %3315 = vmatpush1.bf16.msra.mxu0 %v3296
        %3316 = vmatprep.subr.bf16.mxu0 0
        %3317 = vmatpush1.bf16.msra.mxu0 %v3297
        %3318 = vmatprep.subr.bf16.mxu0 0
        %3319 = vmatpush1.bf16.msra.mxu0 %v3298
        %3320 = vmatprep.subr.bf16.mxu0 0
        %3321 = vmatpush1.bf16.msra.mxu0 %v3299
        %3322 = vmatprep.subr.bf16.mxu0 0
        %3323 = vmatpush1.bf16.msra.mxu0 %v3300
        %3324 = vmatprep.subr.bf16.mxu0 0
        %3325 = vmatpush1.bf16.msra.mxu0 %v3301
        %3326 = vmatprep.subr.bf16.mxu0 0
        %3327 = vmatpush1.bf16.msra.mxu0 0
        %3328 = vmatprep.subr.bf16.mxu0 0
        %3329 = vmatpush1.bf16.msra.mxu0 0
        %3330 = vmatprep.subr.bf16.mxu0 0
        %3331 = vmatpush1.bf16.msra.mxu0 0
        %3332 = vmatprep.subr.bf16.mxu0 0
        %3333 = vmatpush1.bf16.msra.mxu0 0
        %3334 = vmatprep.subr.bf16.mxu0 0
        %3335 = vmatpush1.bf16.msra.mxu0 0
        %3336 = vmatprep.subr.bf16.mxu0 0
        %3337 = vmatpush1.bf16.msra.mxu0 0
        %3338 = vmatprep.subr.bf16.mxu0 0
        %3339 = vmatpush1.bf16.msra.mxu0 0
        %3340 = vmatprep.subr.bf16.mxu0 0
        %3341 = vmatpush1.bf16.msra.mxu0 0
        %3342 = vmatprep.mubr.bf16.mxu0 0
        %3343 = vmatmul.mubr.bf16.gmra.mrb[0].mxu0 %v3234
        %v3344 = vpop.f32.mrb[0].mxu0
        %v3345 = vadd.f32 %v3260, %v3344
        %v3346 = vpop.f32.mrb[0].mxu0
        %v3347 = vpop.f32.mrb[0].mxu0
        %v3348 = vadd.f32 %v3260, %v3347
        %v3349 = vpop.f32.mrb[0].mxu0
        %3350 = vmatprep.mubr.bf16.mxu0 0
        %3351 = vmatmul.mubr.bf16.gmra.mrb[0].mxu0 %v3235
        %v3352 = vpop.f32.mrb[0].mxu0
        %v3353 = vadd.f32 %v3260, %v3352
        %v3354 = vpop.f32.mrb[0].mxu0
        %v3355 = vpop.f32.mrb[0].mxu0
        %v3356 = vadd.f32 %v3260, %v3355
        %v3357 = vpop.f32.mrb[0].mxu0
        %3358 = vmatprep.mubr.bf16.mxu0 0
        %3359 = vmatmul.mubr.bf16.gmra.mrb[0].mxu0 %v3236
        %v3360 = vpop.f32.mrb[0].mxu0
        %v3361 = vadd.f32 %v3260, %v3360
        %v3362 = vpop.f32.mrb[0].mxu0
        %v3363 = vpop.f32.mrb[0].mxu0
        %v3364 = vadd.f32 %v3260, %v3363
        %v3365 = vpop.f32.mrb[0].mxu0
        %3366 = vmatprep.mubr.bf16.mxu0 0
        %3367 = vmatmul.mubr.bf16.gmra.mrb[0].mxu0 %v3237
        %v3368 = vpop.f32.mrb[0].mxu0
        %v3369 = vadd.f32 %v3260, %v3368
        %v3370 = vpop.f32.mrb[0].mxu0
        %v3371 = vpop.f32.mrb[0].mxu0
        %v3372 = vadd.f32 %v3260, %v3371
        %v3373 = vpop.f32.mrb[0].mxu0
        %3374 = vmatprep.mubr.bf16.mxu0 0
        %3375 = vmatmul.mubr.bf16.gmra.mrb[0].mxu0 %v3238
        %v3376 = vpop.f32.mrb[0].mxu0
        %v3377 = vadd.f32 %v3260, %v3376
        %v3378 = vpop.f32.mrb[0].mxu0
        %v3379 = vpop.f32.mrb[0].mxu0
        %v3380 = vadd.f32 %v3260, %v3379
        %v3381 = vpop.f32.mrb[0].mxu0
        %3382 = vdwg.mxu0
        %v3383 = vadd.f32 %v3345, %v892
        %v3384 = vadd.f32 %v3348, %v893
        %v3385 = vadd.f32 %v3353, %v894
        %v3386 = vadd.f32 %v3356, %v895
        %v3387 = vadd.f32 %v3361, %v896
        %v3388 = vadd.f32 %v3364, %v897
        %v3389 = vadd.f32 %v3369, %v898
        %v3390 = vadd.f32 %v3372, %v899
        %v3391 = vadd.f32 %v3377, %v900
        %v3392 = vadd.f32 %v3380, %v901
        %v3393 = vld [vmem:[%s856] sm:$0x1]
        %v3394 = vld [vmem:[%s859] sm:$0x1]
        %3395 = vadd.xlane.f32.xlu0 %v3383
        %v3396 = vpop.xlane.xlu0 %3395
        %3397 = vadd.xlane.f32.xlu0 %v3384
        %v3398 = vpop.xlane.xlu0 %3397
        %3399 = vadd.xlane.f32.xlu0 %v3385
        %v3400 = vpop.xlane.xlu0 %3399
        %3401 = vadd.xlane.f32.xlu0 %v3386
        %v3402 = vpop.xlane.xlu0 %3401
        %3403 = vadd.xlane.f32.xlu0 %v3387
        %v3404 = vpop.xlane.xlu0 %3403
        %3405 = vadd.xlane.f32.xlu0 %v3388
        %v3406 = vpop.xlane.xlu0 %3405
        %3407 = vadd.xlane.f32.xlu0 %v3389
        %v3408 = vpop.xlane.xlu0 %3407
        %3409 = vadd.xlane.f32.xlu0 %v3390
        %v3410 = vpop.xlane.xlu0 %3409
        %3411 = vadd.xlane.f32.xlu0 %v3391
        %v3412 = vpop.xlane.xlu0 %3411
        %3413 = vadd.xlane.f32.xlu0 %v3392
        %v3414 = vpop.xlane.xlu0 %3413
        %v3415 = vmul.f32 %v3396, %v924
        %v3416 = vmul.f32 %v3398, %v924
        %v3417 = vmul.f32 %v3400, %v924
        %v3418 = vmul.f32 %v3402, %v924
        %v3419 = vmul.f32 %v3404, %v924
        %v3420 = vmul.f32 %v3406, %v924
        %v3421 = vmul.f32 %v3408, %v924
        %v3422 = vmul.f32 %v3410, %v924
        %v3423 = vmul.f32 %v3412, %v924
        %v3424 = vmul.f32 %v3414, %v924
        %v3425 = vsub.f32 %v3383, %v3415
        %v3426 = vsub.f32 %v3384, %v3416
        %v3427 = vsub.f32 %v3385, %v3417
        %v3428 = vsub.f32 %v3386, %v3418
        %v3429 = vsub.f32 %v3387, %v3419
        %v3430 = vsub.f32 %v3388, %v3420
        %v3431 = vsub.f32 %v3389, %v3421
        %v3432 = vsub.f32 %v3390, %v3422
        %v3433 = vsub.f32 %v3391, %v3423
        %v3434 = vsub.f32 %v3392, %v3424
        %v3435 = vmul.f32 %v3425, %v3425
        %v3436 = vmul.f32 %v3426, %v3426
        %v3437 = vmul.f32 %v3427, %v3427
        %v3438 = vmul.f32 %v3428, %v3428
        %v3439 = vmul.f32 %v3429, %v3429
        %v3440 = vmul.f32 %v3430, %v3430
        %v3441 = vmul.f32 %v3431, %v3431
        %v3442 = vmul.f32 %v3432, %v3432
        %v3443 = vmul.f32 %v3433, %v3433
        %v3444 = vmul.f32 %v3434, %v3434
        %3445 = vadd.xlane.f32.xlu0 %v3435
        %v3446 = vpop.xlane.xlu0 %3445
        %3447 = vadd.xlane.f32.xlu0 %v3436
        %v3448 = vpop.xlane.xlu0 %3447
        %3449 = vadd.xlane.f32.xlu0 %v3437
        %v3450 = vpop.xlane.xlu0 %3449
        %3451 = vadd.xlane.f32.xlu0 %v3438
        %v3452 = vpop.xlane.xlu0 %3451
        %3453 = vadd.xlane.f32.xlu0 %v3439
        %v3454 = vpop.xlane.xlu0 %3453
        %3455 = vadd.xlane.f32.xlu0 %v3440
        %v3456 = vpop.xlane.xlu0 %3455
        %3457 = vadd.xlane.f32.xlu0 %v3441
        %v3458 = vpop.xlane.xlu0 %3457
        %3459 = vadd.xlane.f32.xlu0 %v3442
        %v3460 = vpop.xlane.xlu0 %3459
        %3461 = vadd.xlane.f32.xlu0 %v3443
        %v3462 = vpop.xlane.xlu0 %3461
        %3463 = vadd.xlane.f32.xlu0 %v3444
        %v3464 = vpop.xlane.xlu0 %3463
        %v3465 = vmul.f32 %v3446, %v924
        %v3466 = vmul.f32 %v3448, %v924
        %v3467 = vmul.f32 %v3450, %v924
        %v3468 = vmul.f32 %v3452, %v924
        %v3469 = vmul.f32 %v3454, %v924
        %v3470 = vmul.f32 %v3456, %v924
        %v3471 = vmul.f32 %v3458, %v924
        %v3472 = vmul.f32 %v3460, %v924
        %v3473 = vmul.f32 %v3462, %v924
        %v3474 = vmul.f32 %v3464, %v924
        %v3475 = vadd.f32 %v3465, 1e-05
        %v3476 = vadd.f32 %v3466, 1e-05
        %v3477 = vadd.f32 %v3467, 1e-05
        %v3478 = vadd.f32 %v3468, 1e-05
        %v3479 = vadd.f32 %v3469, 1e-05
        %v3480 = vadd.f32 %v3470, 1e-05
        %v3481 = vadd.f32 %v3471, 1e-05
        %v3482 = vadd.f32 %v3472, 1e-05
        %v3483 = vadd.f32 %v3473, 1e-05
        %v3484 = vadd.f32 %v3474, 1e-05
        %v3485 = vrsqrt.pop %v3475
        %v3486 = vrsqrt.pop %v3476
        %v3487 = vrsqrt.pop %v3477
        %v3488 = vrsqrt.pop %v3478
        %v3489 = vrsqrt.pop %v3479
        %v3490 = vrsqrt.pop %v3480
        %v3491 = vrsqrt.pop %v3481
        %v3492 = vrsqrt.pop %v3482
        %v3493 = vrsqrt.pop %v3483
        %v3494 = vrsqrt.pop %v3484
        %v3495 = vmul.f32 %v3425, %v3485
        %v3496 = vmul.f32 %v3426, %v3486
        %v3497 = vmul.f32 %v3427, %v3487
        %v3498 = vmul.f32 %v3428, %v3488
        %v3499 = vmul.f32 %v3429, %v3489
        %v3500 = vmul.f32 %v3430, %v3490
        %v3501 = vmul.f32 %v3431, %v3491
        %v3502 = vmul.f32 %v3432, %v3492
        %v3503 = vmul.f32 %v3433, %v3493
        %v3504 = vmul.f32 %v3434, %v3494
        %v3506 = vlaneseq
        %v3507 = vshrl.u32 %v3506, 7
        %v3508 = vsub.s32 0, %v3507
        %v3509 = vrot.slane %v3393, %v3508
        %v3511 = vmul.f32 %v3495, %v3509
        %v3512 = vmul.f32 %v3496, %v3509
        %v3513 = vmul.f32 %v3497, %v3509
        %v3514 = vmul.f32 %v3498, %v3509
        %v3515 = vmul.f32 %v3499, %v3509
        %v3516 = vmul.f32 %v3500, %v3509
        %v3517 = vmul.f32 %v3501, %v3509
        %v3518 = vmul.f32 %v3502, %v3509
        %v3519 = vmul.f32 %v3503, %v3509
        %v3520 = vmul.f32 %v3504, %v3509
        %v3522 = vlaneseq
        %v3523 = vshrl.u32 %v3522, 7
        %v3524 = vsub.s32 0, %v3523
        %v3525 = vrot.slane %v3394, %v3524
        %v3527 = vadd.f32 %v3511, %v3525
        %v3528 = vadd.f32 %v3512, %v3525
        %v3529 = vadd.f32 %v3513, %v3525
        %v3530 = vadd.f32 %v3514, %v3525
        %v3531 = vadd.f32 %v3515, %v3525
        %v3532 = vadd.f32 %v3516, %v3525
        %v3533 = vadd.f32 %v3517, %v3525
        %v3534 = vadd.f32 %v3518, %v3525
        %v3535 = vadd.f32 %v3519, %v3525
        %v3536 = vadd.f32 %v3520, %v3525
        %v3537 = vpack.c.bf16 %v3528, %v3527
        %v3538 = vpack.c.bf16 %v3530, %v3529
        %v3539 = vpack.c.bf16 %v3532, %v3531
        %v3540 = vpack.c.bf16 %v3534, %v3533
        %v3541 = vpack.c.bf16 %v3536, %v3535
        %v3542 = vld [vmem:[%s741] sm:$0xff]
        %v3543 = vld [vmem:[%s741 + $0x8] sm:$0xff]
        %v3544 = vld [vmem:[%s741 + $0x10] sm:$0xff]
        %v3545 = vld [vmem:[%s741 + $0x18] sm:$0xff]
        %v3546 = vld [vmem:[%s741 + $0x20] sm:$0xff]
        %v3547 = vld [vmem:[%s741 + $0x28] sm:$0xff]
        %v3548 = vld [vmem:[%s741 + $0x30] sm:$0xff]
        %v3549 = vld [vmem:[%s741 + $0x38] sm:$0xff]
        %v3550 = vld [vmem:[%s741 + $0x40] sm:$0xff]
        %v3551 = vld [vmem:[%s741 + $0x48] sm:$0xff]
        %v3552 = vld [vmem:[%s741 + $0x50] sm:$0xff]
        %v3553 = vld [vmem:[%s741 + $0x58] sm:$0xff]
        %v3554 = vld [vmem:[%s741 + $0x60] sm:$0xff]
        %v3555 = vld [vmem:[%s741 + $0x68] sm:$0xff]
        %v3556 = vld [vmem:[%s741 + $0x70] sm:$0xff]
        %v3557 = vld [vmem:[%s741 + $0x78] sm:$0xff]
        %v3558 = vld [vmem:[%s741 + $0x80] sm:$0xff]
        %v3559 = vld [vmem:[%s741 + $0x88] sm:$0xff]
        %v3560 = vld [vmem:[%s741 + $0x90] sm:$0xff]
        %v3561 = vld [vmem:[%s741 + $0x98] sm:$0xff]
        %v3562 = vld [vmem:[%s741 + $0xa0] sm:$0xff]
        %v3563 = vld [vmem:[%s741 + $0xa8] sm:$0xff]
        %v3564 = vld [vmem:[%s741 + $0xb0] sm:$0xff]
        %v3565 = vld [vmem:[%s741 + $0xb8] sm:$0xff]
        %v3566 = vld [vmem:[%s741 + $0xc0] sm:$0xff]
        %v3567 = vld [vmem:[%s741 + $0xc8] sm:$0xff]
        %v3568 = vld [vmem:[%s741 + $0xd0] sm:$0xff]
        %v3569 = vld [vmem:[%s741 + $0xd8] sm:$0xff]
        %v3570 = vld [vmem:[%s741 + $0xe0] sm:$0xff]
        %v3571 = vld [vmem:[%s741 + $0xe8] sm:$0xff]
        %v3572 = vld [vmem:[%s741 + $0xf0] sm:$0xff]
        %v3573 = vld [vmem:[%s741 + $0xf8] sm:$0xff]
        %v3574 = vld [vmem:[%s863] sm:$0xf]
        %v3576 = vlaneseq
        %v3577 = vshrl.u32 %v3576, 7
        %v3578 = vsub.s32 0, %v3577
        %v3579 = vrot.slane %v3574, %v3578
        %v3580 = vlaneseq
        %v3581 = vshrl.u32 %v3580, 7
        %v3582 = vsub.s32 1, %v3581
        %v3583 = vrot.slane %v3574, %v3582
        %v3584 = vlaneseq
        %v3585 = vshrl.u32 %v3584, 7
        %v3586 = vsub.s32 2, %v3585
        %v3587 = vrot.slane %v3574, %v3586
        %v3588 = vlaneseq
        %v3589 = vshrl.u32 %v3588, 7
        %v3590 = vsub.s32 3, %v3589
        %v3591 = vrot.slane %v3574, %v3590
        %v3628 = vunpack.c.l.b16 %v3542
        %v3629 = vunpack.c.h.b16 %v3542
        %v3630 = vunpack.c.l.b16 %v3543
        %v3631 = vunpack.c.h.b16 %v3543
        %v3632 = vunpack.c.l.b16 %v3544
        %v3633 = vunpack.c.h.b16 %v3544
        %v3634 = vunpack.c.l.b16 %v3545
        %v3635 = vunpack.c.h.b16 %v3545
        %v3636 = vunpack.c.l.b16 %v3546
        %v3637 = vunpack.c.h.b16 %v3546
        %v3638 = vunpack.c.l.b16 %v3547
        %v3639 = vunpack.c.h.b16 %v3547
        %v3640 = vunpack.c.l.b16 %v3548
        %v3641 = vunpack.c.h.b16 %v3548
        %v3642 = vunpack.c.l.b16 %v3549
        %v3643 = vunpack.c.h.b16 %v3549
        %v3644 = vunpack.c.l.b16 %v3550
        %v3645 = vunpack.c.h.b16 %v3550
        %v3646 = vunpack.c.l.b16 %v3551
        %v3647 = vunpack.c.h.b16 %v3551
        %v3648 = vunpack.c.l.b16 %v3552
        %v3649 = vunpack.c.h.b16 %v3552
        %v3650 = vunpack.c.l.b16 %v3553
        %v3651 = vunpack.c.h.b16 %v3553
        %v3652 = vunpack.c.l.b16 %v3554
        %v3653 = vunpack.c.h.b16 %v3554
        %v3654 = vunpack.c.l.b16 %v3555
        %v3655 = vunpack.c.h.b16 %v3555
        %v3656 = vunpack.c.l.b16 %v3556
        %v3657 = vunpack.c.h.b16 %v3556
        %v3658 = vunpack.c.l.b16 %v3557
        %v3659 = vunpack.c.h.b16 %v3557
        %v3660 = vunpack.c.l.b16 %v3558
        %v3661 = vunpack.c.h.b16 %v3558
        %v3662 = vunpack.c.l.b16 %v3559
        %v3663 = vunpack.c.h.b16 %v3559
        %v3664 = vunpack.c.l.b16 %v3560
        %v3665 = vunpack.c.h.b16 %v3560
        %v3666 = vunpack.c.l.b16 %v3561
        %v3667 = vunpack.c.h.b16 %v3561
        %v3668 = vunpack.c.l.b16 %v3562
        %v3669 = vunpack.c.h.b16 %v3562
        %v3670 = vunpack.c.l.b16 %v3563
        %v3671 = vunpack.c.h.b16 %v3563
        %v3672 = vunpack.c.l.b16 %v3564
        %v3673 = vunpack.c.h.b16 %v3564
        %v3674 = vunpack.c.l.b16 %v3565
        %v3675 = vunpack.c.h.b16 %v3565
        %v3676 = vunpack.c.l.b16 %v3566
        %v3677 = vunpack.c.h.b16 %v3566
        %v3678 = vunpack.c.l.b16 %v3567
        %v3679 = vunpack.c.h.b16 %v3567
        %v3680 = vunpack.c.l.b16 %v3568
        %v3681 = vunpack.c.h.b16 %v3568
        %v3682 = vunpack.c.l.b16 %v3569
        %v3683 = vunpack.c.h.b16 %v3569
        %v3684 = vunpack.c.l.b16 %v3570
        %v3685 = vunpack.c.h.b16 %v3570
        %v3686 = vunpack.c.l.b16 %v3571
        %v3687 = vunpack.c.h.b16 %v3571
        %v3688 = vunpack.c.l.b16 %v3572
        %v3689 = vunpack.c.h.b16 %v3572
        %v3690 = vunpack.c.l.b16 %v3573
        %v3691 = vunpack.c.h.b16 %v3573
        %v3692 = vpack.c.b16 %v3632, %v3628
        %v3693 = vpack.c.b16 %v3633, %v3629
        %v3694 = vpack.c.b16 %v3634, %v3630
        %v3695 = vpack.c.b16 %v3635, %v3631
        %v3696 = vpack.c.b16 %v3640, %v3636
        %v3697 = vpack.c.b16 %v3641, %v3637
        %v3698 = vpack.c.b16 %v3642, %v3638
        %v3699 = vpack.c.b16 %v3643, %v3639
        %v3700 = vpack.c.b16 %v3648, %v3644
        %v3701 = vpack.c.b16 %v3649, %v3645
        %v3702 = vpack.c.b16 %v3650, %v3646
        %v3703 = vpack.c.b16 %v3651, %v3647
        %v3704 = vpack.c.b16 %v3656, %v3652
        %v3705 = vpack.c.b16 %v3657, %v3653
        %v3706 = vpack.c.b16 %v3658, %v3654
        %v3707 = vpack.c.b16 %v3659, %v3655
        %v3708 = vpack.c.b16 %v3664, %v3660
        %v3709 = vpack.c.b16 %v3665, %v3661
        %v3710 = vpack.c.b16 %v3666, %v3662
        %v3711 = vpack.c.b16 %v3667, %v3663
        %v3712 = vpack.c.b16 %v3672, %v3668
        %v3713 = vpack.c.b16 %v3673, %v3669
        %v3714 = vpack.c.b16 %v3674, %v3670
        %v3715 = vpack.c.b16 %v3675, %v3671
        %v3716 = vpack.c.b16 %v3680, %v3676
        %v3717 = vpack.c.b16 %v3681, %v3677
        %v3718 = vpack.c.b16 %v3682, %v3678
        %v3719 = vpack.c.b16 %v3683, %v3679
        %v3720 = vpack.c.b16 %v3688, %v3684
        %v3721 = vpack.c.b16 %v3689, %v3685
        %v3722 = vpack.c.b16 %v3690, %v3686
        %v3723 = vpack.c.b16 %v3691, %v3687
        %3756 = vmatprep.subr.bf16.mxu0 %v3693
        %3757 = vmatpush1.bf16.msra.mxu0 %v3692
        %3758 = vmatprep.subr.bf16.mxu0 %v3697
        %3759 = vmatpush1.bf16.msra.mxu0 %v3696
        %3760 = vmatprep.subr.bf16.mxu0 %v3701
        %3761 = vmatpush1.bf16.msra.mxu0 %v3700
        %3762 = vmatprep.subr.bf16.mxu0 %v3705
        %3763 = vmatpush1.bf16.msra.mxu0 %v3704
        %3764 = vmatprep.subr.bf16.mxu0 %v3709
        %3765 = vmatpush1.bf16.msra.mxu0 %v3708
        %3766 = vmatprep.subr.bf16.mxu0 %v3713
        %3767 = vmatpush1.bf16.msra.mxu0 %v3712
        %3768 = vmatprep.subr.bf16.mxu0 %v3717
        %3769 = vmatpush1.bf16.msra.mxu0 %v3716
        %3770 = vmatprep.subr.bf16.mxu0 %v3721
        %3771 = vmatpush1.bf16.msra.mxu0 %v3720
        %3772 = vmatprep.subr.bf16.mxu0 0
        %3773 = vmatpush1.bf16.msra.mxu0 0
        %3774 = vmatprep.subr.bf16.mxu0 0
        %3775 = vmatpush1.bf16.msra.mxu0 0
        %3776 = vmatprep.subr.bf16.mxu0 0
        %3777 = vmatpush1.bf16.msra.mxu0 0
        %3778 = vmatprep.subr.bf16.mxu0 0
        %3779 = vmatpush1.bf16.msra.mxu0 0
        %3780 = vmatprep.subr.bf16.mxu0 0
        %3781 = vmatpush1.bf16.msra.mxu0 0
        %3782 = vmatprep.subr.bf16.mxu0 0
        %3783 = vmatpush1.bf16.msra.mxu0 0
        %3784 = vmatprep.subr.bf16.mxu0 0
        %3785 = vmatpush1.bf16.msra.mxu0 0
        %3786 = vmatprep.subr.bf16.mxu0 0
        %3787 = vmatpush1.bf16.msra.mxu0 0
        %3788 = vmatprep.mubr.bf16.mxu0 0
        %3789 = vmatmul.mubr.bf16.gmra.mrb[0].mxu0 %v3537
        %v3790 = vpop.f32.mrb[0].mxu0
        %v3791 = vadd.f32 %v3579, %v3790
        %v3792 = vpop.f32.mrb[0].mxu0
        %v3793 = vadd.f32 %v3583, %v3792
        %v3794 = vpop.f32.mrb[0].mxu0
        %v3795 = vadd.f32 %v3579, %v3794
        %v3796 = vpop.f32.mrb[0].mxu0
        %v3797 = vadd.f32 %v3583, %v3796
        %3798 = vmatprep.mubr.bf16.mxu0 0
        %3799 = vmatmul.mubr.bf16.gmra.mrb[0].mxu0 %v3538
        %v3800 = vpop.f32.mrb[0].mxu0
        %v3801 = vadd.f32 %v3579, %v3800
        %v3802 = vpop.f32.mrb[0].mxu0
        %v3803 = vadd.f32 %v3583, %v3802
        %v3804 = vpop.f32.mrb[0].mxu0
        %v3805 = vadd.f32 %v3579, %v3804
        %v3806 = vpop.f32.mrb[0].mxu0
        %v3807 = vadd.f32 %v3583, %v3806
        %3808 = vmatprep.mubr.bf16.mxu0 0
        %3809 = vmatmul.mubr.bf16.gmra.mrb[0].mxu0 %v3539
        %v3810 = vpop.f32.mrb[0].mxu0
        %v3811 = vadd.f32 %v3579, %v3810
        %v3812 = vpop.f32.mrb[0].mxu0
        %v3813 = vadd.f32 %v3583, %v3812
        %v3814 = vpop.f32.mrb[0].mxu0
        %v3815 = vadd.f32 %v3579, %v3814
        %v3816 = vpop.f32.mrb[0].mxu0
        %v3817 = vadd.f32 %v3583, %v3816
        %3818 = vmatprep.mubr.bf16.mxu0 0
        %3819 = vmatmul.mubr.bf16.gmra.mrb[0].mxu0 %v3540
        %v3820 = vpop.f32.mrb[0].mxu0
        %v3821 = vadd.f32 %v3579, %v3820
        %v3822 = vpop.f32.mrb[0].mxu0
        %v3823 = vadd.f32 %v3583, %v3822
        %v3824 = vpop.f32.mrb[0].mxu0
        %v3825 = vadd.f32 %v3579, %v3824
        %v3826 = vpop.f32.mrb[0].mxu0
        %v3827 = vadd.f32 %v3583, %v3826
        %3828 = vmatprep.mubr.bf16.mxu0 0
        %3829 = vmatmul.mubr.bf16.gmra.mrb[0].mxu0 %v3541
        %v3830 = vpop.f32.mrb[0].mxu0
        %v3831 = vadd.f32 %v3579, %v3830
        %v3832 = vpop.f32.mrb[0].mxu0
        %v3833 = vadd.f32 %v3583, %v3832
        %v3834 = vpop.f32.mrb[0].mxu0
        %v3835 = vadd.f32 %v3579, %v3834
        %v3836 = vpop.f32.mrb[0].mxu0
        %v3837 = vadd.f32 %v3583, %v3836
        %3838 = vdwg.mxu0
        %3839 = vmatprep.subr.bf16.mxu0 %v3695
        %3840 = vmatpush1.bf16.msra.mxu0 %v3694
        %3841 = vmatprep.subr.bf16.mxu0 %v3699
        %3842 = vmatpush1.bf16.msra.mxu0 %v3698
        %3843 = vmatprep.subr.bf16.mxu0 %v3703
        %3844 = vmatpush1.bf16.msra.mxu0 %v3702
        %3845 = vmatprep.subr.bf16.mxu0 %v3707
        %3846 = vmatpush1.bf16.msra.mxu0 %v3706
        %3847 = vmatprep.subr.bf16.mxu0 %v3711
        %3848 = vmatpush1.bf16.msra.mxu0 %v3710
        %3849 = vmatprep.subr.bf16.mxu0 %v3715
        %3850 = vmatpush1.bf16.msra.mxu0 %v3714
        %3851 = vmatprep.subr.bf16.mxu0 %v3719
        %3852 = vmatpush1.bf16.msra.mxu0 %v3718
        %3853 = vmatprep.subr.bf16.mxu0 %v3723
        %3854 = vmatpush1.bf16.msra.mxu0 %v3722
        %3855 = vmatprep.subr.bf16.mxu0 0
        %3856 = vmatpush1.bf16.msra.mxu0 0
        %3857 = vmatprep.subr.bf16.mxu0 0
        %3858 = vmatpush1.bf16.msra.mxu0 0
        %3859 = vmatprep.subr.bf16.mxu0 0
        %3860 = vmatpush1.bf16.msra.mxu0 0
        %3861 = vmatprep.subr.bf16.mxu0 0
        %3862 = vmatpush1.bf16.msra.mxu0 0
        %3863 = vmatprep.subr.bf16.mxu0 0
        %3864 = vmatpush1.bf16.msra.mxu0 0
        %3865 = vmatprep.subr.bf16.mxu0 0
        %3866 = vmatpush1.bf16.msra.mxu0 0
        %3867 = vmatprep.subr.bf16.mxu0 0
        %3868 = vmatpush1.bf16.msra.mxu0 0
        %3869 = vmatprep.subr.bf16.mxu0 0
        %3870 = vmatpush1.bf16.msra.mxu0 0
        %3871 = vmatprep.mubr.bf16.mxu0 0
        %3872 = vmatmul.mubr.bf16.gmra.mrb[0].mxu0 %v3537
        %v3873 = vpop.f32.mrb[0].mxu0
        %v3874 = vadd.f32 %v3587, %v3873
        %v3875 = vpop.f32.mrb[0].mxu0
        %v3876 = vadd.f32 %v3591, %v3875
        %v3877 = vpop.f32.mrb[0].mxu0
        %v3878 = vadd.f32 %v3587, %v3877
        %v3879 = vpop.f32.mrb[0].mxu0
        %v3880 = vadd.f32 %v3591, %v3879
        %3881 = vmatprep.mubr.bf16.mxu0 0
        %3882 = vmatmul.mubr.bf16.gmra.mrb[0].mxu0 %v3538
        %v3883 = vpop.f32.mrb[0].mxu0
        %v3884 = vadd.f32 %v3587, %v3883
        %v3885 = vpop.f32.mrb[0].mxu0
        %v3886 = vadd.f32 %v3591, %v3885
        %v3887 = vpop.f32.mrb[0].mxu0
        %v3888 = vadd.f32 %v3587, %v3887
        %v3889 = vpop.f32.mrb[0].mxu0
        %v3890 = vadd.f32 %v3591, %v3889
        %3891 = vmatprep.mubr.bf16.mxu0 0
        %3892 = vmatmul.mubr.bf16.gmra.mrb[0].mxu0 %v3539
        %v3893 = vpop.f32.mrb[0].mxu0
        %v3894 = vadd.f32 %v3587, %v3893
        %v3895 = vpop.f32.mrb[0].mxu0
        %v3896 = vadd.f32 %v3591, %v3895
        %v3897 = vpop.f32.mrb[0].mxu0
        %v3898 = vadd.f32 %v3587, %v3897
        %v3899 = vpop.f32.mrb[0].mxu0
        %v3900 = vadd.f32 %v3591, %v3899
        %3901 = vmatprep.mubr.bf16.mxu0 0
        %3902 = vmatmul.mubr.bf16.gmra.mrb[0].mxu0 %v3540
        %v3903 = vpop.f32.mrb[0].mxu0
        %v3904 = vadd.f32 %v3587, %v3903
        %v3905 = vpop.f32.mrb[0].mxu0
        %v3906 = vadd.f32 %v3591, %v3905
        %v3907 = vpop.f32.mrb[0].mxu0
        %v3908 = vadd.f32 %v3587, %v3907
        %v3909 = vpop.f32.mrb[0].mxu0
        %v3910 = vadd.f32 %v3591, %v3909
        %3911 = vmatprep.mubr.bf16.mxu0 0
        %3912 = vmatmul.mubr.bf16.gmra.mrb[0].mxu0 %v3541
        %v3913 = vpop.f32.mrb[0].mxu0
        %v3914 = vadd.f32 %v3587, %v3913
        %v3915 = vpop.f32.mrb[0].mxu0
        %v3916 = vadd.f32 %v3591, %v3915
        %v3917 = vpop.f32.mrb[0].mxu0
        %v3918 = vadd.f32 %v3587, %v3917
        %v3919 = vpop.f32.mrb[0].mxu0
        %v3920 = vadd.f32 %v3591, %v3919
        %3921 = vdwg.mxu0
        %v3922 = vmul.f32 %v3791, 1.702
        %v3923 = vmul.f32 %v3793, 1.702
        %v3924 = vmul.f32 %v3874, 1.702
        %v3925 = vmul.f32 %v3876, 1.702
        %v3926 = vmul.f32 %v3795, 1.702
        %v3927 = vmul.f32 %v3797, 1.702
        %v3928 = vmul.f32 %v3878, 1.702
        %v3929 = vmul.f32 %v3880, 1.702
        %v3930 = vmul.f32 %v3801, 1.702
        %v3931 = vmul.f32 %v3803, 1.702
        %v3932 = vmul.f32 %v3884, 1.702
        %v3933 = vmul.f32 %v3886, 1.702
        %v3934 = vmul.f32 %v3805, 1.702
        %v3935 = vmul.f32 %v3807, 1.702
        %v3936 = vmul.f32 %v3888, 1.702
        %v3937 = vmul.f32 %v3890, 1.702
        %v3938 = vmul.f32 %v3811, 1.702
        %v3939 = vmul.f32 %v3813, 1.702
        %v3940 = vmul.f32 %v3894, 1.702
        %v3941 = vmul.f32 %v3896, 1.702
        %v3942 = vmul.f32 %v3815, 1.702
        %v3943 = vmul.f32 %v3817, 1.702
        %v3944 = vmul.f32 %v3898, 1.702
        %v3945 = vmul.f32 %v3900, 1.702
        %v3946 = vmul.f32 %v3821, 1.702
        %v3947 = vmul.f32 %v3823, 1.702
        %v3948 = vmul.f32 %v3904, 1.702
        %v3949 = vmul.f32 %v3906, 1.702
        %v3950 = vmul.f32 %v3825, 1.702
        %v3951 = vmul.f32 %v3827, 1.702
        %v3952 = vmul.f32 %v3908, 1.702
        %v3953 = vmul.f32 %v3910, 1.702
        %v3954 = vmul.f32 %v3831, 1.702
        %v3955 = vmul.f32 %v3833, 1.702
        %v3956 = vmul.f32 %v3914, 1.702
        %v3957 = vmul.f32 %v3916, 1.702
        %v3958 = vmul.f32 %v3835, 1.702
        %v3959 = vmul.f32 %v3837, 1.702
        %v3960 = vmul.f32 %v3918, 1.702
        %v3961 = vmul.f32 %v3920, 1.702
        %v3962 = vxor.u32 %v3922, 2147483648
        %v3963 = vxor.u32 %v3923, 2147483648
        %v3964 = vxor.u32 %v3924, 2147483648
        %v3965 = vxor.u32 %v3925, 2147483648
        %v3966 = vxor.u32 %v3926, 2147483648
        %v3967 = vxor.u32 %v3927, 2147483648
        %v3968 = vxor.u32 %v3928, 2147483648
        %v3969 = vxor.u32 %v3929, 2147483648
        %v3970 = vxor.u32 %v3930, 2147483648
        %v3971 = vxor.u32 %v3931, 2147483648
        %v3972 = vxor.u32 %v3932, 2147483648
        %v3973 = vxor.u32 %v3933, 2147483648
        %v3974 = vxor.u32 %v3934, 2147483648
        %v3975 = vxor.u32 %v3935, 2147483648
        %v3976 = vxor.u32 %v3936, 2147483648
        %v3977 = vxor.u32 %v3937, 2147483648
        %v3978 = vxor.u32 %v3938, 2147483648
        %v3979 = vxor.u32 %v3939, 2147483648
        %v3980 = vxor.u32 %v3940, 2147483648
        %v3981 = vxor.u32 %v3941, 2147483648
        %v3982 = vxor.u32 %v3942, 2147483648
        %v3983 = vxor.u32 %v3943, 2147483648
        %v3984 = vxor.u32 %v3944, 2147483648
        %v3985 = vxor.u32 %v3945, 2147483648
        %v3986 = vxor.u32 %v3946, 2147483648
        %v3987 = vxor.u32 %v3947, 2147483648
        %v3988 = vxor.u32 %v3948, 2147483648
        %v3989 = vxor.u32 %v3949, 2147483648
        %v3990 = vxor.u32 %v3950, 2147483648
        %v3991 = vxor.u32 %v3951, 2147483648
        %v3992 = vxor.u32 %v3952, 2147483648
        %v3993 = vxor.u32 %v3953, 2147483648
        %v3994 = vxor.u32 %v3954, 2147483648
        %v3995 = vxor.u32 %v3955, 2147483648
        %v3996 = vxor.u32 %v3956, 2147483648
        %v3997 = vxor.u32 %v3957, 2147483648
        %v3998 = vxor.u32 %v3958, 2147483648
        %v3999 = vxor.u32 %v3959, 2147483648
        %v4000 = vxor.u32 %v3960, 2147483648
        %v4001 = vxor.u32 %v3961, 2147483648
        %v4002 = vmul.f32 %v3962, 1.442695
        %v4003 = vpow.pop %v4002
        %v4004 = vmul.f32 %v3963, 1.442695
        %v4005 = vpow.pop %v4004
        %v4006 = vmul.f32 %v3964, 1.442695
        %v4007 = vpow.pop %v4006
        %v4008 = vmul.f32 %v3965, 1.442695
        %v4009 = vpow.pop %v4008
        %v4010 = vmul.f32 %v3966, 1.442695
        %v4011 = vpow.pop %v4010
        %v4012 = vmul.f32 %v3967, 1.442695
        %v4013 = vpow.pop %v4012
        %v4014 = vmul.f32 %v3968, 1.442695
        %v4015 = vpow.pop %v4014
        %v4016 = vmul.f32 %v3969, 1.442695
        %v4017 = vpow.pop %v4016
        %v4018 = vmul.f32 %v3970, 1.442695
        %v4019 = vpow.pop %v4018
        %v4020 = vmul.f32 %v3971, 1.442695
        %v4021 = vpow.pop %v4020
        %v4022 = vmul.f32 %v3972, 1.442695
        %v4023 = vpow.pop %v4022
        %v4024 = vmul.f32 %v3973, 1.442695
        %v4025 = vpow.pop %v4024
        %v4026 = vmul.f32 %v3974, 1.442695
        %v4027 = vpow.pop %v4026
        %v4028 = vmul.f32 %v3975, 1.442695
        %v4029 = vpow.pop %v4028
        %v4030 = vmul.f32 %v3976, 1.442695
        %v4031 = vpow.pop %v4030
        %v4032 = vmul.f32 %v3977, 1.442695
        %v4033 = vpow.pop %v4032
        %v4034 = vmul.f32 %v3978, 1.442695
        %v4035 = vpow.pop %v4034
        %v4036 = vmul.f32 %v3979, 1.442695
        %v4037 = vpow.pop %v4036
        %v4038 = vmul.f32 %v3980, 1.442695
        %v4039 = vpow.pop %v4038
        %v4040 = vmul.f32 %v3981, 1.442695
        %v4041 = vpow.pop %v4040
        %v4042 = vmul.f32 %v3982, 1.442695
        %v4043 = vpow.pop %v4042
        %v4044 = vmul.f32 %v3983, 1.442695
        %v4045 = vpow.pop %v4044
        %v4046 = vmul.f32 %v3984, 1.442695
        %v4047 = vpow.pop %v4046
        %v4048 = vmul.f32 %v3985, 1.442695
        %v4049 = vpow.pop %v4048
        %v4050 = vmul.f32 %v3986, 1.442695
        %v4051 = vpow.pop %v4050
        %v4052 = vmul.f32 %v3987, 1.442695
        %v4053 = vpow.pop %v4052
        %v4054 = vmul.f32 %v3988, 1.442695
        %v4055 = vpow.pop %v4054
        %v4056 = vmul.f32 %v3989, 1.442695
        %v4057 = vpow.pop %v4056
        %v4058 = vmul.f32 %v3990, 1.442695
        %v4059 = vpow.pop %v4058
        %v4060 = vmul.f32 %v3991, 1.442695
        %v4061 = vpow.pop %v4060
        %v4062 = vmul.f32 %v3992, 1.442695
        %v4063 = vpow.pop %v4062
        %v4064 = vmul.f32 %v3993, 1.442695
        %v4065 = vpow.pop %v4064
        %v4066 = vmul.f32 %v3994, 1.442695
        %v4067 = vpow.pop %v4066
        %v4068 = vmul.f32 %v3995, 1.442695
        %v4069 = vpow.pop %v4068
        %v4070 = vmul.f32 %v3996, 1.442695
        %v4071 = vpow.pop %v4070
        %v4072 = vmul.f32 %v3997, 1.442695
        %v4073 = vpow.pop %v4072
        %v4074 = vmul.f32 %v3998, 1.442695
        %v4075 = vpow.pop %v4074
        %v4076 = vmul.f32 %v3999, 1.442695
        %v4077 = vpow.pop %v4076
        %v4078 = vmul.f32 %v4000, 1.442695
        %v4079 = vpow.pop %v4078
        %v4080 = vmul.f32 %v4001, 1.442695
        %v4081 = vpow.pop %v4080
        %v4082 = vadd.f32 %v4003, 1.0
        %v4083 = vadd.f32 %v4005, 1.0
        %v4084 = vadd.f32 %v4007, 1.0
        %v4085 = vadd.f32 %v4009, 1.0
        %v4086 = vadd.f32 %v4011, 1.0
        %v4087 = vadd.f32 %v4013, 1.0
        %v4088 = vadd.f32 %v4015, 1.0
        %v4089 = vadd.f32 %v4017, 1.0
        %v4090 = vadd.f32 %v4019, 1.0
        %v4091 = vadd.f32 %v4021, 1.0
        %v4092 = vadd.f32 %v4023, 1.0
        %v4093 = vadd.f32 %v4025, 1.0
        %v4094 = vadd.f32 %v4027, 1.0
        %v4095 = vadd.f32 %v4029, 1.0
        %v4096 = vadd.f32 %v4031, 1.0
        %v4097 = vadd.f32 %v4033, 1.0
        %v4098 = vadd.f32 %v4035, 1.0
        %v4099 = vadd.f32 %v4037, 1.0
        %v4100 = vadd.f32 %v4039, 1.0
        %v4101 = vadd.f32 %v4041, 1.0
        %v4102 = vadd.f32 %v4043, 1.0
        %v4103 = vadd.f32 %v4045, 1.0
        %v4104 = vadd.f32 %v4047, 1.0
        %v4105 = vadd.f32 %v4049, 1.0
        %v4106 = vadd.f32 %v4051, 1.0
        %v4107 = vadd.f32 %v4053, 1.0
        %v4108 = vadd.f32 %v4055, 1.0
        %v4109 = vadd.f32 %v4057, 1.0
        %v4110 = vadd.f32 %v4059, 1.0
        %v4111 = vadd.f32 %v4061, 1.0
        %v4112 = vadd.f32 %v4063, 1.0
        %v4113 = vadd.f32 %v4065, 1.0
        %v4114 = vadd.f32 %v4067, 1.0
        %v4115 = vadd.f32 %v4069, 1.0
        %v4116 = vadd.f32 %v4071, 1.0
        %v4117 = vadd.f32 %v4073, 1.0
        %v4118 = vadd.f32 %v4075, 1.0
        %v4119 = vadd.f32 %v4077, 1.0
        %v4120 = vadd.f32 %v4079, 1.0
        %v4121 = vadd.f32 %v4081, 1.0
        %v4122 = vrcp.pop %v4082
        %v4123 = vmul.f32 1.0, %v4122
        %v4124 = vrcp.pop %v4083
        %v4125 = vmul.f32 1.0, %v4124
        %v4126 = vrcp.pop %v4084
        %v4127 = vmul.f32 1.0, %v4126
        %v4128 = vrcp.pop %v4085
        %v4129 = vmul.f32 1.0, %v4128
        %v4130 = vrcp.pop %v4086
        %v4131 = vmul.f32 1.0, %v4130
        %v4132 = vrcp.pop %v4087
        %v4133 = vmul.f32 1.0, %v4132
        %v4134 = vrcp.pop %v4088
        %v4135 = vmul.f32 1.0, %v4134
        %v4136 = vrcp.pop %v4089
        %v4137 = vmul.f32 1.0, %v4136
        %v4138 = vrcp.pop %v4090
        %v4139 = vmul.f32 1.0, %v4138
        %v4140 = vrcp.pop %v4091
        %v4141 = vmul.f32 1.0, %v4140
        %v4142 = vrcp.pop %v4092
        %v4143 = vmul.f32 1.0, %v4142
        %v4144 = vrcp.pop %v4093
        %v4145 = vmul.f32 1.0, %v4144
        %v4146 = vrcp.pop %v4094
        %v4147 = vmul.f32 1.0, %v4146
        %v4148 = vrcp.pop %v4095
        %v4149 = vmul.f32 1.0, %v4148
        %v4150 = vrcp.pop %v4096
        %v4151 = vmul.f32 1.0, %v4150
        %v4152 = vrcp.pop %v4097
        %v4153 = vmul.f32 1.0, %v4152
        %v4154 = vrcp.pop %v4098
        %v4155 = vmul.f32 1.0, %v4154
        %v4156 = vrcp.pop %v4099
        %v4157 = vmul.f32 1.0, %v4156
        %v4158 = vrcp.pop %v4100
        %v4159 = vmul.f32 1.0, %v4158
        %v4160 = vrcp.pop %v4101
        %v4161 = vmul.f32 1.0, %v4160
        %v4162 = vrcp.pop %v4102
        %v4163 = vmul.f32 1.0, %v4162
        %v4164 = vrcp.pop %v4103
        %v4165 = vmul.f32 1.0, %v4164
        %v4166 = vrcp.pop %v4104
        %v4167 = vmul.f32 1.0, %v4166
        %v4168 = vrcp.pop %v4105
        %v4169 = vmul.f32 1.0, %v4168
        %v4170 = vrcp.pop %v4106
        %v4171 = vmul.f32 1.0, %v4170
        %v4172 = vrcp.pop %v4107
        %v4173 = vmul.f32 1.0, %v4172
        %v4174 = vrcp.pop %v4108
        %v4175 = vmul.f32 1.0, %v4174
        %v4176 = vrcp.pop %v4109
        %v4177 = vmul.f32 1.0, %v4176
        %v4178 = vrcp.pop %v4110
        %v4179 = vmul.f32 1.0, %v4178
        %v4180 = vrcp.pop %v4111
        %v4181 = vmul.f32 1.0, %v4180
        %v4182 = vrcp.pop %v4112
        %v4183 = vmul.f32 1.0, %v4182
        %v4184 = vrcp.pop %v4113
        %v4185 = vmul.f32 1.0, %v4184
        %v4186 = vrcp.pop %v4114
        %v4187 = vmul.f32 1.0, %v4186
        %v4188 = vrcp.pop %v4115
        %v4189 = vmul.f32 1.0, %v4188
        %v4190 = vrcp.pop %v4116
        %v4191 = vmul.f32 1.0, %v4190
        %v4192 = vrcp.pop %v4117
        %v4193 = vmul.f32 1.0, %v4192
        %v4194 = vrcp.pop %v4118
        %v4195 = vmul.f32 1.0, %v4194
        %v4196 = vrcp.pop %v4119
        %v4197 = vmul.f32 1.0, %v4196
        %v4198 = vrcp.pop %v4120
        %v4199 = vmul.f32 1.0, %v4198
        %v4200 = vrcp.pop %v4121
        %v4201 = vmul.f32 1.0, %v4200
        %v4202 = vmul.f32 %v3791, %v4123
        %v4203 = vmul.f32 %v3793, %v4125
        %v4204 = vmul.f32 %v3874, %v4127
        %v4205 = vmul.f32 %v3876, %v4129
        %v4206 = vmul.f32 %v3795, %v4131
        %v4207 = vmul.f32 %v3797, %v4133
        %v4208 = vmul.f32 %v3878, %v4135
        %v4209 = vmul.f32 %v3880, %v4137
        %v4210 = vmul.f32 %v3801, %v4139
        %v4211 = vmul.f32 %v3803, %v4141
        %v4212 = vmul.f32 %v3884, %v4143
        %v4213 = vmul.f32 %v3886, %v4145
        %v4214 = vmul.f32 %v3805, %v4147
        %v4215 = vmul.f32 %v3807, %v4149
        %v4216 = vmul.f32 %v3888, %v4151
        %v4217 = vmul.f32 %v3890, %v4153
        %v4218 = vmul.f32 %v3811, %v4155
        %v4219 = vmul.f32 %v3813, %v4157
        %v4220 = vmul.f32 %v3894, %v4159
        %v4221 = vmul.f32 %v3896, %v4161
        %v4222 = vmul.f32 %v3815, %v4163
        %v4223 = vmul.f32 %v3817, %v4165
        %v4224 = vmul.f32 %v3898, %v4167
        %v4225 = vmul.f32 %v3900, %v4169
        %v4226 = vmul.f32 %v3821, %v4171
        %v4227 = vmul.f32 %v3823, %v4173
        %v4228 = vmul.f32 %v3904, %v4175
        %v4229 = vmul.f32 %v3906, %v4177
        %v4230 = vmul.f32 %v3825, %v4179
        %v4231 = vmul.f32 %v3827, %v4181
        %v4232 = vmul.f32 %v3908, %v4183
        %v4233 = vmul.f32 %v3910, %v4185
        %v4234 = vmul.f32 %v3831, %v4187
        %v4235 = vmul.f32 %v3833, %v4189
        %v4236 = vmul.f32 %v3914, %v4191
        %v4237 = vmul.f32 %v3916, %v4193
        %v4238 = vmul.f32 %v3835, %v4195
        %v4239 = vmul.f32 %v3837, %v4197
        %v4240 = vmul.f32 %v3918, %v4199
        %v4241 = vmul.f32 %v3920, %v4201
        %v4242 = vpack.c.bf16 %v4206, %v4202
        %v4243 = vpack.c.bf16 %v4207, %v4203
        %v4244 = vpack.c.bf16 %v4208, %v4204
        %v4245 = vpack.c.bf16 %v4209, %v4205
        %v4246 = vpack.c.bf16 %v4214, %v4210
        %v4247 = vpack.c.bf16 %v4215, %v4211
        %v4248 = vpack.c.bf16 %v4216, %v4212
        %v4249 = vpack.c.bf16 %v4217, %v4213
        %v4250 = vpack.c.bf16 %v4222, %v4218
        %v4251 = vpack.c.bf16 %v4223, %v4219
        %v4252 = vpack.c.bf16 %v4224, %v4220
        %v4253 = vpack.c.bf16 %v4225, %v4221
        %v4254 = vpack.c.bf16 %v4230, %v4226
        %v4255 = vpack.c.bf16 %v4231, %v4227
        %v4256 = vpack.c.bf16 %v4232, %v4228
        %v4257 = vpack.c.bf16 %v4233, %v4229
        %v4258 = vpack.c.bf16 %v4238, %v4234
        %v4259 = vpack.c.bf16 %v4239, %v4235
        %v4260 = vpack.c.bf16 %v4240, %v4236
        %v4261 = vpack.c.bf16 %v4241, %v4237
        %v4262 = vld [vmem:[%s750] sm:$0xf]
        %v4263 = vld [vmem:[%s750 + $0x4] sm:$0xf]
        %v4264 = vld [vmem:[%s750 + $0x8] sm:$0xf]
        %v4265 = vld [vmem:[%s750 + $0xc] sm:$0xf]
        %v4266 = vld [vmem:[%s750 + $0x10] sm:$0xf]
        %v4267 = vld [vmem:[%s750 + $0x14] sm:$0xf]
        %v4268 = vld [vmem:[%s750 + $0x18] sm:$0xf]
        %v4269 = vld [vmem:[%s750 + $0x1c] sm:$0xf]
        %v4270 = vld [vmem:[%s750 + $0x20] sm:$0xf]
        %v4271 = vld [vmem:[%s750 + $0x24] sm:$0xf]
        %v4272 = vld [vmem:[%s750 + $0x28] sm:$0xf]
        %v4273 = vld [vmem:[%s750 + $0x2c] sm:$0xf]
        %v4274 = vld [vmem:[%s750 + $0x30] sm:$0xf]
        %v4275 = vld [vmem:[%s750 + $0x34] sm:$0xf]
        %v4276 = vld [vmem:[%s750 + $0x38] sm:$0xf]
        %v4277 = vld [vmem:[%s750 + $0x3c] sm:$0xf]
        %v4278 = vld [vmem:[%s750 + $0x40] sm:$0xf]
        %v4279 = vld [vmem:[%s750 + $0x44] sm:$0xf]
        %v4280 = vld [vmem:[%s750 + $0x48] sm:$0xf]
        %v4281 = vld [vmem:[%s750 + $0x4c] sm:$0xf]
        %v4282 = vld [vmem:[%s750 + $0x50] sm:$0xf]
        %v4283 = vld [vmem:[%s750 + $0x54] sm:$0xf]
        %v4284 = vld [vmem:[%s750 + $0x58] sm:$0xf]
        %v4285 = vld [vmem:[%s750 + $0x5c] sm:$0xf]
        %v4286 = vld [vmem:[%s750 + $0x60] sm:$0xf]
        %v4287 = vld [vmem:[%s750 + $0x64] sm:$0xf]
        %v4288 = vld [vmem:[%s750 + $0x68] sm:$0xf]
        %v4289 = vld [vmem:[%s750 + $0x6c] sm:$0xf]
        %v4290 = vld [vmem:[%s750 + $0x70] sm:$0xf]
        %v4291 = vld [vmem:[%s750 + $0x74] sm:$0xf]
        %v4292 = vld [vmem:[%s750 + $0x78] sm:$0xf]
        %v4293 = vld [vmem:[%s750 + $0x7c] sm:$0xf]
        %v4294 = vld [vmem:[%s750 + $0x80] sm:$0xf]
        %v4295 = vld [vmem:[%s750 + $0x84] sm:$0xf]
        %v4296 = vld [vmem:[%s750 + $0x88] sm:$0xf]
        %v4297 = vld [vmem:[%s750 + $0x8c] sm:$0xf]
        %v4298 = vld [vmem:[%s750 + $0x90] sm:$0xf]
        %v4299 = vld [vmem:[%s750 + $0x94] sm:$0xf]
        %v4300 = vld [vmem:[%s750 + $0x98] sm:$0xf]
        %v4301 = vld [vmem:[%s750 + $0x9c] sm:$0xf]
        %v4302 = vld [vmem:[%s750 + $0xa0] sm:$0xf]
        %v4303 = vld [vmem:[%s750 + $0xa4] sm:$0xf]
        %v4304 = vld [vmem:[%s750 + $0xa8] sm:$0xf]
        %v4305 = vld [vmem:[%s750 + $0xac] sm:$0xf]
        %v4306 = vld [vmem:[%s750 + $0xb0] sm:$0xf]
        %v4307 = vld [vmem:[%s750 + $0xb4] sm:$0xf]
        %v4308 = vld [vmem:[%s750 + $0xb8] sm:$0xf]
        %v4309 = vld [vmem:[%s750 + $0xbc] sm:$0xf]
        %v4310 = vld [vmem:[%s750 + $0xc0] sm:$0xf]
        %v4311 = vld [vmem:[%s750 + $0xc4] sm:$0xf]
        %v4312 = vld [vmem:[%s750 + $0xc8] sm:$0xf]
        %v4313 = vld [vmem:[%s750 + $0xcc] sm:$0xf]
        %v4314 = vld [vmem:[%s750 + $0xd0] sm:$0xf]
        %v4315 = vld [vmem:[%s750 + $0xd4] sm:$0xf]
        %v4316 = vld [vmem:[%s750 + $0xd8] sm:$0xf]
        %v4317 = vld [vmem:[%s750 + $0xdc] sm:$0xf]
        %v4318 = vld [vmem:[%s750 + $0xe0] sm:$0xf]
        %v4319 = vld [vmem:[%s750 + $0xe4] sm:$0xf]
        %v4320 = vld [vmem:[%s750 + $0xe8] sm:$0xf]
        %v4321 = vld [vmem:[%s750 + $0xec] sm:$0xf]
        %v4322 = vld [vmem:[%s750 + $0xf0] sm:$0xf]
        %v4323 = vld [vmem:[%s750 + $0xf4] sm:$0xf]
        %v4324 = vld [vmem:[%s750 + $0xf8] sm:$0xf]
        %v4325 = vld [vmem:[%s750 + $0xfc] sm:$0xf]
        %v4326 = vld [vmem:[%s866] sm:$0x1]
        %v4328 = vlaneseq
        %v4329 = vshrl.u32 %v4328, 7
        %v4330 = vsub.s32 0, %v4329
        %v4331 = vrot.slane %v4326, %v4330
        %v4397 = vunpack.c.l.b16 %v4262
        %v4398 = vunpack.c.l.b16 %v4263
        %v4399 = vunpack.c.l.b16 %v4264
        %v4400 = vunpack.c.l.b16 %v4265
        %v4401 = vunpack.c.l.b16 %v4266
        %v4402 = vunpack.c.l.b16 %v4267
        %v4403 = vunpack.c.l.b16 %v4268
        %v4404 = vunpack.c.l.b16 %v4269
        %v4405 = vunpack.c.l.b16 %v4270
        %v4406 = vunpack.c.l.b16 %v4271
        %v4407 = vunpack.c.l.b16 %v4272
        %v4408 = vunpack.c.l.b16 %v4273
        %v4409 = vunpack.c.l.b16 %v4274
        %v4410 = vunpack.c.l.b16 %v4275
        %v4411 = vunpack.c.l.b16 %v4276
        %v4412 = vunpack.c.l.b16 %v4277
        %v4413 = vunpack.c.l.b16 %v4278
        %v4414 = vunpack.c.l.b16 %v4279
        %v4415 = vunpack.c.l.b16 %v4280
        %v4416 = vunpack.c.l.b16 %v4281
        %v4417 = vunpack.c.l.b16 %v4282
        %v4418 = vunpack.c.l.b16 %v4283
        %v4419 = vunpack.c.l.b16 %v4284
        %v4420 = vunpack.c.l.b16 %v4285
        %v4421 = vunpack.c.l.b16 %v4286
        %v4422 = vunpack.c.l.b16 %v4287
        %v4423 = vunpack.c.l.b16 %v4288
        %v4424 = vunpack.c.l.b16 %v4289
        %v4425 = vunpack.c.l.b16 %v4290
        %v4426 = vunpack.c.l.b16 %v4291
        %v4427 = vunpack.c.l.b16 %v4292
        %v4428 = vunpack.c.l.b16 %v4293
        %v4429 = vunpack.c.l.b16 %v4294
        %v4430 = vunpack.c.l.b16 %v4295
        %v4431 = vunpack.c.l.b16 %v4296
        %v4432 = vunpack.c.l.b16 %v4297
        %v4433 = vunpack.c.l.b16 %v4298
        %v4434 = vunpack.c.l.b16 %v4299
        %v4435 = vunpack.c.l.b16 %v4300
        %v4436 = vunpack.c.l.b16 %v4301
        %v4437 = vunpack.c.l.b16 %v4302
        %v4438 = vunpack.c.l.b16 %v4303
        %v4439 = vunpack.c.l.b16 %v4304
        %v4440 = vunpack.c.l.b16 %v4305
        %v4441 = vunpack.c.l.b16 %v4306
        %v4442 = vunpack.c.l.b16 %v4307
        %v4443 = vunpack.c.l.b16 %v4308
        %v4444 = vunpack.c.l.b16 %v4309
        %v4445 = vunpack.c.l.b16 %v4310
        %v4446 = vunpack.c.l.b16 %v4311
        %v4447 = vunpack.c.l.b16 %v4312
        %v4448 = vunpack.c.l.b16 %v4313
        %v4449 = vunpack.c.l.b16 %v4314
        %v4450 = vunpack.c.l.b16 %v4315
        %v4451 = vunpack.c.l.b16 %v4316
        %v4452 = vunpack.c.l.b16 %v4317
        %v4453 = vunpack.c.l.b16 %v4318
        %v4454 = vunpack.c.l.b16 %v4319
        %v4455 = vunpack.c.l.b16 %v4320
        %v4456 = vunpack.c.l.b16 %v4321
        %v4457 = vunpack.c.l.b16 %v4322
        %v4458 = vunpack.c.l.b16 %v4323
        %v4459 = vunpack.c.l.b16 %v4324
        %v4460 = vunpack.c.l.b16 %v4325
        %v4461 = vpack.c.b16 %v4398, %v4397
        %v4462 = vpack.c.b16 %v4400, %v4399
        %v4463 = vpack.c.b16 %v4402, %v4401
        %v4464 = vpack.c.b16 %v4404, %v4403
        %v4465 = vpack.c.b16 %v4406, %v4405
        %v4466 = vpack.c.b16 %v4408, %v4407
        %v4467 = vpack.c.b16 %v4410, %v4409
        %v4468 = vpack.c.b16 %v4412, %v4411
        %v4469 = vpack.c.b16 %v4414, %v4413
        %v4470 = vpack.c.b16 %v4416, %v4415
        %v4471 = vpack.c.b16 %v4418, %v4417
        %v4472 = vpack.c.b16 %v4420, %v4419
        %v4473 = vpack.c.b16 %v4422, %v4421
        %v4474 = vpack.c.b16 %v4424, %v4423
        %v4475 = vpack.c.b16 %v4426, %v4425
        %v4476 = vpack.c.b16 %v4428, %v4427
        %v4477 = vpack.c.b16 %v4430, %v4429
        %v4478 = vpack.c.b16 %v4432, %v4431
        %v4479 = vpack.c.b16 %v4434, %v4433
        %v4480 = vpack.c.b16 %v4436, %v4435
        %v4481 = vpack.c.b16 %v4438, %v4437
        %v4482 = vpack.c.b16 %v4440, %v4439
        %v4483 = vpack.c.b16 %v4442, %v4441
        %v4484 = vpack.c.b16 %v4444, %v4443
        %v4485 = vpack.c.b16 %v4446, %v4445
        %v4486 = vpack.c.b16 %v4448, %v4447
        %v4487 = vpack.c.b16 %v4450, %v4449
        %v4488 = vpack.c.b16 %v4452, %v4451
        %v4489 = vpack.c.b16 %v4454, %v4453
        %v4490 = vpack.c.b16 %v4456, %v4455
        %v4491 = vpack.c.b16 %v4458, %v4457
        %v4492 = vpack.c.b16 %v4460, %v4459
        %4525 = vmatprep.subr.bf16.mxu0 0
        %4526 = vmatpush1.bf16.msra.mxu0 %v4461
        %4527 = vmatprep.subr.bf16.mxu0 0
        %4528 = vmatpush1.bf16.msra.mxu0 %v4462
        %4529 = vmatprep.subr.bf16.mxu0 0
        %4530 = vmatpush1.bf16.msra.mxu0 %v4463
        %4531 = vmatprep.subr.bf16.mxu0 0
        %4532 = vmatpush1.bf16.msra.mxu0 %v4464
        %4533 = vmatprep.subr.bf16.mxu0 0
        %4534 = vmatpush1.bf16.msra.mxu0 %v4465
        %4535 = vmatprep.subr.bf16.mxu0 0
        %4536 = vmatpush1.bf16.msra.mxu0 %v4466
        %4537 = vmatprep.subr.bf16.mxu0 0
        %4538 = vmatpush1.bf16.msra.mxu0 %v4467
        %4539 = vmatprep.subr.bf16.mxu0 0
        %4540 = vmatpush1.bf16.msra.mxu0 %v4468
        %4541 = vmatprep.subr.bf16.mxu0 0
        %4542 = vmatpush1.bf16.msra.mxu0 %v4469
        %4543 = vmatprep.subr.bf16.mxu0 0
        %4544 = vmatpush1.bf16.msra.mxu0 %v4470
        %4545 = vmatprep.subr.bf16.mxu0 0
        %4546 = vmatpush1.bf16.msra.mxu0 %v4471
        %4547 = vmatprep.subr.bf16.mxu0 0
        %4548 = vmatpush1.bf16.msra.mxu0 %v4472
        %4549 = vmatprep.subr.bf16.mxu0 0
        %4550 = vmatpush1.bf16.msra.mxu0 %v4473
        %4551 = vmatprep.subr.bf16.mxu0 0
        %4552 = vmatpush1.bf16.msra.mxu0 %v4474
        %4553 = vmatprep.subr.bf16.mxu0 0
        %4554 = vmatpush1.bf16.msra.mxu0 %v4475
        %4555 = vmatprep.subr.bf16.mxu0 0
        %4556 = vmatpush1.bf16.msra.mxu0 %v4476
        %4557 = vmatprep.mubr.bf16.mxu0 %v4243
        %4558 = vmatmul.mubr.bf16.gmra.mrb[0].mxu0 %v4242
        %v4559 = vpop.f32.mrb[0].mxu0
        %v4560 = vadd.f32 %v4331, %v4559
        %v4561 = vpop.f32.mrb[0].mxu0
        %v4562 = vpop.f32.mrb[0].mxu0
        %v4563 = vadd.f32 %v4331, %v4562
        %v4564 = vpop.f32.mrb[0].mxu0
        %4565 = vmatprep.mubr.bf16.mxu0 %v4247
        %4566 = vmatmul.mubr.bf16.gmra.mrb[0].mxu0 %v4246
        %v4567 = vpop.f32.mrb[0].mxu0
        %v4568 = vadd.f32 %v4331, %v4567
        %v4569 = vpop.f32.mrb[0].mxu0
        %v4570 = vpop.f32.mrb[0].mxu0
        %v4571 = vadd.f32 %v4331, %v4570
        %v4572 = vpop.f32.mrb[0].mxu0
        %4573 = vmatprep.mubr.bf16.mxu0 %v4251
        %4574 = vmatmul.mubr.bf16.gmra.mrb[0].mxu0 %v4250
        %v4575 = vpop.f32.mrb[0].mxu0
        %v4576 = vadd.f32 %v4331, %v4575
        %v4577 = vpop.f32.mrb[0].mxu0
        %v4578 = vpop.f32.mrb[0].mxu0
        %v4579 = vadd.f32 %v4331, %v4578
        %v4580 = vpop.f32.mrb[0].mxu0
        %4581 = vmatprep.mubr.bf16.mxu0 %v4255
        %4582 = vmatmul.mubr.bf16.gmra.mrb[0].mxu0 %v4254
        %v4583 = vpop.f32.mrb[0].mxu0
        %v4584 = vadd.f32 %v4331, %v4583
        %v4585 = vpop.f32.mrb[0].mxu0
        %v4586 = vpop.f32.mrb[0].mxu0
        %v4587 = vadd.f32 %v4331, %v4586
        %v4588 = vpop.f32.mrb[0].mxu0
        %4589 = vmatprep.mubr.bf16.mxu0 %v4259
        %4590 = vmatmul.mubr.bf16.gmra.mrb[0].mxu0 %v4258
        %v4591 = vpop.f32.mrb[0].mxu0
        %v4592 = vadd.f32 %v4331, %v4591
        %v4593 = vpop.f32.mrb[0].mxu0
        %v4594 = vpop.f32.mrb[0].mxu0
        %v4595 = vadd.f32 %v4331, %v4594
        %v4596 = vpop.f32.mrb[0].mxu0
        %4597 = vdwg.mxu0
        %4598 = vmatprep.subr.bf16.mxu0 0
        %4599 = vmatpush1.bf16.msra.mxu0 %v4477
        %4600 = vmatprep.subr.bf16.mxu0 0
        %4601 = vmatpush1.bf16.msra.mxu0 %v4478
        %4602 = vmatprep.subr.bf16.mxu0 0
        %4603 = vmatpush1.bf16.msra.mxu0 %v4479
        %4604 = vmatprep.subr.bf16.mxu0 0
        %4605 = vmatpush1.bf16.msra.mxu0 %v4480
        %4606 = vmatprep.subr.bf16.mxu0 0
        %4607 = vmatpush1.bf16.msra.mxu0 %v4481
        %4608 = vmatprep.subr.bf16.mxu0 0
        %4609 = vmatpush1.bf16.msra.mxu0 %v4482
        %4610 = vmatprep.subr.bf16.mxu0 0
        %4611 = vmatpush1.bf16.msra.mxu0 %v4483
        %4612 = vmatprep.subr.bf16.mxu0 0
        %4613 = vmatpush1.bf16.msra.mxu0 %v4484
        %4614 = vmatprep.subr.bf16.mxu0 0
        %4615 = vmatpush1.bf16.msra.mxu0 %v4485
        %4616 = vmatprep.subr.bf16.mxu0 0
        %4617 = vmatpush1.bf16.msra.mxu0 %v4486
        %4618 = vmatprep.subr.bf16.mxu0 0
        %4619 = vmatpush1.bf16.msra.mxu0 %v4487
        %4620 = vmatprep.subr.bf16.mxu0 0
        %4621 = vmatpush1.bf16.msra.mxu0 %v4488
        %4622 = vmatprep.subr.bf16.mxu0 0
        %4623 = vmatpush1.bf16.msra.mxu0 %v4489
        %4624 = vmatprep.subr.bf16.mxu0 0
        %4625 = vmatpush1.bf16.msra.mxu0 %v4490
        %4626 = vmatprep.subr.bf16.mxu0 0
        %4627 = vmatpush1.bf16.msra.mxu0 %v4491
        %4628 = vmatprep.subr.bf16.mxu0 0
        %4629 = vmatpush1.bf16.msra.mxu0 %v4492
        %4630 = vmatprep.mubr.bf16.mxu0 %v4245
        %4631 = vmatmul.mubr.bf16.gmra.mrb[0].mxu0 %v4244
        %v4632 = vpop.f32.mrb[0].mxu0
        %v4633 = vadd.f32 %v4560, %v4632
        %v4634 = vpop.f32.mrb[0].mxu0
        %v4635 = vpop.f32.mrb[0].mxu0
        %v4636 = vadd.f32 %v4563, %v4635
        %v4637 = vpop.f32.mrb[0].mxu0
        %4638 = vmatprep.mubr.bf16.mxu0 %v4249
        %4639 = vmatmul.mubr.bf16.gmra.mrb[0].mxu0 %v4248
        %v4640 = vpop.f32.mrb[0].mxu0
        %v4641 = vadd.f32 %v4568, %v4640
        %v4642 = vpop.f32.mrb[0].mxu0
        %v4643 = vpop.f32.mrb[0].mxu0
        %v4644 = vadd.f32 %v4571, %v4643
        %v4645 = vpop.f32.mrb[0].mxu0
        %4646 = vmatprep.mubr.bf16.mxu0 %v4253
        %4647 = vmatmul.mubr.bf16.gmra.mrb[0].mxu0 %v4252
        %v4648 = vpop.f32.mrb[0].mxu0
        %v4649 = vadd.f32 %v4576, %v4648
        %v4650 = vpop.f32.mrb[0].mxu0
        %v4651 = vpop.f32.mrb[0].mxu0
        %v4652 = vadd.f32 %v4579, %v4651
        %v4653 = vpop.f32.mrb[0].mxu0
        %4654 = vmatprep.mubr.bf16.mxu0 %v4257
        %4655 = vmatmul.mubr.bf16.gmra.mrb[0].mxu0 %v4256
        %v4656 = vpop.f32.mrb[0].mxu0
        %v4657 = vadd.f32 %v4584, %v4656
        %v4658 = vpop.f32.mrb[0].mxu0
        %v4659 = vpop.f32.mrb[0].mxu0
        %v4660 = vadd.f32 %v4587, %v4659
        %v4661 = vpop.f32.mrb[0].mxu0
        %4662 = vmatprep.mubr.bf16.mxu0 %v4261
        %4663 = vmatmul.mubr.bf16.gmra.mrb[0].mxu0 %v4260
        %v4664 = vpop.f32.mrb[0].mxu0
        %v4665 = vadd.f32 %v4592, %v4664
        %v4666 = vpop.f32.mrb[0].mxu0
        %v4667 = vpop.f32.mrb[0].mxu0
        %v4668 = vadd.f32 %v4595, %v4667
        %v4669 = vpop.f32.mrb[0].mxu0
        %4670 = vdwg.mxu0
        %v4671 = vadd.f32 %v4633, %v3383
        %v4672 = vadd.f32 %v4636, %v3384
        %v4673 = vadd.f32 %v4641, %v3385
        %v4674 = vadd.f32 %v4644, %v3386
        %v4675 = vadd.f32 %v4649, %v3387
        %v4676 = vadd.f32 %v4652, %v3388
        %v4677 = vadd.f32 %v4657, %v3389
        %v4678 = vadd.f32 %v4660, %v3390
        %v4679 = vadd.f32 %v4665, %v3391
        %v4680 = vadd.f32 %v4668, %v3392
        %4681 = vst [vmem:[#allocation2] sm:$0xff] %v4671
        %4682 = vst [vmem:[#allocation2 + $0x8] sm:$0xff] %v4672
        %4683 = vst [vmem:[#allocation2 + $0x10] sm:$0xff] %v4673
        %4684 = vst [vmem:[#allocation2 + $0x18] sm:$0xff] %v4674
        %4685 = vst [vmem:[#allocation2 + $0x20] sm:$0xff] %v4675
        %4686 = vst [vmem:[#allocation2 + $0x28] sm:$0xff] %v4676
        %4687 = vst [vmem:[#allocation2 + $0x30] sm:$0xff] %v4677
        %4688 = vst [vmem:[#allocation2 + $0x38] sm:$0xff] %v4678
        %4689 = vst [vmem:[#allocation2 + $0x40] sm:$0xff] %v4679
        %4690 = vst [vmem:[#allocation2 + $0x48] sm:$0xff] %v4680
        %p4691 = scmp.eq.s32.totalorder %s39, 1
        // Predicated region
        $region121: #{tpu_custom_call.1} parent=83 // pred_check
          %p4692 = pneg %p4691
        $region122: #{tpu_custom_call.1} parent=83 // pred_check_branch
          %4694 = sbr.rel (%p4692) target = $region124
        $region123: #{tpu_custom_call.1} parent=83 // pred_region
          %v4695 = vld [vmem:[%s14] sm:$0x1]
          %v4696 = vld [vmem:[%s15] sm:$0x1]
          %4697 = vadd.xlane.f32.xlu0 %v4671
          %v4698 = vpop.xlane.xlu0 %4697
          %4699 = vadd.xlane.f32.xlu0 %v4672
          %v4700 = vpop.xlane.xlu0 %4699
          %4701 = vadd.xlane.f32.xlu0 %v4673
          %v4702 = vpop.xlane.xlu0 %4701
          %4703 = vadd.xlane.f32.xlu0 %v4674
          %v4704 = vpop.xlane.xlu0 %4703
          %4705 = vadd.xlane.f32.xlu0 %v4675
          %v4706 = vpop.xlane.xlu0 %4705
          %4707 = vadd.xlane.f32.xlu0 %v4676
          %v4708 = vpop.xlane.xlu0 %4707
          %4709 = vadd.xlane.f32.xlu0 %v4677
          %v4710 = vpop.xlane.xlu0 %4709
          %4711 = vadd.xlane.f32.xlu0 %v4678
          %v4712 = vpop.xlane.xlu0 %4711
          %4713 = vadd.xlane.f32.xlu0 %v4679
          %v4714 = vpop.xlane.xlu0 %4713
          %4715 = vadd.xlane.f32.xlu0 %v4680
          %v4716 = vpop.xlane.xlu0 %4715
          %v4717 = vmul.f32 %v4698, %v924
          %v4718 = vmul.f32 %v4700, %v924
          %v4719 = vmul.f32 %v4702, %v924
          %v4720 = vmul.f32 %v4704, %v924
          %v4721 = vmul.f32 %v4706, %v924
          %v4722 = vmul.f32 %v4708, %v924
          %v4723 = vmul.f32 %v4710, %v924
          %v4724 = vmul.f32 %v4712, %v924
          %v4725 = vmul.f32 %v4714, %v924
          %v4726 = vmul.f32 %v4716, %v924
          %v4727 = vsub.f32 %v4671, %v4717
          %v4728 = vsub.f32 %v4672, %v4718
          %v4729 = vsub.f32 %v4673, %v4719
          %v4730 = vsub.f32 %v4674, %v4720
          %v4731 = vsub.f32 %v4675, %v4721
          %v4732 = vsub.f32 %v4676, %v4722
          %v4733 = vsub.f32 %v4677, %v4723
          %v4734 = vsub.f32 %v4678, %v4724
          %v4735 = vsub.f32 %v4679, %v4725
          %v4736 = vsub.f32 %v4680, %v4726
          %v4737 = vmul.f32 %v4727, %v4727
          %v4738 = vmul.f32 %v4728, %v4728
          %v4739 = vmul.f32 %v4729, %v4729
          %v4740 = vmul.f32 %v4730, %v4730
          %v4741 = vmul.f32 %v4731, %v4731
          %v4742 = vmul.f32 %v4732, %v4732
          %v4743 = vmul.f32 %v4733, %v4733
          %v4744 = vmul.f32 %v4734, %v4734
          %v4745 = vmul.f32 %v4735, %v4735
          %v4746 = vmul.f32 %v4736, %v4736
          %4747 = vadd.xlane.f32.xlu0 %v4737
          %v4748 = vpop.xlane.xlu0 %4747
          %4749 = vadd.xlane.f32.xlu0 %v4738
          %v4750 = vpop.xlane.xlu0 %4749
          %4751 = vadd.xlane.f32.xlu0 %v4739
          %v4752 = vpop.xlane.xlu0 %4751
          %4753 = vadd.xlane.f32.xlu0 %v4740
          %v4754 = vpop.xlane.xlu0 %4753
          %4755 = vadd.xlane.f32.xlu0 %v4741
          %v4756 = vpop.xlane.xlu0 %4755
          %4757 = vadd.xlane.f32.xlu0 %v4742
          %v4758 = vpop.xlane.xlu0 %4757
          %4759 = vadd.xlane.f32.xlu0 %v4743
          %v4760 = vpop.xlane.xlu0 %4759
          %4761 = vadd.xlane.f32.xlu0 %v4744
          %v4762 = vpop.xlane.xlu0 %4761
          %4763 = vadd.xlane.f32.xlu0 %v4745
          %v4764 = vpop.xlane.xlu0 %4763
          %4765 = vadd.xlane.f32.xlu0 %v4746
          %v4766 = vpop.xlane.xlu0 %4765
          %v4767 = vmul.f32 %v4748, %v924
          %v4768 = vmul.f32 %v4750, %v924
          %v4769 = vmul.f32 %v4752, %v924
          %v4770 = vmul.f32 %v4754, %v924
          %v4771 = vmul.f32 %v4756, %v924
          %v4772 = vmul.f32 %v4758, %v924
          %v4773 = vmul.f32 %v4760, %v924
          %v4774 = vmul.f32 %v4762, %v924
          %v4775 = vmul.f32 %v4764, %v924
          %v4776 = vmul.f32 %v4766, %v924
          %v4777 = vadd.f32 %v4767, 1e-05
          %v4778 = vadd.f32 %v4768, 1e-05
          %v4779 = vadd.f32 %v4769, 1e-05
          %v4780 = vadd.f32 %v4770, 1e-05
          %v4781 = vadd.f32 %v4771, 1e-05
          %v4782 = vadd.f32 %v4772, 1e-05
          %v4783 = vadd.f32 %v4773, 1e-05
          %v4784 = vadd.f32 %v4774, 1e-05
          %v4785 = vadd.f32 %v4775, 1e-05
          %v4786 = vadd.f32 %v4776, 1e-05
          %v4787 = vrsqrt.pop %v4777
          %v4788 = vrsqrt.pop %v4778
          %v4789 = vrsqrt.pop %v4779
          %v4790 = vrsqrt.pop %v4780
          %v4791 = vrsqrt.pop %v4781
          %v4792 = vrsqrt.pop %v4782
          %v4793 = vrsqrt.pop %v4783
          %v4794 = vrsqrt.pop %v4784
          %v4795 = vrsqrt.pop %v4785
          %v4796 = vrsqrt.pop %v4786
          %v4797 = vmul.f32 %v4727, %v4787
          %v4798 = vmul.f32 %v4728, %v4788
          %v4799 = vmul.f32 %v4729, %v4789
          %v4800 = vmul.f32 %v4730, %v4790
          %v4801 = vmul.f32 %v4731, %v4791
          %v4802 = vmul.f32 %v4732, %v4792
          %v4803 = vmul.f32 %v4733, %v4793
          %v4804 = vmul.f32 %v4734, %v4794
          %v4805 = vmul.f32 %v4735, %v4795
          %v4806 = vmul.f32 %v4736, %v4796
          %v4808 = vlaneseq
          %v4809 = vshrl.u32 %v4808, 7
          %v4810 = vsub.s32 0, %v4809
          %v4811 = vrot.slane %v4695, %v4810
          %v4813 = vmul.f32 %v4797, %v4811
          %v4814 = vmul.f32 %v4798, %v4811
          %v4815 = vmul.f32 %v4799, %v4811
          %v4816 = vmul.f32 %v4800, %v4811
          %v4817 = vmul.f32 %v4801, %v4811
          %v4818 = vmul.f32 %v4802, %v4811
          %v4819 = vmul.f32 %v4803, %v4811
          %v4820 = vmul.f32 %v4804, %v4811
          %v4821 = vmul.f32 %v4805, %v4811
          %v4822 = vmul.f32 %v4806, %v4811
          %v4824 = vlaneseq
          %v4825 = vshrl.u32 %v4824, 7
          %v4826 = vsub.s32 0, %v4825
          %v4827 = vrot.slane %v4696, %v4826
          %v4829 = vadd.f32 %v4813, %v4827
          %v4830 = vadd.f32 %v4814, %v4827
          %v4831 = vadd.f32 %v4815, %v4827
          %v4832 = vadd.f32 %v4816, %v4827
          %v4833 = vadd.f32 %v4817, %v4827
          %v4834 = vadd.f32 %v4818, %v4827
          %v4835 = vadd.f32 %v4819, %v4827
          %v4836 = vadd.f32 %v4820, %v4827
          %v4837 = vadd.f32 %v4821, %v4827
          %v4838 = vadd.f32 %v4822, %v4827
          %4839 = vst [vmem:[%s846] sm:$0xff] %v4829
          %4840 = vst [vmem:[%s846 + $0x8] sm:$0xff] %v4830
          %4841 = vst [vmem:[%s846 + $0x10] sm:$0xff] %v4831
          %4842 = vst [vmem:[%s846 + $0x18] sm:$0xff] %v4832
          %4843 = vst [vmem:[%s846 + $0x20] sm:$0xff] %v4833
          %4844 = vst [vmem:[%s846 + $0x28] sm:$0xff] %v4834
          %4845 = vst [vmem:[%s846 + $0x30] sm:$0xff] %v4835
          %4846 = vst [vmem:[%s846 + $0x38] sm:$0xff] %v4836
          %4847 = vst [vmem:[%s846 + $0x40] sm:$0xff] %v4837
          %4848 = vst [vmem:[%s846 + $0x48] sm:$0xff] %v4838
        $region124: #{tpu_custom_call.1} parent=83 // pred_fallthru
          _
        %s4849 = sand.u32 %s455, 1
        %s4850 = scalar_lea.sflag [#allocation6], %s4849
        %s4851 = sand.u32 %s455, 1
        %s4852 = smul.addr %s4851, 80
        %s4853 = scalar_lea.vmem [#allocation15], %s4852
        // Predicated region
        $region125: #{tpu_custom_call.1} parent=83 // pred_check
          %p4854 = pneg %p465
        $region126: #{tpu_custom_call.1} parent=83 // pred_check_branch
          %4856 = sbr.rel (%p4854) target = $region128
        $region127: #{tpu_custom_call.1} parent=83 // pred_region
          %s4858 = ssub.s32 1280, 1280
          %4859 = vsyncadd %s4850, %s4858
          %s4860 = smul.addr %s38, 10
          %s4861 = smul.addr %s4860, 128
          %s4862 = scalar_lea.hbm %s16, %s4861
          %s4863 = sshll.u32 %s4853, 4
          %s4864 = int_to_ptr.vmem [resolvable:$true] %s4863
          %4869 = dma.vmem_to_hbm [thread:$0]  %s4864, 1280, %s4862, %s4850, 128, 128, 8
        $region128: #{tpu_custom_call.1} parent=83 // pred_fallthru
          _
      $region84: #{tpu_custom_call.1} parent=5 // pred_fallthru
        _
      %p4870 = scmp.le.s32.totalorder 2, %s29
      // Predicated region
      $region129: #{tpu_custom_call.1} parent=5 // pred_check
        %p4871 = pneg %p4870
      $region130: #{tpu_custom_call.1} parent=5 // pred_check_branch
        %4873 = sbr.rel (%p4871) target = $region132
      $region131: #{tpu_custom_call.1} parent=5 // pred_region
        %s4874 = ssub.s32 %s29, 2
        // Predicated region
        $region133: #{tpu_custom_call.1} parent=131 // pred_check
          %p4875 = pneg %p471
        $region134: #{tpu_custom_call.1} parent=131 // pred_check_branch
          %4877 = sbr.rel (%p4875) target = $region136
        $region135: #{tpu_custom_call.1} parent=131 // pred_region
          %s4878 = sand.u32 %s456, 1
          %s4879 = scalar_lea.sflag [#allocation6], %s4878
          %s4880 = sand.u32 %s456, 1
          %s4881 = smul.addr %s4880, 80
          %s4882 = scalar_lea.vmem [#allocation15], %s4881
          %4883 = dma.done %s4879, 1280
        $region136: #{tpu_custom_call.1} parent=131 // pred_fallthru
          _
      $region132: #{tpu_custom_call.1} parent=5 // pred_fallthru
        _
    $region6: #{tpu_custom_call.1} parent=1 // loop_footer
      %s33 = sadd.s32 1, %s29
    $region7: #{tpu_custom_call.1} parent=1 // loop_footer_branch
      %28 = sbr.rel target = $region3
    $region8: #{tpu_custom_call.1} parent=1 // loop_exit
      _
    %4884 = vsyncpa [#allocation5], 1
    %s4885 = scalar_lea.sflag [#allocation5], 1
    %4886 = vsyncpa %s4885, 1
    %4887 = vsyncpa [#allocation8], 1
    %4888 = vsyncpa [#allocation6], 1
    %s4889 = scalar_lea.sflag [#allocation6], 1
    %4890 = vsyncpa %s4889, 1

</llo_original>
